<compile_context>
chip_gen: v5e
topology: v5e:2x2
jax: 0.10.0
libtpu: 0.0.40
codegen_flags: <defaults>
</compile_context>

<pallas_src>
import jax
import jax.numpy as jnp
import numpy as np
from jax.experimental import pallas as pl
from jax.experimental.pallas import tpu as pltpu

IN_CH = 6
C1, C2 = 12, 24
L_IN = 60            # input length
L1 = 58              # conv1 output length (k=3, s=1)
L2 = 28              # conv2 output length (k=3, s=2)
K0 = IN_CH * L_IN    # 360  flattened input features
K1 = C1 * L1         # 696  flattened conv1 features
FEAT = C2 * L2       # 672  == self.feature_size in the PyTorch module
HID = 64
ACT = 3

# Lane-padded (multiple-of-128) sizes; all padding entries are exact zeros.
K1P = 768            # 696 -> 6*128
FEATP = 768          # 672 -> 6*128
ACTP = 128           # 3   -> 128 (lane-dense output store)


def _round_up(x, m):
    return (x + m - 1) // m * m


# ----------------------------------------------------------------------------
# Pallas kernel: one batch tile (TB examples) per grid step.
# ----------------------------------------------------------------------------
def qnet_kernel(x_ref, t1_ref, b1_ref, t2_ref, b2_ref,
                w3_ref, b3_ref, w4_ref, b4_ref, o_ref):
    # bf16 operands into the MXU, f32 accumulate; bias/ReLU stay f32 on the VPU.
    dot = lambda a, b: jnp.dot(a.astype(jnp.bfloat16), b,
                               preferred_element_type=jnp.float32)

    x = x_ref[...]                                               # (TB, 360) f32
    # Conv1d(6->12,k3,s1)+ReLU as one banded ("Toeplitz") matmul.
    y1 = jnp.maximum(dot(x, t1_ref[...]) + b1_ref[...], 0.0)     # (TB, 768)
    # Conv1d(12->24,k3,s2)+ReLU; stride-2 is baked into the band structure.
    y2 = jnp.maximum(dot(y1, t2_ref[...]) + b2_ref[...], 0.0)    # (TB, 768)
    # Columns 0..671 of y2 are channel-major (c2*28+m) == torch .view() order.
    h = jnp.maximum(dot(y2, w3_ref[...]) + b3_ref[...], 0.0)     # (TB, 64)
    # Lane-dense final store: (TB, 128) block, only cols 0..2 are meaningful.
    o_ref[...] = (dot(h, w4_ref[...]) + b4_ref[...]).astype(o_ref.dtype)


# ----------------------------------------------------------------------------
# One-time parameter preparation (hoisted out of the per-call wrapper).
# ----------------------------------------------------------------------------
def _conv1_band_matrix(w1):
    # T1[i*60 + l + k, o*58 + l] = w1[o, i, k]
    w1 = np.asarray(w1, np.float32)
    o, i, k, l = np.meshgrid(np.arange(C1), np.arange(IN_CH), np.arange(3),
                             np.arange(L1), indexing="ij")
    t = np.zeros((K0, K1P), np.float32)
    t[(i * L_IN + l + k).ravel(), (o * L1 + l).ravel()] = \
        w1[o.ravel(), i.ravel(), k.ravel()]
    return jnp.asarray(t, jnp.bfloat16)


def _conv2_band_matrix(w2):
    # T2[i*58 + 2*m + k, o*28 + m] = w2[o, i, k]   (stride 2)
    w2 = np.asarray(w2, np.float32)
    o, i, k, m = np.meshgrid(np.arange(C2), np.arange(C1), np.arange(3),
                             np.arange(L2), indexing="ij")
    t = np.zeros((K1P, FEATP), np.float32)
    t[(i * L1 + 2 * m + k).ravel(), (o * L2 + m).ravel()] = \
        w2[o.ravel(), i.ravel(), k.ravel()]
    return jnp.asarray(t, jnp.bfloat16)


def _pad_row(v, n):
    v = np.asarray(v, np.float32)
    return np.pad(v, (0, n - v.shape[0]))[None, :]


def prepare_params(params):
    """Torch-shaped params -> kernel-ready operands. Call once, reuse."""
    w1, b1, w2, b2, w3, b3, w4, b4 = params
    b1 = np.asarray(b1, np.float32)
    b2 = np.asarray(b2, np.float32)

    w3t = np.zeros((FEATP, HID), np.float32)
    w3t[:FEAT, :] = np.asarray(w3, np.float32).T
    w4t = np.zeros((HID, ACTP), np.float32)
    w4t[:, :ACT] = np.asarray(w4, np.float32).T

    return (
        _conv1_band_matrix(w1),                         # (360, 768)  bf16
        jnp.asarray(_pad_row(np.repeat(b1, L1), K1P)),  # (1, 768)    f32
        _conv2_band_matrix(w2),                         # (768, 768)  bf16
        jnp.asarray(_pad_row(np.repeat(b2, L2), FEATP)),# (1, 768)    f32
        jnp.asarray(w3t, jnp.bfloat16),                 # (768, 64)   bf16
        jnp.asarray(np.asarray(b3, np.float32)[None]),  # (1, 64)     f32
        jnp.asarray(w4t, jnp.bfloat16),                 # (64, 128)   bf16
        jnp.asarray(_pad_row(b4, ACTP)),                # (1, 128)    f32
    )


# ----------------------------------------------------------------------------
# Wrapper: batch tiling + pallas_call (no input padding / extra HBM copies)
# ----------------------------------------------------------------------------
def qnetwork_forward(state, prep, *, batch_tile=512):
    """state: (B, 6, 60) float32, NCW layout (same as PyTorch)."""
    t1, b1r, t2, b2r, w3t, b3r, w4t, b4r = prep
    B = state.shape[0]

    x2d = state.reshape(B, K0)             # free, contiguous reshape

    # Batch tile: cap at ~half the batch (multiple of 8) so the "parallel"
    # grid axis has >=2 steps whenever possible (v7x megacore); tiny batches
    # (<=8) use a single full-batch block.
    if B <= 8:
        tb = B
    else:
        tb = min(batch_tile, _round_up((B + 1) // 2, 8))
    grid = (pl.cdiv(B, tb),)

    full = lambda i: (0, 0)                # weights resident across grid steps
    in_specs = [
        pl.BlockSpec((tb, K0), lambda i: (i, 0)),   # x batch tile
        pl.BlockSpec((K0, K1P), full),              # T1 (conv1 band, bf16)
        pl.BlockSpec((1, K1P), full),               # b1
        pl.BlockSpec((K1P, FEATP), full),           # T2 (conv2 band, bf16)
        pl.BlockSpec((1, FEATP), full),             # b2
        pl.BlockSpec((FEATP, HID), full),           # W3^T (bf16)
        pl.BlockSpec((1, HID), full),               # b3
        pl.BlockSpec((HID, ACTP), full),            # W4^T (bf16, lane-padded)
        pl.BlockSpec((1, ACTP), full),              # b4 (lane-padded)
    ]

    out = pl.pallas_call(
        qnet_kernel,
        out_shape=jax.ShapeDtypeStruct((B, ACTP), jnp.float32),
        grid=grid,
        in_specs=in_specs,
        out_specs=pl.BlockSpec((tb, ACTP), lambda i: (i, 0)),
        compiler_params=pltpu.CompilerParams(
            dimension_semantics=("parallel",)),
    )(x2d, t1, b1r, t2, b2r, w3t, b3r, w4t, b4r)
    return out[:, :ACT]


# ----------------------------------------------------------------------------
# Pure-JAX reference (mirrors the PyTorch forward exactly)
# ----------------------------------------------------------------------------
def reference_forward(state, params):
    w1, b1, w2, b2, w3, b3, w4, b4 = params
    dn = ("NCH", "OIH", "NCH")
    y1 = jax.lax.conv_general_dilated(state, w1, window_strides=(1,),
                                      padding="VALID", dimension_numbers=dn)
    y1 = jnp.maximum(y1 + b1[None, :, None], 0.0)
    y2 = jax.lax.conv_general_dilated(y1, w2, window_strides=(2,),
                                      padding="VALID", dimension_numbers=dn)
    y2 = jnp.maximum(y2 + b2[None, :, None], 0.0)
    flat = y2.reshape(y2.shape[0], -1)           # (B, 672), channel-major
    h = jnp.maximum(flat @ w3.T + b3, 0.0)
    return h @ w4.T + b4


# ----------------------------------------------------------------------------
def init_params(key):
    """Deterministic init with PyTorch-default-style uniform bounds."""
    ks = jax.random.split(key, 8)

    def u(k, shape, fan_in):
        bound = 1.0 / np.sqrt(fan_in)
        return jax.random.uniform(k, shape, jnp.float32, -bound, bound)

    w1 = u(ks[0], (C1, IN_CH, 3), IN_CH * 3)
    b1 = u(ks[1], (C1,), IN_CH * 3)
    w2 = u(ks[2], (C2, C1, 3), C1 * 3)
    b2 = u(ks[3], (C2,), C1 * 3)
    w3 = u(ks[4], (HID, FEAT), FEAT)
    b3 = u(ks[5], (HID,), FEAT)
    w4 = u(ks[6], (ACT, HID), HID)
    b4 = u(ks[7], (ACT,), HID)
    return (w1, b1, w2, b2, w3, b3, w4, b4)


if __name__ == "__main__":
    key = jax.random.PRNGKey(0)
    k_param, k_small, k_big = jax.random.split(key, 3)

    params = init_params(k_param)
    prep = prepare_params(params)          # one-time re-layout (hoisted)
    fwd = jax.jit(qnetwork_forward)

    # Small batch, module-native shapes: (batch=2, channels=6, length=60).
    state_small = jax.random.normal(k_small, (2, IN_CH, L_IN), dtype=jnp.float32)
    out_small = jax.block_until_ready(fwd(state_small, prep))
    ref_small = jax.block_until_ready(reference_forward(state_small, params))
    assert out_small.shape == (2, ACT), out_small.shape
    np.testing.assert_allclose(np.asarray(out_small), np.asarray(ref_small),
                               rtol=1e-2, atol=5e-3)

    # Larger, non-multiple batch: exercises the >=2-step grid, half-batch
    # tiling and the ragged (unpadded) last tile.
    state_big = jax.random.normal(k_big, (200, IN_CH, L_IN), dtype=jnp.float32)
    out_big = jax.block_until_ready(fwd(state_big, prep))
    ref_big = jax.block_until_ready(reference_forward(state_big, params))
    assert out_big.shape == (200, ACT), out_big.shape
    np.testing.assert_allclose(np.asarray(out_big), np.asarray(ref_big),
                               rtol=1e-2, atol=5e-3)

    print("KERNEL_OK")
</pallas_src>

<mosaic_0001>
module attributes {stable_mosaic.version = 11 : i64} {
  func.func @qnet_kernel(%arg0: i32, %arg1: memref<2x360xf32, #tpu.memory_space<vmem>>, %arg2: memref<360x768xbf16, #tpu.memory_space<vmem>>, %arg3: memref<1x768xf32, #tpu.memory_space<vmem>>, %arg4: memref<768x768xbf16, #tpu.memory_space<vmem>>, %arg5: memref<1x768xf32, #tpu.memory_space<vmem>>, %arg6: memref<768x64xbf16, #tpu.memory_space<vmem>>, %arg7: memref<1x64xf32, #tpu.memory_space<vmem>>, %arg8: memref<64x128xbf16, #tpu.memory_space<vmem>>, %arg9: memref<1x128xf32, #tpu.memory_space<vmem>>, %arg10: memref<2x128xf32, #tpu.memory_space<vmem>>) attributes {dimension_semantics = [#tpu.dimension_semantics<parallel>], iteration_bounds = array<i64: 1>, scalar_prefetch = 0 : i64, scratch_operands = 0 : i64, tpu.core_type = #tpu.core_type<tc>, window_params = [{transform_indices = @transform_0, window_bounds = array<i64: 2, 360>}, {pipeline_mode = #tpu.pipeline_mode<synchronous>, transform_indices = @transform_1, window_bounds = array<i64: 360, 768>}, {pipeline_mode = #tpu.pipeline_mode<synchronous>, transform_indices = @transform_2, window_bounds = array<i64: 1, 768>}, {pipeline_mode = #tpu.pipeline_mode<synchronous>, transform_indices = @transform_3, window_bounds = array<i64: 768, 768>}, {pipeline_mode = #tpu.pipeline_mode<synchronous>, transform_indices = @transform_4, window_bounds = array<i64: 1, 768>}, {pipeline_mode = #tpu.pipeline_mode<synchronous>, transform_indices = @transform_5, window_bounds = array<i64: 768, 64>}, {pipeline_mode = #tpu.pipeline_mode<synchronous>, transform_indices = @transform_6, window_bounds = array<i64: 1, 64>}, {pipeline_mode = #tpu.pipeline_mode<synchronous>, transform_indices = @transform_7, window_bounds = array<i64: 64, 128>}, {pipeline_mode = #tpu.pipeline_mode<synchronous>, transform_indices = @transform_8, window_bounds = array<i64: 1, 128>}, {transform_indices = @transform_9, window_bounds = array<i64: 2, 128>}]} {
    %c0 = arith.constant 0 : index
    %c0_0 = arith.constant 0 : index
    %0 = vector.load %arg1[%c0, %c0_0] : memref<2x360xf32, #tpu.memory_space<vmem>>, vector<2x360xf32>
    %c0_1 = arith.constant 0 : index
    %c0_2 = arith.constant 0 : index
    %1 = vector.load %arg2[%c0_1, %c0_2] : memref<360x768xbf16, #tpu.memory_space<vmem>>, vector<360x768xbf16>
    %2 = arith.truncf %0 : vector<2x360xf32> to vector<2x360xbf16>
    %cst = arith.constant dense<0.000000e+00> : vector<2x768xf32>
    %3 = tpu.matmul %2, %1, %cst {dimension_numbers = #tpu.dot_dimension_numbers<[1], [0], [0], [1], [0, 0, 1, 1], [], []>} : vector<2x360xbf16>, vector<360x768xbf16>, vector<2x768xf32> -> vector<2x768xf32>
    %c0_3 = arith.constant 0 : index
    %c0_4 = arith.constant 0 : index
    %4 = vector.load %arg3[%c0_3, %c0_4] : memref<1x768xf32, #tpu.memory_space<vmem>>, vector<1x768xf32>
    %5 = vector.broadcast %4 : vector<1x768xf32> to vector<2x768xf32>
    %6 = arith.addf %3, %5 : vector<2x768xf32>
    %cst_5 = arith.constant 0.000000e+00 : f32
    %7 = vector.broadcast %cst_5 : f32 to vector<2x768xf32>
    %8 = arith.maximumf %6, %7 : vector<2x768xf32>
    %c0_6 = arith.constant 0 : index
    %c0_7 = arith.constant 0 : index
    %9 = vector.load %arg4[%c0_6, %c0_7] : memref<768x768xbf16, #tpu.memory_space<vmem>>, vector<768x768xbf16>
    %10 = arith.truncf %8 : vector<2x768xf32> to vector<2x768xbf16>
    %cst_8 = arith.constant dense<0.000000e+00> : vector<2x768xf32>
    %11 = tpu.matmul %10, %9, %cst_8 {dimension_numbers = #tpu.dot_dimension_numbers<[1], [0], [0], [1], [0, 0, 1, 1], [], []>} : vector<2x768xbf16>, vector<768x768xbf16>, vector<2x768xf32> -> vector<2x768xf32>
    %c0_9 = arith.constant 0 : index
    %c0_10 = arith.constant 0 : index
    %12 = vector.load %arg5[%c0_9, %c0_10] : memref<1x768xf32, #tpu.memory_space<vmem>>, vector<1x768xf32>
    %13 = vector.broadcast %12 : vector<1x768xf32> to vector<2x768xf32>
    %14 = arith.addf %11, %13 : vector<2x768xf32>
    %cst_11 = arith.constant 0.000000e+00 : f32
    %15 = vector.broadcast %cst_11 : f32 to vector<2x768xf32>
    %16 = arith.maximumf %14, %15 : vector<2x768xf32>
    %c0_12 = arith.constant 0 : index
    %c0_13 = arith.constant 0 : index
    %17 = vector.load %arg6[%c0_12, %c0_13] : memref<768x64xbf16, #tpu.memory_space<vmem>>, vector<768x64xbf16>
    %18 = arith.truncf %16 : vector<2x768xf32> to vector<2x768xbf16>
    %cst_14 = arith.constant dense<0.000000e+00> : vector<2x64xf32>
    %19 = tpu.matmul %18, %17, %cst_14 {dimension_numbers = #tpu.dot_dimension_numbers<[1], [0], [0], [1], [0, 0, 1, 1], [], []>} : vector<2x768xbf16>, vector<768x64xbf16>, vector<2x64xf32> -> vector<2x64xf32>
    %c0_15 = arith.constant 0 : index
    %c0_16 = arith.constant 0 : index
    %20 = vector.load %arg7[%c0_15, %c0_16] : memref<1x64xf32, #tpu.memory_space<vmem>>, vector<1x64xf32>
    %21 = vector.broadcast %20 : vector<1x64xf32> to vector<2x64xf32>
    %22 = arith.addf %19, %21 : vector<2x64xf32>
    %cst_17 = arith.constant 0.000000e+00 : f32
    %23 = vector.broadcast %cst_17 : f32 to vector<2x64xf32>
    %24 = arith.maximumf %22, %23 : vector<2x64xf32>
    %c0_18 = arith.constant 0 : index
    %c0_19 = arith.constant 0 : index
    %25 = vector.load %arg8[%c0_18, %c0_19] : memref<64x128xbf16, #tpu.memory_space<vmem>>, vector<64x128xbf16>
    %26 = arith.truncf %24 : vector<2x64xf32> to vector<2x64xbf16>
    %cst_20 = arith.constant dense<0.000000e+00> : vector<2x128xf32>
    %27 = tpu.matmul %26, %25, %cst_20 {dimension_numbers = #tpu.dot_dimension_numbers<[1], [0], [0], [1], [0, 0, 1, 1], [], []>} : vector<2x64xbf16>, vector<64x128xbf16>, vector<2x128xf32> -> vector<2x128xf32>
    %c0_21 = arith.constant 0 : index
    %c0_22 = arith.constant 0 : index
    %28 = vector.load %arg9[%c0_21, %c0_22] : memref<1x128xf32, #tpu.memory_space<vmem>>, vector<1x128xf32>
    %29 = vector.broadcast %28 : vector<1x128xf32> to vector<2x128xf32>
    %30 = arith.addf %27, %29 : vector<2x128xf32>
    %c0_23 = arith.constant 0 : index
    %c0_24 = arith.constant 0 : index
    %31 = vector.load %arg10[%c0_23, %c0_24] : memref<2x128xf32, #tpu.memory_space<vmem>>, vector<2x128xf32>
    tpu.vector_store %arg10[%c0_23, %c0_24], %30 {strides = array<i32>} : memref<2x128xf32, #tpu.memory_space<vmem>>, vector<2x128xf32>,
    return
  }
  func.func @transform_0(%arg0: i32) -> (i32, i32) {
    %c0_i32 = arith.constant 0 : i32
    %c0_i32_0 = arith.constant 0 : i32
    return %arg0, %c0_i32 : i32, i32
  }
  func.func @transform_1(%arg0: i32) -> (i32, i32) {
    %c0_i32 = arith.constant 0 : i32
    %c0_i32_0 = arith.constant 0 : i32
    %c0_i32_1 = arith.constant 0 : i32
    return %c0_i32, %c0_i32_0 : i32, i32
  }
  func.func @transform_2(%arg0: i32) -> (i32, i32) {
    %c0_i32 = arith.constant 0 : i32
    %c0_i32_0 = arith.constant 0 : i32
    %c0_i32_1 = arith.constant 0 : i32
    return %c0_i32, %c0_i32_0 : i32, i32
  }
  func.func @transform_3(%arg0: i32) -> (i32, i32) {
    %c0_i32 = arith.constant 0 : i32
    %c0_i32_0 = arith.constant 0 : i32
    %c0_i32_1 = arith.constant 0 : i32
    return %c0_i32, %c0_i32_0 : i32, i32
  }
  func.func @transform_4(%arg0: i32) -> (i32, i32) {
    %c0_i32 = arith.constant 0 : i32
    %c0_i32_0 = arith.constant 0 : i32
    %c0_i32_1 = arith.constant 0 : i32
    return %c0_i32, %c0_i32_0 : i32, i32
  }
  func.func @transform_5(%arg0: i32) -> (i32, i32) {
    %c0_i32 = arith.constant 0 : i32
    %c0_i32_0 = arith.constant 0 : i32
    %c0_i32_1 = arith.constant 0 : i32
    return %c0_i32, %c0_i32_0 : i32, i32
  }
  func.func @transform_6(%arg0: i32) -> (i32, i32) {
    %c0_i32 = arith.constant 0 : i32
    %c0_i32_0 = arith.constant 0 : i32
    %c0_i32_1 = arith.constant 0 : i32
    return %c0_i32, %c0_i32_0 : i32, i32
  }
  func.func @transform_7(%arg0: i32) -> (i32, i32) {
    %c0_i32 = arith.constant 0 : i32
    %c0_i32_0 = arith.constant 0 : i32
    %c0_i32_1 = arith.constant 0 : i32
    return %c0_i32, %c0_i32_0 : i32, i32
  }
  func.func @transform_8(%arg0: i32) -> (i32, i32) {
    %c0_i32 = arith.constant 0 : i32
    %c0_i32_0 = arith.constant 0 : i32
    %c0_i32_1 = arith.constant 0 : i32
    return %c0_i32, %c0_i32_0 : i32, i32
  }
  func.func @transform_9(%arg0: i32) -> (i32, i32) {
    %c0_i32 = arith.constant 0 : i32
    %c0_i32_0 = arith.constant 0 : i32
    return %arg0, %c0_i32 : i32, i32
  }
}

</mosaic_0001>

<llo_original>
// kernel: qnetwork_forward.1
$region0: #{qnetwork_forward.1}
  #allocation0 [shape = 'u32[]', space=smem, size = 0x4, offset = 0x4, fixed_abs, tag = 'smem constant byte address 0x4 - core index']
  #allocation1 [shape = 'u32[72,128]{1,0:T(1,128)}', space=vmem, size = 0x9000, scoped, tag = 'internal scratch']
  %s0 = inlined_call_operand.vmem [shape: f32[2,360], index: 0, kind: input, shape index: {}]
  %s1 = inlined_call_operand.hbm [shape: bf16[360,768], index: 1, kind: input, shape index: {}]
  %s2 = inlined_call_operand.hbm [shape: f32[1,768], index: 2, kind: input, shape index: {}]
  %s3 = inlined_call_operand.hbm [shape: bf16[768,768], index: 3, kind: input, shape index: {}]
  %s4 = inlined_call_operand.hbm [shape: f32[1,768], index: 4, kind: input, shape index: {}]
  %s5 = inlined_call_operand.vmem [shape: bf16[768,64], index: 5, kind: input, shape index: {}]
  %s6 = inlined_call_operand.hbm [shape: f32[1,64], index: 6, kind: input, shape index: {}]
  %s7 = inlined_call_operand.hbm [shape: bf16[64,128], index: 7, kind: input, shape index: {}]
  %s8 = inlined_call_operand.hbm [shape: f32[1,128], index: 8, kind: input, shape index: {}]
  %s9 = inlined_call_operand.hbm [shape: f32[2,128], index: 9, kind: output, shape index: {}]
  %s10 = sld [smem:[#allocation0]]
  $region74: #{qnetwork_forward.1} parent=0
    _
  %s12 = ssub.s32 1, %s10
  %s13 = scalar_select 0, %s12, %s10
  $region1: #{qnetwork_forward.1} parent=0
    #allocation2 [shape = 'u8[552960]{0}', space=vmem, size = 0x87000, scoped, tag = 'input window, operand 1, single buffered']
    #allocation3 [shape = 's32[1]{0}', space=sflag, size = 0x4, scoped, tag = 'scoped memory for qnetwork_forward.1']
    #allocation4 [shape = 's32[1]{0}', space=sflag, size = 0x4, scoped, tag = 'scoped memory for qnetwork_forward.1']
    #allocation5 [shape = 'u8[3072]{0}', space=vmem, size = 0xc00, scoped, tag = 'input window, operand 2, single buffered']
    #allocation6 [shape = 's32[1]{0}', space=sflag, size = 0x4, scoped, tag = 'scoped memory for qnetwork_forward.1']
    #allocation7 [shape = 'u8[1179648]{0}', space=vmem, size = 0x120000, scoped, tag = 'input window, operand 3, single buffered']
    #allocation8 [shape = 'u8[3072]{0}', space=vmem, size = 0xc00, scoped, tag = 'input window, operand 4, single buffered']
    #allocation9 [shape = 's32[1]{0}', space=sflag, size = 0x4, scoped, tag = 'scoped memory for qnetwork_forward.1']
    #allocation10 [shape = 'u8[512]{0}', space=vmem, size = 0x400, scoped, tag = 'input window, operand 6, single buffered']
    #allocation11 [shape = 'u8[16384]{0}', space=vmem, size = 0x4000, scoped, tag = 'input window, operand 7, single buffered']
    #allocation12 [shape = 's32[1]{0}', space=sflag, size = 0x4, scoped, tag = 'scoped memory for qnetwork_forward.1']
    #allocation13 [shape = 'u8[512]{0}', space=vmem, size = 0x400, scoped, tag = 'input window, operand 8, single buffered']
    #allocation14 [shape = 'u8[1024]{0}', space=vmem, size = 0x400, scoped, tag = 'output window, operand 0, single buffered']
    %14 = vsyncpa [#allocation3], 0
    %15 = vsyncpa [#allocation6], 0
    %16 = vsyncpa [#allocation9], 0
    %17 = vsyncpa [#allocation12], 0
    %18 = vsyncpa [#allocation4], 0
    // Predicated region
    $region2: #{qnetwork_forward.1} parent=1 // pred_check
      _
    $region3: #{qnetwork_forward.1} parent=1 // pred_check_branch
      %20 = sbr.rel (0) target = $region5
    $region4: #{qnetwork_forward.1} parent=1 // pred_region
      _
    $region5: #{qnetwork_forward.1} parent=1 // pred_fallthru
      _
    // Predicated region
    $region6: #{qnetwork_forward.1} parent=1 // pred_check
      _
    $region7: #{qnetwork_forward.1} parent=1 // pred_check_branch
      %22 = sbr.rel (0) target = $region9
    $region8: #{qnetwork_forward.1} parent=1 // pred_region
      %24 = vsyncadd [#allocation3], 0
      %s25 = sshll.u32 %s1, 4
      %s26 = int_to_ptr.hbm [resolvable:$true] %s25
      %s27 = sshll.u32 [#allocation2], 4
      %s28 = int_to_ptr.vmem [resolvable:$true] %s27
      %33 = dma.hbm_to_vmem [thread:$0]  %s26, 17280, %s28, [#allocation3], 384, 384, 24
    $region9: #{qnetwork_forward.1} parent=1 // pred_fallthru
      _
    // Predicated region
    $region10: #{qnetwork_forward.1} parent=1 // pred_check
      _
    $region11: #{qnetwork_forward.1} parent=1 // pred_check_branch
      %35 = sbr.rel (0) target = $region13
    $region12: #{qnetwork_forward.1} parent=1 // pred_region
      %37 = vsyncadd [#allocation6], 0
      %s39 = sshll.u32 %s2, 4
      %s40 = int_to_ptr.hbm [resolvable:$true] %s39
      %s41 = sshll.u32 [#allocation5], 4
      %s42 = int_to_ptr.vmem [resolvable:$true] %s41
      %44 = dma.hbm_to_vmem [thread:$0]  %s40, 96, %s42, [#allocation6]
    $region13: #{qnetwork_forward.1} parent=1 // pred_fallthru
      _
    // Predicated region
    $region14: #{qnetwork_forward.1} parent=1 // pred_check
      _
    $region15: #{qnetwork_forward.1} parent=1 // pred_check_branch
      %46 = sbr.rel (0) target = $region17
    $region16: #{qnetwork_forward.1} parent=1 // pred_region
      %48 = vsyncadd [#allocation6], 0
      %s49 = sshll.u32 %s3, 4
      %s50 = int_to_ptr.hbm [resolvable:$true] %s49
      %s51 = sshll.u32 [#allocation7], 4
      %s52 = int_to_ptr.vmem [resolvable:$true] %s51
      %57 = dma.hbm_to_vmem [thread:$0]  %s50, 36864, %s52, [#allocation6], 384, 384, 24
    $region17: #{qnetwork_forward.1} parent=1 // pred_fallthru
      _
    // Predicated region
    $region18: #{qnetwork_forward.1} parent=1 // pred_check
      _
    $region19: #{qnetwork_forward.1} parent=1 // pred_check_branch
      %59 = sbr.rel (0) target = $region21
    $region20: #{qnetwork_forward.1} parent=1 // pred_region
      %61 = vsyncadd [#allocation9], 0
      %s63 = sshll.u32 %s4, 4
      %s64 = int_to_ptr.hbm [resolvable:$true] %s63
      %s65 = sshll.u32 [#allocation8], 4
      %s66 = int_to_ptr.vmem [resolvable:$true] %s65
      %68 = dma.hbm_to_vmem [thread:$0]  %s64, 96, %s66, [#allocation9]
    $region21: #{qnetwork_forward.1} parent=1 // pred_fallthru
      _
    // Predicated region
    $region22: #{qnetwork_forward.1} parent=1 // pred_check
      _
    $region23: #{qnetwork_forward.1} parent=1 // pred_check_branch
      %70 = sbr.rel (0) target = $region25
    $region24: #{qnetwork_forward.1} parent=1 // pred_region
      _
    $region25: #{qnetwork_forward.1} parent=1 // pred_fallthru
      _
    // Predicated region
    $region26: #{qnetwork_forward.1} parent=1 // pred_check
      _
    $region27: #{qnetwork_forward.1} parent=1 // pred_check_branch
      %72 = sbr.rel (0) target = $region29
    $region28: #{qnetwork_forward.1} parent=1 // pred_region
      %74 = vsyncadd [#allocation9], 0
      %s76 = sshll.u32 %s6, 4
      %s77 = int_to_ptr.hbm [resolvable:$true] %s76
      %s78 = sshll.u32 [#allocation10], 4
      %s79 = int_to_ptr.vmem [resolvable:$true] %s78
      %81 = dma.hbm_to_vmem [thread:$0]  %s77, 16, %s79, [#allocation9]
    $region29: #{qnetwork_forward.1} parent=1 // pred_fallthru
      _
    // Predicated region
    $region30: #{qnetwork_forward.1} parent=1 // pred_check
      _
    $region31: #{qnetwork_forward.1} parent=1 // pred_check_branch
      %83 = sbr.rel (0) target = $region33
    $region32: #{qnetwork_forward.1} parent=1 // pred_region
      %85 = vsyncadd [#allocation12], 0
      %s86 = sshll.u32 %s7, 4
      %s87 = int_to_ptr.hbm [resolvable:$true] %s86
      %s88 = sshll.u32 [#allocation11], 4
      %s89 = int_to_ptr.vmem [resolvable:$true] %s88
      %94 = dma.hbm_to_vmem [thread:$0]  %s87, 512, %s89, [#allocation12], 64, 64, 4
    $region33: #{qnetwork_forward.1} parent=1 // pred_fallthru
      _
    // Predicated region
    $region34: #{qnetwork_forward.1} parent=1 // pred_check
      _
    $region35: #{qnetwork_forward.1} parent=1 // pred_check_branch
      %96 = sbr.rel (0) target = $region37
    $region36: #{qnetwork_forward.1} parent=1 // pred_region
      %98 = vsyncadd [#allocation12], 0
      %s100 = sshll.u32 %s8, 4
      %s101 = int_to_ptr.hbm [resolvable:$true] %s100
      %s102 = sshll.u32 [#allocation13], 4
      %s103 = int_to_ptr.vmem [resolvable:$true] %s102
      %105 = dma.hbm_to_vmem [thread:$0]  %s101, 16, %s103, [#allocation12]
    $region37: #{qnetwork_forward.1} parent=1 // pred_fallthru
      _
    // Predicated region
    $region38: #{qnetwork_forward.1} parent=1 // pred_check
      _
    $region39: #{qnetwork_forward.1} parent=1 // pred_check_branch
      %107 = sbr.rel (0) target = $region41
    $region40: #{qnetwork_forward.1} parent=1 // pred_region
      %109 = dma.done [#allocation3], 17280
    $region41: #{qnetwork_forward.1} parent=1 // pred_fallthru
      _
    // Predicated region
    $region42: #{qnetwork_forward.1} parent=1 // pred_check
      _
    $region43: #{qnetwork_forward.1} parent=1 // pred_check_branch
      %111 = sbr.rel (0) target = $region45
    $region44: #{qnetwork_forward.1} parent=1 // pred_region
      %113 = dma.done [#allocation6], 96
    $region45: #{qnetwork_forward.1} parent=1 // pred_fallthru
      _
    // Predicated region
    $region46: #{qnetwork_forward.1} parent=1 // pred_check
      _
    $region47: #{qnetwork_forward.1} parent=1 // pred_check_branch
      %115 = sbr.rel (0) target = $region49
    $region48: #{qnetwork_forward.1} parent=1 // pred_region
      %117 = dma.done [#allocation6], 36864
    $region49: #{qnetwork_forward.1} parent=1 // pred_fallthru
      _
    // Predicated region
    $region50: #{qnetwork_forward.1} parent=1 // pred_check
      _
    $region51: #{qnetwork_forward.1} parent=1 // pred_check_branch
      %119 = sbr.rel (0) target = $region53
    $region52: #{qnetwork_forward.1} parent=1 // pred_region
      %121 = dma.done [#allocation9], 96
    $region53: #{qnetwork_forward.1} parent=1 // pred_fallthru
      _
    // Predicated region
    $region54: #{qnetwork_forward.1} parent=1 // pred_check
      _
    $region55: #{qnetwork_forward.1} parent=1 // pred_check_branch
      %123 = sbr.rel (0) target = $region57
    $region56: #{qnetwork_forward.1} parent=1 // pred_region
      %125 = dma.done [#allocation9], 16
    $region57: #{qnetwork_forward.1} parent=1 // pred_fallthru
      _
    // Predicated region
    $region58: #{qnetwork_forward.1} parent=1 // pred_check
      _
    $region59: #{qnetwork_forward.1} parent=1 // pred_check_branch
      %127 = sbr.rel (0) target = $region61
    $region60: #{qnetwork_forward.1} parent=1 // pred_region
      %129 = dma.done [#allocation12], 512
    $region61: #{qnetwork_forward.1} parent=1 // pred_fallthru
      _
    // Predicated region
    $region62: #{qnetwork_forward.1} parent=1 // pred_check
      _
    $region63: #{qnetwork_forward.1} parent=1 // pred_check_branch
      %131 = sbr.rel (0) target = $region65
    $region64: #{qnetwork_forward.1} parent=1 // pred_region
      %133 = dma.done [#allocation12], 16
    $region65: #{qnetwork_forward.1} parent=1 // pred_fallthru
      _
    %v135 = vld [vmem:[%s0] sm:$0x3f]
    %v136 = vld [vmem:[#allocation2] sm:$0xff]
    %v137 = vld [vmem:[#allocation2 + $0x8] sm:$0xff]
    %v138 = vld [vmem:[#allocation2 + $0x10] sm:$0xff]
    %v139 = vld [vmem:[#allocation2 + $0x18] sm:$0xff]
    %v140 = vld [vmem:[#allocation2 + $0x20] sm:$0xff]
    %v141 = vld [vmem:[#allocation2 + $0x28] sm:$0xff]
    %v142 = vld [vmem:[#allocation2 + $0x30] sm:$0xff]
    %v143 = vld [vmem:[#allocation2 + $0x38] sm:$0xff]
    %v144 = vld [vmem:[#allocation2 + $0x40] sm:$0xff]
    %v145 = vld [vmem:[#allocation2 + $0x48] sm:$0xff]
    %v146 = vld [vmem:[#allocation2 + $0x50] sm:$0xff]
    %v147 = vld [vmem:[#allocation2 + $0x58] sm:$0xff]
    %v148 = vld [vmem:[#allocation2 + $0x60] sm:$0xff]
    %v149 = vld [vmem:[#allocation2 + $0x68] sm:$0xff]
    %v150 = vld [vmem:[#allocation2 + $0x70] sm:$0xff]
    %v151 = vld [vmem:[#allocation2 + $0x78] sm:$0xff]
    %v152 = vld [vmem:[#allocation2 + $0x80] sm:$0xff]
    %v153 = vld [vmem:[#allocation2 + $0x88] sm:$0xff]
    %v154 = vld [vmem:[#allocation2 + $0x90] sm:$0xff]
    %v155 = vld [vmem:[#allocation2 + $0x98] sm:$0xff]
    %v156 = vld [vmem:[#allocation2 + $0xa0] sm:$0xff]
    %v157 = vld [vmem:[#allocation2 + $0xa8] sm:$0xff]
    %v158 = vld [vmem:[#allocation2 + $0xb0] sm:$0xff]
    %v159 = vld [vmem:[#allocation2 + $0xb8] sm:$0xff]
    %v160 = vld [vmem:[#allocation2 + $0xc0] sm:$0xff]
    %v161 = vld [vmem:[#allocation2 + $0xc8] sm:$0xff]
    %v162 = vld [vmem:[#allocation2 + $0xd0] sm:$0xff]
    %v163 = vld [vmem:[#allocation2 + $0xd8] sm:$0xff]
    %v164 = vld [vmem:[#allocation2 + $0xe0] sm:$0xff]
    %v165 = vld [vmem:[#allocation2 + $0xe8] sm:$0xff]
    %v166 = vld [vmem:[#allocation2 + $0xf0] sm:$0xff]
    %v167 = vld [vmem:[#allocation2 + $0xf8] sm:$0xff]
    %v168 = vld [vmem:[#allocation2 + $0x100] sm:$0xff]
    %v169 = vld [vmem:[#allocation2 + $0x108] sm:$0xff]
    %v170 = vld [vmem:[#allocation2 + $0x110] sm:$0xff]
    %v171 = vld [vmem:[#allocation2 + $0x118] sm:$0xff]
    %v172 = vld [vmem:[#allocation2 + $0x120] sm:$0xff]
    %v173 = vld [vmem:[#allocation2 + $0x128] sm:$0xff]
    %v174 = vld [vmem:[#allocation2 + $0x130] sm:$0xff]
    %v175 = vld [vmem:[#allocation2 + $0x138] sm:$0xff]
    %v176 = vld [vmem:[#allocation2 + $0x140] sm:$0xff]
    %v177 = vld [vmem:[#allocation2 + $0x148] sm:$0xff]
    %v178 = vld [vmem:[#allocation2 + $0x150] sm:$0xff]
    %v179 = vld [vmem:[#allocation2 + $0x158] sm:$0xff]
    %v180 = vld [vmem:[#allocation2 + $0x160] sm:$0xff]
    %v181 = vld [vmem:[#allocation2 + $0x168] sm:$0xff]
    %v182 = vld [vmem:[#allocation2 + $0x170] sm:$0xff]
    %v183 = vld [vmem:[#allocation2 + $0x178] sm:$0xff]
    %v184 = vld [vmem:[#allocation2 + $0x180] sm:$0xff]
    %v185 = vld [vmem:[#allocation2 + $0x188] sm:$0xff]
    %v186 = vld [vmem:[#allocation2 + $0x190] sm:$0xff]
    %v187 = vld [vmem:[#allocation2 + $0x198] sm:$0xff]
    %v188 = vld [vmem:[#allocation2 + $0x1a0] sm:$0xff]
    %v189 = vld [vmem:[#allocation2 + $0x1a8] sm:$0xff]
    %v190 = vld [vmem:[#allocation2 + $0x1b0] sm:$0xff]
    %v191 = vld [vmem:[#allocation2 + $0x1b8] sm:$0xff]
    %v192 = vld [vmem:[#allocation2 + $0x1c0] sm:$0xff]
    %v193 = vld [vmem:[#allocation2 + $0x1c8] sm:$0xff]
    %v194 = vld [vmem:[#allocation2 + $0x1d0] sm:$0xff]
    %v195 = vld [vmem:[#allocation2 + $0x1d8] sm:$0xff]
    %v196 = vld [vmem:[#allocation2 + $0x1e0] sm:$0xff]
    %v197 = vld [vmem:[#allocation2 + $0x1e8] sm:$0xff]
    %v198 = vld [vmem:[#allocation2 + $0x1f0] sm:$0xff]
    %v199 = vld [vmem:[#allocation2 + $0x1f8] sm:$0xff]
    %v200 = vld [vmem:[#allocation2 + $0x200] sm:$0xff]
    %v201 = vld [vmem:[#allocation2 + $0x208] sm:$0xff]
    %v202 = vld [vmem:[#allocation2 + $0x210] sm:$0xff]
    %v203 = vld [vmem:[#allocation2 + $0x218] sm:$0xff]
    %v204 = vld [vmem:[#allocation2 + $0x220] sm:$0xff]
    %v205 = vld [vmem:[#allocation2 + $0x228] sm:$0xff]
    %v206 = vld [vmem:[#allocation2 + $0x230] sm:$0xff]
    %v207 = vld [vmem:[#allocation2 + $0x238] sm:$0xff]
    %v208 = vld [vmem:[#allocation2 + $0x240] sm:$0xff]
    %v209 = vld [vmem:[#allocation2 + $0x248] sm:$0xff]
    %v210 = vld [vmem:[#allocation2 + $0x250] sm:$0xff]
    %v211 = vld [vmem:[#allocation2 + $0x258] sm:$0xff]
    %v212 = vld [vmem:[#allocation2 + $0x260] sm:$0xff]
    %v213 = vld [vmem:[#allocation2 + $0x268] sm:$0xff]
    %v214 = vld [vmem:[#allocation2 + $0x270] sm:$0xff]
    %v215 = vld [vmem:[#allocation2 + $0x278] sm:$0xff]
    %v216 = vld [vmem:[#allocation2 + $0x280] sm:$0xff]
    %v217 = vld [vmem:[#allocation2 + $0x288] sm:$0xff]
    %v218 = vld [vmem:[#allocation2 + $0x290] sm:$0xff]
    %v219 = vld [vmem:[#allocation2 + $0x298] sm:$0xff]
    %v220 = vld [vmem:[#allocation2 + $0x2a0] sm:$0xff]
    %v221 = vld [vmem:[#allocation2 + $0x2a8] sm:$0xff]
    %v222 = vld [vmem:[#allocation2 + $0x2b0] sm:$0xff]
    %v223 = vld [vmem:[#allocation2 + $0x2b8] sm:$0xff]
    %v224 = vld [vmem:[#allocation2 + $0x2c0] sm:$0xff]
    %v225 = vld [vmem:[#allocation2 + $0x2c8] sm:$0xff]
    %v226 = vld [vmem:[#allocation2 + $0x2d0] sm:$0xff]
    %v227 = vld [vmem:[#allocation2 + $0x2d8] sm:$0xff]
    %v228 = vld [vmem:[#allocation2 + $0x2e0] sm:$0xff]
    %v229 = vld [vmem:[#allocation2 + $0x2e8] sm:$0xff]
    %v230 = vld [vmem:[#allocation2 + $0x2f0] sm:$0xff]
    %v231 = vld [vmem:[#allocation2 + $0x2f8] sm:$0xff]
    %v232 = vld [vmem:[#allocation2 + $0x300] sm:$0xff]
    %v233 = vld [vmem:[#allocation2 + $0x308] sm:$0xff]
    %v234 = vld [vmem:[#allocation2 + $0x310] sm:$0xff]
    %v235 = vld [vmem:[#allocation2 + $0x318] sm:$0xff]
    %v236 = vld [vmem:[#allocation2 + $0x320] sm:$0xff]
    %v237 = vld [vmem:[#allocation2 + $0x328] sm:$0xff]
    %v238 = vld [vmem:[#allocation2 + $0x330] sm:$0xff]
    %v239 = vld [vmem:[#allocation2 + $0x338] sm:$0xff]
    %v240 = vld [vmem:[#allocation2 + $0x340] sm:$0xff]
    %v241 = vld [vmem:[#allocation2 + $0x348] sm:$0xff]
    %v242 = vld [vmem:[#allocation2 + $0x350] sm:$0xff]
    %v243 = vld [vmem:[#allocation2 + $0x358] sm:$0xff]
    %v244 = vld [vmem:[#allocation2 + $0x360] sm:$0xff]
    %v245 = vld [vmem:[#allocation2 + $0x368] sm:$0xff]
    %v246 = vld [vmem:[#allocation2 + $0x370] sm:$0xff]
    %v247 = vld [vmem:[#allocation2 + $0x378] sm:$0xff]
    %v248 = vld [vmem:[#allocation2 + $0x380] sm:$0xff]
    %v249 = vld [vmem:[#allocation2 + $0x388] sm:$0xff]
    %v250 = vld [vmem:[#allocation2 + $0x390] sm:$0xff]
    %v251 = vld [vmem:[#allocation2 + $0x398] sm:$0xff]
    %v252 = vld [vmem:[#allocation2 + $0x3a0] sm:$0xff]
    %v253 = vld [vmem:[#allocation2 + $0x3a8] sm:$0xff]
    %v254 = vld [vmem:[#allocation2 + $0x3b0] sm:$0xff]
    %v255 = vld [vmem:[#allocation2 + $0x3b8] sm:$0xff]
    %v256 = vld [vmem:[#allocation2 + $0x3c0] sm:$0xff]
    %v257 = vld [vmem:[#allocation2 + $0x3c8] sm:$0xff]
    %v258 = vld [vmem:[#allocation2 + $0x3d0] sm:$0xff]
    %v259 = vld [vmem:[#allocation2 + $0x3d8] sm:$0xff]
    %v260 = vld [vmem:[#allocation2 + $0x3e0] sm:$0xff]
    %v261 = vld [vmem:[#allocation2 + $0x3e8] sm:$0xff]
    %v262 = vld [vmem:[#allocation2 + $0x3f0] sm:$0xff]
    %v263 = vld [vmem:[#allocation2 + $0x3f8] sm:$0xff]
    %v264 = vld [vmem:[#allocation2 + $0x400] sm:$0xff]
    %v265 = vld [vmem:[#allocation2 + $0x408] sm:$0xff]
    %v266 = vld [vmem:[#allocation2 + $0x410] sm:$0xff]
    %v267 = vld [vmem:[#allocation2 + $0x418] sm:$0xff]
    %v268 = vld [vmem:[#allocation2 + $0x420] sm:$0xff]
    %v269 = vld [vmem:[#allocation2 + $0x428] sm:$0xff]
    %v270 = vld [vmem:[#allocation2 + $0x430] sm:$0xff]
    %272 = vst [vmem:[#allocation1] ss:$4 sm:$0xff] %v135
    %v273 = vld.sshfl [vmem:[#allocation1] sm:$0xff pattern:$0x73625140]
    %v274 = vld.sshfl [vmem:[#allocation1 + $0x8] sm:$0xff pattern:$0x73625140]
    %v275 = vld.sshfl [vmem:[#allocation1 + $0x10] sm:$0xff pattern:$0x73625140]
    %v279 = vpack.c.bf16 %v273, %v273
    %v280 = vpack.c.bf16 %v274, %v274
    %v281 = vpack.c.bf16 %v275, %v275
    %v282 = vld [vmem:[#allocation5] sm:$0x3f]
    %v284 = vperm.slane %v282, 0
    %v285 = vperm.slane %v282, 1
    %v286 = vperm.slane %v282, 2
    %v287 = vperm.slane %v282, 3
    %v288 = vperm.slane %v282, 4
    %v289 = vperm.slane %v282, 5
    %v431 = vunpack.c.l.b16 %v136
    %v432 = vunpack.c.h.b16 %v136
    %v433 = vunpack.c.l.b16 %v137
    %v434 = vunpack.c.h.b16 %v137
    %v435 = vunpack.c.l.b16 %v138
    %v436 = vunpack.c.h.b16 %v138
    %v437 = vunpack.c.l.b16 %v139
    %v438 = vunpack.c.h.b16 %v139
    %v439 = vunpack.c.l.b16 %v140
    %v440 = vunpack.c.h.b16 %v140
    %v441 = vunpack.c.l.b16 %v141
    %v442 = vunpack.c.h.b16 %v141
    %v443 = vunpack.c.l.b16 %v142
    %v444 = vunpack.c.h.b16 %v142
    %v445 = vunpack.c.l.b16 %v143
    %v446 = vunpack.c.h.b16 %v143
    %v447 = vunpack.c.l.b16 %v144
    %v448 = vunpack.c.h.b16 %v144
    %v449 = vunpack.c.l.b16 %v145
    %v450 = vunpack.c.h.b16 %v145
    %v451 = vunpack.c.l.b16 %v146
    %v452 = vunpack.c.h.b16 %v146
    %v453 = vunpack.c.l.b16 %v147
    %v454 = vunpack.c.h.b16 %v147
    %v455 = vunpack.c.l.b16 %v148
    %v456 = vunpack.c.h.b16 %v148
    %v457 = vunpack.c.l.b16 %v149
    %v458 = vunpack.c.h.b16 %v149
    %v459 = vunpack.c.l.b16 %v150
    %v460 = vunpack.c.h.b16 %v150
    %v461 = vunpack.c.l.b16 %v151
    %v462 = vunpack.c.h.b16 %v151
    %v463 = vunpack.c.l.b16 %v152
    %v464 = vunpack.c.h.b16 %v152
    %v465 = vunpack.c.l.b16 %v153
    %v466 = vunpack.c.h.b16 %v153
    %v467 = vunpack.c.l.b16 %v154
    %v468 = vunpack.c.h.b16 %v154
    %v469 = vunpack.c.l.b16 %v155
    %v470 = vunpack.c.h.b16 %v155
    %v471 = vunpack.c.l.b16 %v156
    %v472 = vunpack.c.h.b16 %v156
    %v473 = vunpack.c.l.b16 %v157
    %v474 = vunpack.c.h.b16 %v157
    %v475 = vunpack.c.l.b16 %v158
    %v476 = vunpack.c.h.b16 %v158
    %v477 = vunpack.c.l.b16 %v159
    %v478 = vunpack.c.h.b16 %v159
    %v479 = vunpack.c.l.b16 %v160
    %v480 = vunpack.c.h.b16 %v160
    %v481 = vunpack.c.l.b16 %v161
    %v482 = vunpack.c.h.b16 %v161
    %v483 = vunpack.c.l.b16 %v162
    %v484 = vunpack.c.h.b16 %v162
    %v485 = vunpack.c.l.b16 %v163
    %v486 = vunpack.c.h.b16 %v163
    %v487 = vunpack.c.l.b16 %v164
    %v488 = vunpack.c.h.b16 %v164
    %v489 = vunpack.c.l.b16 %v165
    %v490 = vunpack.c.h.b16 %v165
    %v491 = vunpack.c.l.b16 %v166
    %v492 = vunpack.c.h.b16 %v166
    %v493 = vunpack.c.l.b16 %v167
    %v494 = vunpack.c.h.b16 %v167
    %v495 = vunpack.c.l.b16 %v168
    %v496 = vunpack.c.h.b16 %v168
    %v497 = vunpack.c.l.b16 %v169
    %v498 = vunpack.c.h.b16 %v169
    %v499 = vunpack.c.l.b16 %v170
    %v500 = vunpack.c.h.b16 %v170
    %v501 = vunpack.c.l.b16 %v171
    %v502 = vunpack.c.h.b16 %v171
    %v503 = vunpack.c.l.b16 %v172
    %v504 = vunpack.c.h.b16 %v172
    %v505 = vunpack.c.l.b16 %v173
    %v506 = vunpack.c.h.b16 %v173
    %v507 = vunpack.c.l.b16 %v174
    %v508 = vunpack.c.h.b16 %v174
    %v509 = vunpack.c.l.b16 %v175
    %v510 = vunpack.c.h.b16 %v175
    %v511 = vunpack.c.l.b16 %v176
    %v512 = vunpack.c.h.b16 %v176
    %v513 = vunpack.c.l.b16 %v177
    %v514 = vunpack.c.h.b16 %v177
    %v515 = vunpack.c.l.b16 %v178
    %v516 = vunpack.c.h.b16 %v178
    %v517 = vunpack.c.l.b16 %v179
    %v518 = vunpack.c.h.b16 %v179
    %v519 = vunpack.c.l.b16 %v180
    %v520 = vunpack.c.h.b16 %v180
    %v521 = vunpack.c.l.b16 %v181
    %v522 = vunpack.c.h.b16 %v181
    %v523 = vunpack.c.l.b16 %v182
    %v524 = vunpack.c.h.b16 %v182
    %v525 = vunpack.c.l.b16 %v183
    %v526 = vunpack.c.h.b16 %v183
    %v527 = vunpack.c.l.b16 %v184
    %v528 = vunpack.c.h.b16 %v184
    %v529 = vunpack.c.l.b16 %v185
    %v530 = vunpack.c.h.b16 %v185
    %v531 = vunpack.c.l.b16 %v186
    %v532 = vunpack.c.h.b16 %v186
    %v533 = vunpack.c.l.b16 %v187
    %v534 = vunpack.c.h.b16 %v187
    %v535 = vunpack.c.l.b16 %v188
    %v536 = vunpack.c.h.b16 %v188
    %v537 = vunpack.c.l.b16 %v189
    %v538 = vunpack.c.h.b16 %v189
    %v539 = vunpack.c.l.b16 %v190
    %v540 = vunpack.c.h.b16 %v190
    %v541 = vunpack.c.l.b16 %v191
    %v542 = vunpack.c.h.b16 %v191
    %v543 = vunpack.c.l.b16 %v192
    %v544 = vunpack.c.h.b16 %v192
    %v545 = vunpack.c.l.b16 %v193
    %v546 = vunpack.c.h.b16 %v193
    %v547 = vunpack.c.l.b16 %v194
    %v548 = vunpack.c.h.b16 %v194
    %v549 = vunpack.c.l.b16 %v195
    %v550 = vunpack.c.h.b16 %v195
    %v551 = vunpack.c.l.b16 %v196
    %v552 = vunpack.c.h.b16 %v196
    %v553 = vunpack.c.l.b16 %v197
    %v554 = vunpack.c.h.b16 %v197
    %v555 = vunpack.c.l.b16 %v198
    %v556 = vunpack.c.h.b16 %v198
    %v557 = vunpack.c.l.b16 %v199
    %v558 = vunpack.c.h.b16 %v199
    %v559 = vunpack.c.l.b16 %v200
    %v560 = vunpack.c.h.b16 %v200
    %v561 = vunpack.c.l.b16 %v201
    %v562 = vunpack.c.h.b16 %v201
    %v563 = vunpack.c.l.b16 %v202
    %v564 = vunpack.c.h.b16 %v202
    %v565 = vunpack.c.l.b16 %v203
    %v566 = vunpack.c.h.b16 %v203
    %v567 = vunpack.c.l.b16 %v204
    %v568 = vunpack.c.h.b16 %v204
    %v569 = vunpack.c.l.b16 %v205
    %v570 = vunpack.c.h.b16 %v205
    %v571 = vunpack.c.l.b16 %v206
    %v572 = vunpack.c.h.b16 %v206
    %v573 = vunpack.c.l.b16 %v207
    %v574 = vunpack.c.h.b16 %v207
    %v575 = vunpack.c.l.b16 %v208
    %v576 = vunpack.c.h.b16 %v208
    %v577 = vunpack.c.l.b16 %v209
    %v578 = vunpack.c.h.b16 %v209
    %v579 = vunpack.c.l.b16 %v210
    %v580 = vunpack.c.h.b16 %v210
    %v581 = vunpack.c.l.b16 %v211
    %v582 = vunpack.c.h.b16 %v211
    %v583 = vunpack.c.l.b16 %v212
    %v584 = vunpack.c.h.b16 %v212
    %v585 = vunpack.c.l.b16 %v213
    %v586 = vunpack.c.h.b16 %v213
    %v587 = vunpack.c.l.b16 %v214
    %v588 = vunpack.c.h.b16 %v214
    %v589 = vunpack.c.l.b16 %v215
    %v590 = vunpack.c.h.b16 %v215
    %v591 = vunpack.c.l.b16 %v216
    %v592 = vunpack.c.h.b16 %v216
    %v593 = vunpack.c.l.b16 %v217
    %v594 = vunpack.c.h.b16 %v217
    %v595 = vunpack.c.l.b16 %v218
    %v596 = vunpack.c.h.b16 %v218
    %v597 = vunpack.c.l.b16 %v219
    %v598 = vunpack.c.h.b16 %v219
    %v599 = vunpack.c.l.b16 %v220
    %v600 = vunpack.c.h.b16 %v220
    %v601 = vunpack.c.l.b16 %v221
    %v602 = vunpack.c.h.b16 %v221
    %v603 = vunpack.c.l.b16 %v222
    %v604 = vunpack.c.h.b16 %v222
    %v605 = vunpack.c.l.b16 %v223
    %v606 = vunpack.c.h.b16 %v223
    %v607 = vunpack.c.l.b16 %v224
    %v608 = vunpack.c.h.b16 %v224
    %v609 = vunpack.c.l.b16 %v225
    %v610 = vunpack.c.h.b16 %v225
    %v611 = vunpack.c.l.b16 %v226
    %v612 = vunpack.c.h.b16 %v226
    %v613 = vunpack.c.l.b16 %v227
    %v614 = vunpack.c.h.b16 %v227
    %v615 = vunpack.c.l.b16 %v228
    %v616 = vunpack.c.h.b16 %v228
    %v617 = vunpack.c.l.b16 %v229
    %v618 = vunpack.c.h.b16 %v229
    %v619 = vunpack.c.l.b16 %v230
    %v620 = vunpack.c.h.b16 %v230
    %v621 = vunpack.c.l.b16 %v231
    %v622 = vunpack.c.h.b16 %v231
    %v623 = vunpack.c.l.b16 %v232
    %v624 = vunpack.c.h.b16 %v232
    %v625 = vunpack.c.l.b16 %v233
    %v626 = vunpack.c.h.b16 %v233
    %v627 = vunpack.c.l.b16 %v234
    %v628 = vunpack.c.h.b16 %v234
    %v629 = vunpack.c.l.b16 %v235
    %v630 = vunpack.c.h.b16 %v235
    %v631 = vunpack.c.l.b16 %v236
    %v632 = vunpack.c.h.b16 %v236
    %v633 = vunpack.c.l.b16 %v237
    %v634 = vunpack.c.h.b16 %v237
    %v635 = vunpack.c.l.b16 %v238
    %v636 = vunpack.c.h.b16 %v238
    %v637 = vunpack.c.l.b16 %v239
    %v638 = vunpack.c.h.b16 %v239
    %v639 = vunpack.c.l.b16 %v240
    %v640 = vunpack.c.h.b16 %v240
    %v641 = vunpack.c.l.b16 %v241
    %v642 = vunpack.c.h.b16 %v241
    %v643 = vunpack.c.l.b16 %v242
    %v644 = vunpack.c.h.b16 %v242
    %v645 = vunpack.c.l.b16 %v243
    %v646 = vunpack.c.h.b16 %v243
    %v647 = vunpack.c.l.b16 %v244
    %v648 = vunpack.c.h.b16 %v244
    %v649 = vunpack.c.l.b16 %v245
    %v650 = vunpack.c.h.b16 %v245
    %v651 = vunpack.c.l.b16 %v246
    %v652 = vunpack.c.h.b16 %v246
    %v653 = vunpack.c.l.b16 %v247
    %v654 = vunpack.c.h.b16 %v247
    %v655 = vunpack.c.l.b16 %v248
    %v656 = vunpack.c.h.b16 %v248
    %v657 = vunpack.c.l.b16 %v249
    %v658 = vunpack.c.h.b16 %v249
    %v659 = vunpack.c.l.b16 %v250
    %v660 = vunpack.c.h.b16 %v250
    %v661 = vunpack.c.l.b16 %v251
    %v662 = vunpack.c.h.b16 %v251
    %v663 = vunpack.c.l.b16 %v252
    %v664 = vunpack.c.h.b16 %v252
    %v665 = vunpack.c.l.b16 %v253
    %v666 = vunpack.c.h.b16 %v253
    %v667 = vunpack.c.l.b16 %v254
    %v668 = vunpack.c.h.b16 %v254
    %v669 = vunpack.c.l.b16 %v255
    %v670 = vunpack.c.h.b16 %v255
    %v671 = vunpack.c.l.b16 %v256
    %v672 = vunpack.c.h.b16 %v256
    %v673 = vunpack.c.l.b16 %v257
    %v674 = vunpack.c.h.b16 %v257
    %v675 = vunpack.c.l.b16 %v258
    %v676 = vunpack.c.h.b16 %v258
    %v677 = vunpack.c.l.b16 %v259
    %v678 = vunpack.c.h.b16 %v259
    %v679 = vunpack.c.l.b16 %v260
    %v680 = vunpack.c.h.b16 %v260
    %v681 = vunpack.c.l.b16 %v261
    %v682 = vunpack.c.h.b16 %v261
    %v683 = vunpack.c.l.b16 %v262
    %v684 = vunpack.c.h.b16 %v262
    %v685 = vunpack.c.l.b16 %v263
    %v686 = vunpack.c.h.b16 %v263
    %v687 = vunpack.c.l.b16 %v264
    %v688 = vunpack.c.h.b16 %v264
    %v689 = vunpack.c.l.b16 %v265
    %v690 = vunpack.c.h.b16 %v265
    %v691 = vunpack.c.l.b16 %v266
    %v692 = vunpack.c.h.b16 %v266
    %v693 = vunpack.c.l.b16 %v267
    %v694 = vunpack.c.h.b16 %v267
    %v695 = vunpack.c.l.b16 %v268
    %v696 = vunpack.c.h.b16 %v268
    %v697 = vunpack.c.l.b16 %v269
    %v698 = vunpack.c.h.b16 %v269
    %v699 = vunpack.c.l.b16 %v270
    %v700 = vunpack.c.h.b16 %v270
    %v701 = vpack.c.b16 %v437, %v431
    %v702 = vpack.c.b16 %v438, %v432
    %v703 = vpack.c.b16 %v439, %v433
    %v704 = vpack.c.b16 %v440, %v434
    %v705 = vpack.c.b16 %v441, %v435
    %v706 = vpack.c.b16 %v442, %v436
    %v707 = vpack.c.b16 %v449, %v443
    %v708 = vpack.c.b16 %v450, %v444
    %v709 = vpack.c.b16 %v451, %v445
    %v710 = vpack.c.b16 %v452, %v446
    %v711 = vpack.c.b16 %v453, %v447
    %v712 = vpack.c.b16 %v454, %v448
    %v713 = vpack.c.b16 %v461, %v455
    %v714 = vpack.c.b16 %v462, %v456
    %v715 = vpack.c.b16 %v463, %v457
    %v716 = vpack.c.b16 %v464, %v458
    %v717 = vpack.c.b16 %v465, %v459
    %v718 = vpack.c.b16 %v466, %v460
    %v719 = vpack.c.b16 %v473, %v467
    %v720 = vpack.c.b16 %v474, %v468
    %v721 = vpack.c.b16 %v475, %v469
    %v722 = vpack.c.b16 %v476, %v470
    %v723 = vpack.c.b16 %v477, %v471
    %v724 = vpack.c.b16 %v478, %v472
    %v725 = vpack.c.b16 %v485, %v479
    %v726 = vpack.c.b16 %v486, %v480
    %v727 = vpack.c.b16 %v487, %v481
    %v728 = vpack.c.b16 %v488, %v482
    %v729 = vpack.c.b16 %v489, %v483
    %v730 = vpack.c.b16 %v490, %v484
    %v731 = vpack.c.b16 %v497, %v491
    %v732 = vpack.c.b16 %v498, %v492
    %v733 = vpack.c.b16 %v499, %v493
    %v734 = vpack.c.b16 %v500, %v494
    %v735 = vpack.c.b16 %v501, %v495
    %v736 = vpack.c.b16 %v502, %v496
    %v737 = vpack.c.b16 %v509, %v503
    %v738 = vpack.c.b16 %v510, %v504
    %v739 = vpack.c.b16 %v511, %v505
    %v740 = vpack.c.b16 %v512, %v506
    %v741 = vpack.c.b16 %v513, %v507
    %v742 = vpack.c.b16 %v514, %v508
    %v743 = vpack.c.b16 %v521, %v515
    %v744 = vpack.c.b16 %v522, %v516
    %v745 = vpack.c.b16 %v523, %v517
    %v746 = vpack.c.b16 %v524, %v518
    %v747 = vpack.c.b16 %v525, %v519
    %v748 = vpack.c.b16 %v526, %v520
    %v749 = vpack.c.b16 %v533, %v527
    %v750 = vpack.c.b16 %v534, %v528
    %v751 = vpack.c.b16 %v535, %v529
    %v752 = vpack.c.b16 %v536, %v530
    %v753 = vpack.c.b16 %v537, %v531
    %v754 = vpack.c.b16 %v538, %v532
    %v755 = vpack.c.b16 %v545, %v539
    %v756 = vpack.c.b16 %v546, %v540
    %v757 = vpack.c.b16 %v547, %v541
    %v758 = vpack.c.b16 %v548, %v542
    %v759 = vpack.c.b16 %v549, %v543
    %v760 = vpack.c.b16 %v550, %v544
    %v761 = vpack.c.b16 %v557, %v551
    %v762 = vpack.c.b16 %v558, %v552
    %v763 = vpack.c.b16 %v559, %v553
    %v764 = vpack.c.b16 %v560, %v554
    %v765 = vpack.c.b16 %v561, %v555
    %v766 = vpack.c.b16 %v562, %v556
    %v767 = vpack.c.b16 %v569, %v563
    %v768 = vpack.c.b16 %v570, %v564
    %v769 = vpack.c.b16 %v571, %v565
    %v770 = vpack.c.b16 %v572, %v566
    %v771 = vpack.c.b16 %v573, %v567
    %v772 = vpack.c.b16 %v574, %v568
    %v773 = vpack.c.b16 %v581, %v575
    %v774 = vpack.c.b16 %v582, %v576
    %v775 = vpack.c.b16 %v583, %v577
    %v776 = vpack.c.b16 %v584, %v578
    %v777 = vpack.c.b16 %v585, %v579
    %v778 = vpack.c.b16 %v586, %v580
    %v779 = vpack.c.b16 %v593, %v587
    %v780 = vpack.c.b16 %v594, %v588
    %v781 = vpack.c.b16 %v595, %v589
    %v782 = vpack.c.b16 %v596, %v590
    %v783 = vpack.c.b16 %v597, %v591
    %v784 = vpack.c.b16 %v598, %v592
    %v785 = vpack.c.b16 %v605, %v599
    %v786 = vpack.c.b16 %v606, %v600
    %v787 = vpack.c.b16 %v607, %v601
    %v788 = vpack.c.b16 %v608, %v602
    %v789 = vpack.c.b16 %v609, %v603
    %v790 = vpack.c.b16 %v610, %v604
    %v791 = vpack.c.b16 %v617, %v611
    %v792 = vpack.c.b16 %v618, %v612
    %v793 = vpack.c.b16 %v619, %v613
    %v794 = vpack.c.b16 %v620, %v614
    %v795 = vpack.c.b16 %v621, %v615
    %v796 = vpack.c.b16 %v622, %v616
    %v797 = vpack.c.b16 %v629, %v623
    %v798 = vpack.c.b16 %v630, %v624
    %v799 = vpack.c.b16 %v631, %v625
    %v800 = vpack.c.b16 %v632, %v626
    %v801 = vpack.c.b16 %v633, %v627
    %v802 = vpack.c.b16 %v634, %v628
    %v803 = vpack.c.b16 %v641, %v635
    %v804 = vpack.c.b16 %v642, %v636
    %v805 = vpack.c.b16 %v643, %v637
    %v806 = vpack.c.b16 %v644, %v638
    %v807 = vpack.c.b16 %v645, %v639
    %v808 = vpack.c.b16 %v646, %v640
    %v809 = vpack.c.b16 %v653, %v647
    %v810 = vpack.c.b16 %v654, %v648
    %v811 = vpack.c.b16 %v655, %v649
    %v812 = vpack.c.b16 %v656, %v650
    %v813 = vpack.c.b16 %v657, %v651
    %v814 = vpack.c.b16 %v658, %v652
    %v815 = vpack.c.b16 %v665, %v659
    %v816 = vpack.c.b16 %v666, %v660
    %v817 = vpack.c.b16 %v667, %v661
    %v818 = vpack.c.b16 %v668, %v662
    %v819 = vpack.c.b16 %v669, %v663
    %v820 = vpack.c.b16 %v670, %v664
    %v821 = vpack.c.b16 %v677, %v671
    %v822 = vpack.c.b16 %v678, %v672
    %v823 = vpack.c.b16 %v679, %v673
    %v824 = vpack.c.b16 %v680, %v674
    %v825 = vpack.c.b16 %v681, %v675
    %v826 = vpack.c.b16 %v682, %v676
    %v827 = vpack.c.b16 %v689, %v683
    %v828 = vpack.c.b16 %v690, %v684
    %v829 = vpack.c.b16 %v691, %v685
    %v830 = vpack.c.b16 %v692, %v686
    %v831 = vpack.c.b16 %v693, %v687
    %v832 = vpack.c.b16 %v694, %v688
    %v833 = vpack.c.b16 %v695, %v695
    %v834 = vpack.c.b16 %v696, %v696
    %v835 = vpack.c.b16 %v697, %v697
    %v836 = vpack.c.b16 %v698, %v698
    %v837 = vpack.c.b16 %v699, %v699
    %v838 = vpack.c.b16 %v700, %v700
    %vm971 = vcmask 850944
    %v973 = vsel %vm971, %v281, 0
    %vm975 = vcmask 1043456
    %v977 = vsel %vm975, %v833, 0
    %v980 = vsel %vm975, %v834, 0
    %v983 = vsel %vm975, %v835, 0
    %v986 = vsel %vm975, %v836, 0
    %v989 = vsel %vm975, %v837, 0
    %v992 = vsel %vm975, %v838, 0
    %994 = vmatpush.bf16.msra.mxu0 %v743
    %995 = vmatpush.bf16.msra.mxu0 %v737
    %996 = vmatpush.bf16.msra.mxu0 %v731
    %997 = vmatpush.bf16.msra.mxu0 %v725
    %998 = vmatpush.bf16.msra.mxu0 %v719
    %999 = vmatpush.bf16.msra.mxu0 %v713
    %1000 = vmatpush.bf16.msra.mxu0 %v707
    %1001 = vmatpush.bf16.msra.mxu0 %v701
    %1002 = vmatmul.bf16.gmra.mxu0 %v279
    %v1003 = vpop.f32.mrf.mxu0
    %v1004 = vadd.f32 %v284, %v1003
    %v1005 = vpop.f32.mrf.mxu0
    %1006 = vdwg.mxu0
    %1007 = vmatpush.bf16.msra.mxu0 %v791
    %1008 = vmatpush.bf16.msra.mxu0 %v785
    %1009 = vmatpush.bf16.msra.mxu0 %v779
    %1010 = vmatpush.bf16.msra.mxu0 %v773
    %1011 = vmatpush.bf16.msra.mxu0 %v767
    %1012 = vmatpush.bf16.msra.mxu0 %v761
    %1013 = vmatpush.bf16.msra.mxu0 %v755
    %1014 = vmatpush.bf16.msra.mxu0 %v749
    %1015 = vmatmul.bf16.gmra.mxu0 %v280
    %v1016 = vpop.f32.mrf.mxu0
    %v1017 = vadd.f32 %v1004, %v1016
    %v1018 = vpop.f32.mrf.mxu0
    %1019 = vdwg.mxu0
    %1020 = vmatpush.bf16.msra.mxu0 0
    %1021 = vmatpush.bf16.msra.mxu0 %v977
    %1022 = vmatpush.bf16.msra.mxu0 %v827
    %1023 = vmatpush.bf16.msra.mxu0 %v821
    %1024 = vmatpush.bf16.msra.mxu0 %v815
    %1025 = vmatpush.bf16.msra.mxu0 %v809
    %1026 = vmatpush.bf16.msra.mxu0 %v803
    %1027 = vmatpush.bf16.msra.mxu0 %v797
    %1028 = vmatmul.bf16.gmra.mxu0 %v973
    %v1029 = vpop.f32.mrf.mxu0
    %v1030 = vadd.f32 %v1017, %v1029
    %v1031 = vpop.f32.mrf.mxu0
    %1032 = vdwg.mxu0
    %1033 = vmatpush.bf16.msra.mxu0 %v744
    %1034 = vmatpush.bf16.msra.mxu0 %v738
    %1035 = vmatpush.bf16.msra.mxu0 %v732
    %1036 = vmatpush.bf16.msra.mxu0 %v726
    %1037 = vmatpush.bf16.msra.mxu0 %v720
    %1038 = vmatpush.bf16.msra.mxu0 %v714
    %1039 = vmatpush.bf16.msra.mxu0 %v708
    %1040 = vmatpush.bf16.msra.mxu0 %v702
    %1041 = vmatmul.bf16.gmra.mxu0 %v279
    %v1042 = vpop.f32.mrf.mxu0
    %v1043 = vadd.f32 %v285, %v1042
    %v1044 = vpop.f32.mrf.mxu0
    %1045 = vdwg.mxu0
    %1046 = vmatpush.bf16.msra.mxu0 %v792
    %1047 = vmatpush.bf16.msra.mxu0 %v786
    %1048 = vmatpush.bf16.msra.mxu0 %v780
    %1049 = vmatpush.bf16.msra.mxu0 %v774
    %1050 = vmatpush.bf16.msra.mxu0 %v768
    %1051 = vmatpush.bf16.msra.mxu0 %v762
    %1052 = vmatpush.bf16.msra.mxu0 %v756
    %1053 = vmatpush.bf16.msra.mxu0 %v750
    %1054 = vmatmul.bf16.gmra.mxu0 %v280
    %v1055 = vpop.f32.mrf.mxu0
    %v1056 = vadd.f32 %v1043, %v1055
    %v1057 = vpop.f32.mrf.mxu0
    %1058 = vdwg.mxu0
    %1059 = vmatpush.bf16.msra.mxu0 0
    %1060 = vmatpush.bf16.msra.mxu0 %v980
    %1061 = vmatpush.bf16.msra.mxu0 %v828
    %1062 = vmatpush.bf16.msra.mxu0 %v822
    %1063 = vmatpush.bf16.msra.mxu0 %v816
    %1064 = vmatpush.bf16.msra.mxu0 %v810
    %1065 = vmatpush.bf16.msra.mxu0 %v804
    %1066 = vmatpush.bf16.msra.mxu0 %v798
    %1067 = vmatmul.bf16.gmra.mxu0 %v973
    %v1068 = vpop.f32.mrf.mxu0
    %v1069 = vadd.f32 %v1056, %v1068
    %v1070 = vpop.f32.mrf.mxu0
    %1071 = vdwg.mxu0
    %1072 = vmatpush.bf16.msra.mxu0 %v745
    %1073 = vmatpush.bf16.msra.mxu0 %v739
    %1074 = vmatpush.bf16.msra.mxu0 %v733
    %1075 = vmatpush.bf16.msra.mxu0 %v727
    %1076 = vmatpush.bf16.msra.mxu0 %v721
    %1077 = vmatpush.bf16.msra.mxu0 %v715
    %1078 = vmatpush.bf16.msra.mxu0 %v709
    %1079 = vmatpush.bf16.msra.mxu0 %v703
    %1080 = vmatmul.bf16.gmra.mxu0 %v279
    %v1081 = vpop.f32.mrf.mxu0
    %v1082 = vadd.f32 %v286, %v1081
    %v1083 = vpop.f32.mrf.mxu0
    %1084 = vdwg.mxu0
    %1085 = vmatpush.bf16.msra.mxu0 %v793
    %1086 = vmatpush.bf16.msra.mxu0 %v787
    %1087 = vmatpush.bf16.msra.mxu0 %v781
    %1088 = vmatpush.bf16.msra.mxu0 %v775
    %1089 = vmatpush.bf16.msra.mxu0 %v769
    %1090 = vmatpush.bf16.msra.mxu0 %v763
    %1091 = vmatpush.bf16.msra.mxu0 %v757
    %1092 = vmatpush.bf16.msra.mxu0 %v751
    %1093 = vmatmul.bf16.gmra.mxu0 %v280
    %v1094 = vpop.f32.mrf.mxu0
    %v1095 = vadd.f32 %v1082, %v1094
    %v1096 = vpop.f32.mrf.mxu0
    %1097 = vdwg.mxu0
    %1098 = vmatpush.bf16.msra.mxu0 0
    %1099 = vmatpush.bf16.msra.mxu0 %v983
    %1100 = vmatpush.bf16.msra.mxu0 %v829
    %1101 = vmatpush.bf16.msra.mxu0 %v823
    %1102 = vmatpush.bf16.msra.mxu0 %v817
    %1103 = vmatpush.bf16.msra.mxu0 %v811
    %1104 = vmatpush.bf16.msra.mxu0 %v805
    %1105 = vmatpush.bf16.msra.mxu0 %v799
    %1106 = vmatmul.bf16.gmra.mxu0 %v973
    %v1107 = vpop.f32.mrf.mxu0
    %v1108 = vadd.f32 %v1095, %v1107
    %v1109 = vpop.f32.mrf.mxu0
    %1110 = vdwg.mxu0
    %1111 = vmatpush.bf16.msra.mxu0 %v746
    %1112 = vmatpush.bf16.msra.mxu0 %v740
    %1113 = vmatpush.bf16.msra.mxu0 %v734
    %1114 = vmatpush.bf16.msra.mxu0 %v728
    %1115 = vmatpush.bf16.msra.mxu0 %v722
    %1116 = vmatpush.bf16.msra.mxu0 %v716
    %1117 = vmatpush.bf16.msra.mxu0 %v710
    %1118 = vmatpush.bf16.msra.mxu0 %v704
    %1119 = vmatmul.bf16.gmra.mxu0 %v279
    %v1120 = vpop.f32.mrf.mxu0
    %v1121 = vadd.f32 %v287, %v1120
    %v1122 = vpop.f32.mrf.mxu0
    %1123 = vdwg.mxu0
    %1124 = vmatpush.bf16.msra.mxu0 %v794
    %1125 = vmatpush.bf16.msra.mxu0 %v788
    %1126 = vmatpush.bf16.msra.mxu0 %v782
    %1127 = vmatpush.bf16.msra.mxu0 %v776
    %1128 = vmatpush.bf16.msra.mxu0 %v770
    %1129 = vmatpush.bf16.msra.mxu0 %v764
    %1130 = vmatpush.bf16.msra.mxu0 %v758
    %1131 = vmatpush.bf16.msra.mxu0 %v752
    %1132 = vmatmul.bf16.gmra.mxu0 %v280
    %v1133 = vpop.f32.mrf.mxu0
    %v1134 = vadd.f32 %v1121, %v1133
    %v1135 = vpop.f32.mrf.mxu0
    %1136 = vdwg.mxu0
    %1137 = vmatpush.bf16.msra.mxu0 0
    %1138 = vmatpush.bf16.msra.mxu0 %v986
    %1139 = vmatpush.bf16.msra.mxu0 %v830
    %1140 = vmatpush.bf16.msra.mxu0 %v824
    %1141 = vmatpush.bf16.msra.mxu0 %v818
    %1142 = vmatpush.bf16.msra.mxu0 %v812
    %1143 = vmatpush.bf16.msra.mxu0 %v806
    %1144 = vmatpush.bf16.msra.mxu0 %v800
    %1145 = vmatmul.bf16.gmra.mxu0 %v973
    %v1146 = vpop.f32.mrf.mxu0
    %v1147 = vadd.f32 %v1134, %v1146
    %v1148 = vpop.f32.mrf.mxu0
    %1149 = vdwg.mxu0
    %1150 = vmatpush.bf16.msra.mxu0 %v747
    %1151 = vmatpush.bf16.msra.mxu0 %v741
    %1152 = vmatpush.bf16.msra.mxu0 %v735
    %1153 = vmatpush.bf16.msra.mxu0 %v729
    %1154 = vmatpush.bf16.msra.mxu0 %v723
    %1155 = vmatpush.bf16.msra.mxu0 %v717
    %1156 = vmatpush.bf16.msra.mxu0 %v711
    %1157 = vmatpush.bf16.msra.mxu0 %v705
    %1158 = vmatmul.bf16.gmra.mxu0 %v279
    %v1159 = vpop.f32.mrf.mxu0
    %v1160 = vadd.f32 %v288, %v1159
    %v1161 = vpop.f32.mrf.mxu0
    %1162 = vdwg.mxu0
    %1163 = vmatpush.bf16.msra.mxu0 %v795
    %1164 = vmatpush.bf16.msra.mxu0 %v789
    %1165 = vmatpush.bf16.msra.mxu0 %v783
    %1166 = vmatpush.bf16.msra.mxu0 %v777
    %1167 = vmatpush.bf16.msra.mxu0 %v771
    %1168 = vmatpush.bf16.msra.mxu0 %v765
    %1169 = vmatpush.bf16.msra.mxu0 %v759
    %1170 = vmatpush.bf16.msra.mxu0 %v753
    %1171 = vmatmul.bf16.gmra.mxu0 %v280
    %v1172 = vpop.f32.mrf.mxu0
    %v1173 = vadd.f32 %v1160, %v1172
    %v1174 = vpop.f32.mrf.mxu0
    %1175 = vdwg.mxu0
    %1176 = vmatpush.bf16.msra.mxu0 0
    %1177 = vmatpush.bf16.msra.mxu0 %v989
    %1178 = vmatpush.bf16.msra.mxu0 %v831
    %1179 = vmatpush.bf16.msra.mxu0 %v825
    %1180 = vmatpush.bf16.msra.mxu0 %v819
    %1181 = vmatpush.bf16.msra.mxu0 %v813
    %1182 = vmatpush.bf16.msra.mxu0 %v807
    %1183 = vmatpush.bf16.msra.mxu0 %v801
    %1184 = vmatmul.bf16.gmra.mxu0 %v973
    %v1185 = vpop.f32.mrf.mxu0
    %v1186 = vadd.f32 %v1173, %v1185
    %v1187 = vpop.f32.mrf.mxu0
    %1188 = vdwg.mxu0
    %1189 = vmatpush.bf16.msra.mxu0 %v748
    %1190 = vmatpush.bf16.msra.mxu0 %v742
    %1191 = vmatpush.bf16.msra.mxu0 %v736
    %1192 = vmatpush.bf16.msra.mxu0 %v730
    %1193 = vmatpush.bf16.msra.mxu0 %v724
    %1194 = vmatpush.bf16.msra.mxu0 %v718
    %1195 = vmatpush.bf16.msra.mxu0 %v712
    %1196 = vmatpush.bf16.msra.mxu0 %v706
    %1197 = vmatmul.bf16.gmra.mxu0 %v279
    %v1198 = vpop.f32.mrf.mxu0
    %v1199 = vadd.f32 %v289, %v1198
    %v1200 = vpop.f32.mrf.mxu0
    %1201 = vdwg.mxu0
    %1202 = vmatpush.bf16.msra.mxu0 %v796
    %1203 = vmatpush.bf16.msra.mxu0 %v790
    %1204 = vmatpush.bf16.msra.mxu0 %v784
    %1205 = vmatpush.bf16.msra.mxu0 %v778
    %1206 = vmatpush.bf16.msra.mxu0 %v772
    %1207 = vmatpush.bf16.msra.mxu0 %v766
    %1208 = vmatpush.bf16.msra.mxu0 %v760
    %1209 = vmatpush.bf16.msra.mxu0 %v754
    %1210 = vmatmul.bf16.gmra.mxu0 %v280
    %v1211 = vpop.f32.mrf.mxu0
    %v1212 = vadd.f32 %v1199, %v1211
    %v1213 = vpop.f32.mrf.mxu0
    %1214 = vdwg.mxu0
    %1215 = vmatpush.bf16.msra.mxu0 0
    %1216 = vmatpush.bf16.msra.mxu0 %v992
    %1217 = vmatpush.bf16.msra.mxu0 %v832
    %1218 = vmatpush.bf16.msra.mxu0 %v826
    %1219 = vmatpush.bf16.msra.mxu0 %v820
    %1220 = vmatpush.bf16.msra.mxu0 %v814
    %1221 = vmatpush.bf16.msra.mxu0 %v808
    %1222 = vmatpush.bf16.msra.mxu0 %v802
    %1223 = vmatmul.bf16.gmra.mxu0 %v973
    %v1224 = vpop.f32.mrf.mxu0
    %v1225 = vadd.f32 %v1212, %v1224
    %v1226 = vpop.f32.mrf.mxu0
    %1227 = vdwg.mxu0
    %v1228 = vmax.f32 %v1030, 0.0
    %v1229 = vmax.f32 %v1069, 0.0
    %v1230 = vmax.f32 %v1108, 0.0
    %v1231 = vmax.f32 %v1147, 0.0
    %v1232 = vmax.f32 %v1186, 0.0
    %v1233 = vmax.f32 %v1225, 0.0
    %v1234 = vld [vmem:[#allocation7] sm:$0xff]
    %v1235 = vld [vmem:[#allocation7 + $0x8] sm:$0xff]
    %v1236 = vld [vmem:[#allocation7 + $0x10] sm:$0xff]
    %v1237 = vld [vmem:[#allocation7 + $0x18] sm:$0xff]
    %v1238 = vld [vmem:[#allocation7 + $0x20] sm:$0xff]
    %v1239 = vld [vmem:[#allocation7 + $0x28] sm:$0xff]
    %v1240 = vld [vmem:[#allocation7 + $0x30] sm:$0xff]
    %v1241 = vld [vmem:[#allocation7 + $0x38] sm:$0xff]
    %v1242 = vld [vmem:[#allocation7 + $0x40] sm:$0xff]
    %v1243 = vld [vmem:[#allocation7 + $0x48] sm:$0xff]
    %v1244 = vld [vmem:[#allocation7 + $0x50] sm:$0xff]
    %v1245 = vld [vmem:[#allocation7 + $0x58] sm:$0xff]
    %v1246 = vld [vmem:[#allocation7 + $0x60] sm:$0xff]
    %v1247 = vld [vmem:[#allocation7 + $0x68] sm:$0xff]
    %v1248 = vld [vmem:[#allocation7 + $0x70] sm:$0xff]
    %v1249 = vld [vmem:[#allocation7 + $0x78] sm:$0xff]
    %v1250 = vld [vmem:[#allocation7 + $0x80] sm:$0xff]
    %v1251 = vld [vmem:[#allocation7 + $0x88] sm:$0xff]
    %v1252 = vld [vmem:[#allocation7 + $0x90] sm:$0xff]
    %v1253 = vld [vmem:[#allocation7 + $0x98] sm:$0xff]
    %v1254 = vld [vmem:[#allocation7 + $0xa0] sm:$0xff]
    %v1255 = vld [vmem:[#allocation7 + $0xa8] sm:$0xff]
    %v1256 = vld [vmem:[#allocation7 + $0xb0] sm:$0xff]
    %v1257 = vld [vmem:[#allocation7 + $0xb8] sm:$0xff]
    %v1258 = vld [vmem:[#allocation7 + $0xc0] sm:$0xff]
    %v1259 = vld [vmem:[#allocation7 + $0xc8] sm:$0xff]
    %v1260 = vld [vmem:[#allocation7 + $0xd0] sm:$0xff]
    %v1261 = vld [vmem:[#allocation7 + $0xd8] sm:$0xff]
    %v1262 = vld [vmem:[#allocation7 + $0xe0] sm:$0xff]
    %v1263 = vld [vmem:[#allocation7 + $0xe8] sm:$0xff]
    %v1264 = vld [vmem:[#allocation7 + $0xf0] sm:$0xff]
    %v1265 = vld [vmem:[#allocation7 + $0xf8] sm:$0xff]
    %v1266 = vld [vmem:[#allocation7 + $0x100] sm:$0xff]
    %v1267 = vld [vmem:[#allocation7 + $0x108] sm:$0xff]
    %v1268 = vld [vmem:[#allocation7 + $0x110] sm:$0xff]
    %v1269 = vld [vmem:[#allocation7 + $0x118] sm:$0xff]
    %v1270 = vld [vmem:[#allocation7 + $0x120] sm:$0xff]
    %v1271 = vld [vmem:[#allocation7 + $0x128] sm:$0xff]
    %v1272 = vld [vmem:[#allocation7 + $0x130] sm:$0xff]
    %v1273 = vld [vmem:[#allocation7 + $0x138] sm:$0xff]
    %v1274 = vld [vmem:[#allocation7 + $0x140] sm:$0xff]
    %v1275 = vld [vmem:[#allocation7 + $0x148] sm:$0xff]
    %v1276 = vld [vmem:[#allocation7 + $0x150] sm:$0xff]
    %v1277 = vld [vmem:[#allocation7 + $0x158] sm:$0xff]
    %v1278 = vld [vmem:[#allocation7 + $0x160] sm:$0xff]
    %v1279 = vld [vmem:[#allocation7 + $0x168] sm:$0xff]
    %v1280 = vld [vmem:[#allocation7 + $0x170] sm:$0xff]
    %v1281 = vld [vmem:[#allocation7 + $0x178] sm:$0xff]
    %v1282 = vld [vmem:[#allocation7 + $0x180] sm:$0xff]
    %v1283 = vld [vmem:[#allocation7 + $0x188] sm:$0xff]
    %v1284 = vld [vmem:[#allocation7 + $0x190] sm:$0xff]
    %v1285 = vld [vmem:[#allocation7 + $0x198] sm:$0xff]
    %v1286 = vld [vmem:[#allocation7 + $0x1a0] sm:$0xff]
    %v1287 = vld [vmem:[#allocation7 + $0x1a8] sm:$0xff]
    %v1288 = vld [vmem:[#allocation7 + $0x1b0] sm:$0xff]
    %v1289 = vld [vmem:[#allocation7 + $0x1b8] sm:$0xff]
    %v1290 = vld [vmem:[#allocation7 + $0x1c0] sm:$0xff]
    %v1291 = vld [vmem:[#allocation7 + $0x1c8] sm:$0xff]
    %v1292 = vld [vmem:[#allocation7 + $0x1d0] sm:$0xff]
    %v1293 = vld [vmem:[#allocation7 + $0x1d8] sm:$0xff]
    %v1294 = vld [vmem:[#allocation7 + $0x1e0] sm:$0xff]
    %v1295 = vld [vmem:[#allocation7 + $0x1e8] sm:$0xff]
    %v1296 = vld [vmem:[#allocation7 + $0x1f0] sm:$0xff]
    %v1297 = vld [vmem:[#allocation7 + $0x1f8] sm:$0xff]
    %v1298 = vld [vmem:[#allocation7 + $0x200] sm:$0xff]
    %v1299 = vld [vmem:[#allocation7 + $0x208] sm:$0xff]
    %v1300 = vld [vmem:[#allocation7 + $0x210] sm:$0xff]
    %v1301 = vld [vmem:[#allocation7 + $0x218] sm:$0xff]
    %v1302 = vld [vmem:[#allocation7 + $0x220] sm:$0xff]
    %v1303 = vld [vmem:[#allocation7 + $0x228] sm:$0xff]
    %v1304 = vld [vmem:[#allocation7 + $0x230] sm:$0xff]
    %v1305 = vld [vmem:[#allocation7 + $0x238] sm:$0xff]
    %v1306 = vld [vmem:[#allocation7 + $0x240] sm:$0xff]
    %v1307 = vld [vmem:[#allocation7 + $0x248] sm:$0xff]
    %v1308 = vld [vmem:[#allocation7 + $0x250] sm:$0xff]
    %v1309 = vld [vmem:[#allocation7 + $0x258] sm:$0xff]
    %v1310 = vld [vmem:[#allocation7 + $0x260] sm:$0xff]
    %v1311 = vld [vmem:[#allocation7 + $0x268] sm:$0xff]
    %v1312 = vld [vmem:[#allocation7 + $0x270] sm:$0xff]
    %v1313 = vld [vmem:[#allocation7 + $0x278] sm:$0xff]
    %v1314 = vld [vmem:[#allocation7 + $0x280] sm:$0xff]
    %v1315 = vld [vmem:[#allocation7 + $0x288] sm:$0xff]
    %v1316 = vld [vmem:[#allocation7 + $0x290] sm:$0xff]
    %v1317 = vld [vmem:[#allocation7 + $0x298] sm:$0xff]
    %v1318 = vld [vmem:[#allocation7 + $0x2a0] sm:$0xff]
    %v1319 = vld [vmem:[#allocation7 + $0x2a8] sm:$0xff]
    %v1320 = vld [vmem:[#allocation7 + $0x2b0] sm:$0xff]
    %v1321 = vld [vmem:[#allocation7 + $0x2b8] sm:$0xff]
    %v1322 = vld [vmem:[#allocation7 + $0x2c0] sm:$0xff]
    %v1323 = vld [vmem:[#allocation7 + $0x2c8] sm:$0xff]
    %v1324 = vld [vmem:[#allocation7 + $0x2d0] sm:$0xff]
    %v1325 = vld [vmem:[#allocation7 + $0x2d8] sm:$0xff]
    %v1326 = vld [vmem:[#allocation7 + $0x2e0] sm:$0xff]
    %v1327 = vld [vmem:[#allocation7 + $0x2e8] sm:$0xff]
    %v1328 = vld [vmem:[#allocation7 + $0x2f0] sm:$0xff]
    %v1329 = vld [vmem:[#allocation7 + $0x2f8] sm:$0xff]
    %v1330 = vld [vmem:[#allocation7 + $0x300] sm:$0xff]
    %v1331 = vld [vmem:[#allocation7 + $0x308] sm:$0xff]
    %v1332 = vld [vmem:[#allocation7 + $0x310] sm:$0xff]
    %v1333 = vld [vmem:[#allocation7 + $0x318] sm:$0xff]
    %v1334 = vld [vmem:[#allocation7 + $0x320] sm:$0xff]
    %v1335 = vld [vmem:[#allocation7 + $0x328] sm:$0xff]
    %v1336 = vld [vmem:[#allocation7 + $0x330] sm:$0xff]
    %v1337 = vld [vmem:[#allocation7 + $0x338] sm:$0xff]
    %v1338 = vld [vmem:[#allocation7 + $0x340] sm:$0xff]
    %v1339 = vld [vmem:[#allocation7 + $0x348] sm:$0xff]
    %v1340 = vld [vmem:[#allocation7 + $0x350] sm:$0xff]
    %v1341 = vld [vmem:[#allocation7 + $0x358] sm:$0xff]
    %v1342 = vld [vmem:[#allocation7 + $0x360] sm:$0xff]
    %v1343 = vld [vmem:[#allocation7 + $0x368] sm:$0xff]
    %v1344 = vld [vmem:[#allocation7 + $0x370] sm:$0xff]
    %v1345 = vld [vmem:[#allocation7 + $0x378] sm:$0xff]
    %v1346 = vld [vmem:[#allocation7 + $0x380] sm:$0xff]
    %v1347 = vld [vmem:[#allocation7 + $0x388] sm:$0xff]
    %v1348 = vld [vmem:[#allocation7 + $0x390] sm:$0xff]
    %v1349 = vld [vmem:[#allocation7 + $0x398] sm:$0xff]
    %v1350 = vld [vmem:[#allocation7 + $0x3a0] sm:$0xff]
    %v1351 = vld [vmem:[#allocation7 + $0x3a8] sm:$0xff]
    %v1352 = vld [vmem:[#allocation7 + $0x3b0] sm:$0xff]
    %v1353 = vld [vmem:[#allocation7 + $0x3b8] sm:$0xff]
    %v1354 = vld [vmem:[#allocation7 + $0x3c0] sm:$0xff]
    %v1355 = vld [vmem:[#allocation7 + $0x3c8] sm:$0xff]
    %v1356 = vld [vmem:[#allocation7 + $0x3d0] sm:$0xff]
    %v1357 = vld [vmem:[#allocation7 + $0x3d8] sm:$0xff]
    %v1358 = vld [vmem:[#allocation7 + $0x3e0] sm:$0xff]
    %v1359 = vld [vmem:[#allocation7 + $0x3e8] sm:$0xff]
    %v1360 = vld [vmem:[#allocation7 + $0x3f0] sm:$0xff]
    %v1361 = vld [vmem:[#allocation7 + $0x3f8] sm:$0xff]
    %v1362 = vld [vmem:[#allocation7 + $0x400] sm:$0xff]
    %v1363 = vld [vmem:[#allocation7 + $0x408] sm:$0xff]
    %v1364 = vld [vmem:[#allocation7 + $0x410] sm:$0xff]
    %v1365 = vld [vmem:[#allocation7 + $0x418] sm:$0xff]
    %v1366 = vld [vmem:[#allocation7 + $0x420] sm:$0xff]
    %v1367 = vld [vmem:[#allocation7 + $0x428] sm:$0xff]
    %v1368 = vld [vmem:[#allocation7 + $0x430] sm:$0xff]
    %v1369 = vld [vmem:[#allocation7 + $0x438] sm:$0xff]
    %v1370 = vld [vmem:[#allocation7 + $0x440] sm:$0xff]
    %v1371 = vld [vmem:[#allocation7 + $0x448] sm:$0xff]
    %v1372 = vld [vmem:[#allocation7 + $0x450] sm:$0xff]
    %v1373 = vld [vmem:[#allocation7 + $0x458] sm:$0xff]
    %v1374 = vld [vmem:[#allocation7 + $0x460] sm:$0xff]
    %v1375 = vld [vmem:[#allocation7 + $0x468] sm:$0xff]
    %v1376 = vld [vmem:[#allocation7 + $0x470] sm:$0xff]
    %v1377 = vld [vmem:[#allocation7 + $0x478] sm:$0xff]
    %v1378 = vld [vmem:[#allocation7 + $0x480] sm:$0xff]
    %v1379 = vld [vmem:[#allocation7 + $0x488] sm:$0xff]
    %v1380 = vld [vmem:[#allocation7 + $0x490] sm:$0xff]
    %v1381 = vld [vmem:[#allocation7 + $0x498] sm:$0xff]
    %v1382 = vld [vmem:[#allocation7 + $0x4a0] sm:$0xff]
    %v1383 = vld [vmem:[#allocation7 + $0x4a8] sm:$0xff]
    %v1384 = vld [vmem:[#allocation7 + $0x4b0] sm:$0xff]
    %v1385 = vld [vmem:[#allocation7 + $0x4b8] sm:$0xff]
    %v1386 = vld [vmem:[#allocation7 + $0x4c0] sm:$0xff]
    %v1387 = vld [vmem:[#allocation7 + $0x4c8] sm:$0xff]
    %v1388 = vld [vmem:[#allocation7 + $0x4d0] sm:$0xff]
    %v1389 = vld [vmem:[#allocation7 + $0x4d8] sm:$0xff]
    %v1390 = vld [vmem:[#allocation7 + $0x4e0] sm:$0xff]
    %v1391 = vld [vmem:[#allocation7 + $0x4e8] sm:$0xff]
    %v1392 = vld [vmem:[#allocation7 + $0x4f0] sm:$0xff]
    %v1393 = vld [vmem:[#allocation7 + $0x4f8] sm:$0xff]
    %v1394 = vld [vmem:[#allocation7 + $0x500] sm:$0xff]
    %v1395 = vld [vmem:[#allocation7 + $0x508] sm:$0xff]
    %v1396 = vld [vmem:[#allocation7 + $0x510] sm:$0xff]
    %v1397 = vld [vmem:[#allocation7 + $0x518] sm:$0xff]
    %v1398 = vld [vmem:[#allocation7 + $0x520] sm:$0xff]
    %v1399 = vld [vmem:[#allocation7 + $0x528] sm:$0xff]
    %v1400 = vld [vmem:[#allocation7 + $0x530] sm:$0xff]
    %v1401 = vld [vmem:[#allocation7 + $0x538] sm:$0xff]
    %v1402 = vld [vmem:[#allocation7 + $0x540] sm:$0xff]
    %v1403 = vld [vmem:[#allocation7 + $0x548] sm:$0xff]
    %v1404 = vld [vmem:[#allocation7 + $0x550] sm:$0xff]
    %v1405 = vld [vmem:[#allocation7 + $0x558] sm:$0xff]
    %v1406 = vld [vmem:[#allocation7 + $0x560] sm:$0xff]
    %v1407 = vld [vmem:[#allocation7 + $0x568] sm:$0xff]
    %v1408 = vld [vmem:[#allocation7 + $0x570] sm:$0xff]
    %v1409 = vld [vmem:[#allocation7 + $0x578] sm:$0xff]
    %v1410 = vld [vmem:[#allocation7 + $0x580] sm:$0xff]
    %v1411 = vld [vmem:[#allocation7 + $0x588] sm:$0xff]
    %v1412 = vld [vmem:[#allocation7 + $0x590] sm:$0xff]
    %v1413 = vld [vmem:[#allocation7 + $0x598] sm:$0xff]
    %v1414 = vld [vmem:[#allocation7 + $0x5a0] sm:$0xff]
    %v1415 = vld [vmem:[#allocation7 + $0x5a8] sm:$0xff]
    %v1416 = vld [vmem:[#allocation7 + $0x5b0] sm:$0xff]
    %v1417 = vld [vmem:[#allocation7 + $0x5b8] sm:$0xff]
    %v1418 = vld [vmem:[#allocation7 + $0x5c0] sm:$0xff]
    %v1419 = vld [vmem:[#allocation7 + $0x5c8] sm:$0xff]
    %v1420 = vld [vmem:[#allocation7 + $0x5d0] sm:$0xff]
    %v1421 = vld [vmem:[#allocation7 + $0x5d8] sm:$0xff]
    %v1422 = vld [vmem:[#allocation7 + $0x5e0] sm:$0xff]
    %v1423 = vld [vmem:[#allocation7 + $0x5e8] sm:$0xff]
    %v1424 = vld [vmem:[#allocation7 + $0x5f0] sm:$0xff]
    %v1425 = vld [vmem:[#allocation7 + $0x5f8] sm:$0xff]
    %v1426 = vld [vmem:[#allocation7 + $0x600] sm:$0xff]
    %v1427 = vld [vmem:[#allocation7 + $0x608] sm:$0xff]
    %v1428 = vld [vmem:[#allocation7 + $0x610] sm:$0xff]
    %v1429 = vld [vmem:[#allocation7 + $0x618] sm:$0xff]
    %v1430 = vld [vmem:[#allocation7 + $0x620] sm:$0xff]
    %v1431 = vld [vmem:[#allocation7 + $0x628] sm:$0xff]
    %v1432 = vld [vmem:[#allocation7 + $0x630] sm:$0xff]
    %v1433 = vld [vmem:[#allocation7 + $0x638] sm:$0xff]
    %v1434 = vld [vmem:[#allocation7 + $0x640] sm:$0xff]
    %v1435 = vld [vmem:[#allocation7 + $0x648] sm:$0xff]
    %v1436 = vld [vmem:[#allocation7 + $0x650] sm:$0xff]
    %v1437 = vld [vmem:[#allocation7 + $0x658] sm:$0xff]
    %v1438 = vld [vmem:[#allocation7 + $0x660] sm:$0xff]
    %v1439 = vld [vmem:[#allocation7 + $0x668] sm:$0xff]
    %v1440 = vld [vmem:[#allocation7 + $0x670] sm:$0xff]
    %v1441 = vld [vmem:[#allocation7 + $0x678] sm:$0xff]
    %v1442 = vld [vmem:[#allocation7 + $0x680] sm:$0xff]
    %v1443 = vld [vmem:[#allocation7 + $0x688] sm:$0xff]
    %v1444 = vld [vmem:[#allocation7 + $0x690] sm:$0xff]
    %v1445 = vld [vmem:[#allocation7 + $0x698] sm:$0xff]
    %v1446 = vld [vmem:[#allocation7 + $0x6a0] sm:$0xff]
    %v1447 = vld [vmem:[#allocation7 + $0x6a8] sm:$0xff]
    %v1448 = vld [vmem:[#allocation7 + $0x6b0] sm:$0xff]
    %v1449 = vld [vmem:[#allocation7 + $0x6b8] sm:$0xff]
    %v1450 = vld [vmem:[#allocation7 + $0x6c0] sm:$0xff]
    %v1451 = vld [vmem:[#allocation7 + $0x6c8] sm:$0xff]
    %v1452 = vld [vmem:[#allocation7 + $0x6d0] sm:$0xff]
    %v1453 = vld [vmem:[#allocation7 + $0x6d8] sm:$0xff]
    %v1454 = vld [vmem:[#allocation7 + $0x6e0] sm:$0xff]
    %v1455 = vld [vmem:[#allocation7 + $0x6e8] sm:$0xff]
    %v1456 = vld [vmem:[#allocation7 + $0x6f0] sm:$0xff]
    %v1457 = vld [vmem:[#allocation7 + $0x6f8] sm:$0xff]
    %v1458 = vld [vmem:[#allocation7 + $0x700] sm:$0xff]
    %v1459 = vld [vmem:[#allocation7 + $0x708] sm:$0xff]
    %v1460 = vld [vmem:[#allocation7 + $0x710] sm:$0xff]
    %v1461 = vld [vmem:[#allocation7 + $0x718] sm:$0xff]
    %v1462 = vld [vmem:[#allocation7 + $0x720] sm:$0xff]
    %v1463 = vld [vmem:[#allocation7 + $0x728] sm:$0xff]
    %v1464 = vld [vmem:[#allocation7 + $0x730] sm:$0xff]
    %v1465 = vld [vmem:[#allocation7 + $0x738] sm:$0xff]
    %v1466 = vld [vmem:[#allocation7 + $0x740] sm:$0xff]
    %v1467 = vld [vmem:[#allocation7 + $0x748] sm:$0xff]
    %v1468 = vld [vmem:[#allocation7 + $0x750] sm:$0xff]
    %v1469 = vld [vmem:[#allocation7 + $0x758] sm:$0xff]
    %v1470 = vld [vmem:[#allocation7 + $0x760] sm:$0xff]
    %v1471 = vld [vmem:[#allocation7 + $0x768] sm:$0xff]
    %v1472 = vld [vmem:[#allocation7 + $0x770] sm:$0xff]
    %v1473 = vld [vmem:[#allocation7 + $0x778] sm:$0xff]
    %v1474 = vld [vmem:[#allocation7 + $0x780] sm:$0xff]
    %v1475 = vld [vmem:[#allocation7 + $0x788] sm:$0xff]
    %v1476 = vld [vmem:[#allocation7 + $0x790] sm:$0xff]
    %v1477 = vld [vmem:[#allocation7 + $0x798] sm:$0xff]
    %v1478 = vld [vmem:[#allocation7 + $0x7a0] sm:$0xff]
    %v1479 = vld [vmem:[#allocation7 + $0x7a8] sm:$0xff]
    %v1480 = vld [vmem:[#allocation7 + $0x7b0] sm:$0xff]
    %v1481 = vld [vmem:[#allocation7 + $0x7b8] sm:$0xff]
    %v1482 = vld [vmem:[#allocation7 + $0x7c0] sm:$0xff]
    %v1483 = vld [vmem:[#allocation7 + $0x7c8] sm:$0xff]
    %v1484 = vld [vmem:[#allocation7 + $0x7d0] sm:$0xff]
    %v1485 = vld [vmem:[#allocation7 + $0x7d8] sm:$0xff]
    %v1486 = vld [vmem:[#allocation7 + $0x7e0] sm:$0xff]
    %v1487 = vld [vmem:[#allocation7 + $0x7e8] sm:$0xff]
    %v1488 = vld [vmem:[#allocation7 + $0x7f0] sm:$0xff]
    %v1489 = vld [vmem:[#allocation7 + $0x7f8] sm:$0xff]
    %v1490 = vld [vmem:[#allocation7 + $0x800] sm:$0xff]
    %v1491 = vld [vmem:[#allocation7 + $0x808] sm:$0xff]
    %v1492 = vld [vmem:[#allocation7 + $0x810] sm:$0xff]
    %v1493 = vld [vmem:[#allocation7 + $0x818] sm:$0xff]
    %v1494 = vld [vmem:[#allocation7 + $0x820] sm:$0xff]
    %v1495 = vld [vmem:[#allocation7 + $0x828] sm:$0xff]
    %v1496 = vld [vmem:[#allocation7 + $0x830] sm:$0xff]
    %v1497 = vld [vmem:[#allocation7 + $0x838] sm:$0xff]
    %v1498 = vld [vmem:[#allocation7 + $0x840] sm:$0xff]
    %v1499 = vld [vmem:[#allocation7 + $0x848] sm:$0xff]
    %v1500 = vld [vmem:[#allocation7 + $0x850] sm:$0xff]
    %v1501 = vld [vmem:[#allocation7 + $0x858] sm:$0xff]
    %v1502 = vld [vmem:[#allocation7 + $0x860] sm:$0xff]
    %v1503 = vld [vmem:[#allocation7 + $0x868] sm:$0xff]
    %v1504 = vld [vmem:[#allocation7 + $0x870] sm:$0xff]
    %v1505 = vld [vmem:[#allocation7 + $0x878] sm:$0xff]
    %v1506 = vld [vmem:[#allocation7 + $0x880] sm:$0xff]
    %v1507 = vld [vmem:[#allocation7 + $0x888] sm:$0xff]
    %v1508 = vld [vmem:[#allocation7 + $0x890] sm:$0xff]
    %v1509 = vld [vmem:[#allocation7 + $0x898] sm:$0xff]
    %v1510 = vld [vmem:[#allocation7 + $0x8a0] sm:$0xff]
    %v1511 = vld [vmem:[#allocation7 + $0x8a8] sm:$0xff]
    %v1512 = vld [vmem:[#allocation7 + $0x8b0] sm:$0xff]
    %v1513 = vld [vmem:[#allocation7 + $0x8b8] sm:$0xff]
    %v1514 = vld [vmem:[#allocation7 + $0x8c0] sm:$0xff]
    %v1515 = vld [vmem:[#allocation7 + $0x8c8] sm:$0xff]
    %v1516 = vld [vmem:[#allocation7 + $0x8d0] sm:$0xff]
    %v1517 = vld [vmem:[#allocation7 + $0x8d8] sm:$0xff]
    %v1518 = vld [vmem:[#allocation7 + $0x8e0] sm:$0xff]
    %v1519 = vld [vmem:[#allocation7 + $0x8e8] sm:$0xff]
    %v1520 = vld [vmem:[#allocation7 + $0x8f0] sm:$0xff]
    %v1521 = vld [vmem:[#allocation7 + $0x8f8] sm:$0xff]
    %v1522 = vpack.c.bf16 %v1228, %v1228
    %v1523 = vpack.c.bf16 %v1229, %v1229
    %v1524 = vpack.c.bf16 %v1230, %v1230
    %v1525 = vpack.c.bf16 %v1231, %v1231
    %v1526 = vpack.c.bf16 %v1232, %v1232
    %v1527 = vpack.c.bf16 %v1233, %v1233
    %v1528 = vld [vmem:[#allocation8] sm:$0x3f]
    %v1530 = vperm.slane %v1528, 0
    %v1531 = vperm.slane %v1528, 1
    %v1532 = vperm.slane %v1528, 2
    %v1533 = vperm.slane %v1528, 3
    %v1534 = vperm.slane %v1528, 4
    %v1535 = vperm.slane %v1528, 5
    %v1830 = vunpack.c.l.b16 %v1234
    %v1831 = vunpack.c.h.b16 %v1234
    %v1832 = vunpack.c.l.b16 %v1235
    %v1833 = vunpack.c.h.b16 %v1235
    %v1834 = vunpack.c.l.b16 %v1236
    %v1835 = vunpack.c.h.b16 %v1236
    %v1836 = vunpack.c.l.b16 %v1237
    %v1837 = vunpack.c.h.b16 %v1237
    %v1838 = vunpack.c.l.b16 %v1238
    %v1839 = vunpack.c.h.b16 %v1238
    %v1840 = vunpack.c.l.b16 %v1239
    %v1841 = vunpack.c.h.b16 %v1239
    %v1842 = vunpack.c.l.b16 %v1240
    %v1843 = vunpack.c.h.b16 %v1240
    %v1844 = vunpack.c.l.b16 %v1241
    %v1845 = vunpack.c.h.b16 %v1241
    %v1846 = vunpack.c.l.b16 %v1242
    %v1847 = vunpack.c.h.b16 %v1242
    %v1848 = vunpack.c.l.b16 %v1243
    %v1849 = vunpack.c.h.b16 %v1243
    %v1850 = vunpack.c.l.b16 %v1244
    %v1851 = vunpack.c.h.b16 %v1244
    %v1852 = vunpack.c.l.b16 %v1245
    %v1853 = vunpack.c.h.b16 %v1245
    %v1854 = vunpack.c.l.b16 %v1246
    %v1855 = vunpack.c.h.b16 %v1246
    %v1856 = vunpack.c.l.b16 %v1247
    %v1857 = vunpack.c.h.b16 %v1247
    %v1858 = vunpack.c.l.b16 %v1248
    %v1859 = vunpack.c.h.b16 %v1248
    %v1860 = vunpack.c.l.b16 %v1249
    %v1861 = vunpack.c.h.b16 %v1249
    %v1862 = vunpack.c.l.b16 %v1250
    %v1863 = vunpack.c.h.b16 %v1250
    %v1864 = vunpack.c.l.b16 %v1251
    %v1865 = vunpack.c.h.b16 %v1251
    %v1866 = vunpack.c.l.b16 %v1252
    %v1867 = vunpack.c.h.b16 %v1252
    %v1868 = vunpack.c.l.b16 %v1253
    %v1869 = vunpack.c.h.b16 %v1253
    %v1870 = vunpack.c.l.b16 %v1254
    %v1871 = vunpack.c.h.b16 %v1254
    %v1872 = vunpack.c.l.b16 %v1255
    %v1873 = vunpack.c.h.b16 %v1255
    %v1874 = vunpack.c.l.b16 %v1256
    %v1875 = vunpack.c.h.b16 %v1256
    %v1876 = vunpack.c.l.b16 %v1257
    %v1877 = vunpack.c.h.b16 %v1257
    %v1878 = vunpack.c.l.b16 %v1258
    %v1879 = vunpack.c.h.b16 %v1258
    %v1880 = vunpack.c.l.b16 %v1259
    %v1881 = vunpack.c.h.b16 %v1259
    %v1882 = vunpack.c.l.b16 %v1260
    %v1883 = vunpack.c.h.b16 %v1260
    %v1884 = vunpack.c.l.b16 %v1261
    %v1885 = vunpack.c.h.b16 %v1261
    %v1886 = vunpack.c.l.b16 %v1262
    %v1887 = vunpack.c.h.b16 %v1262
    %v1888 = vunpack.c.l.b16 %v1263
    %v1889 = vunpack.c.h.b16 %v1263
    %v1890 = vunpack.c.l.b16 %v1264
    %v1891 = vunpack.c.h.b16 %v1264
    %v1892 = vunpack.c.l.b16 %v1265
    %v1893 = vunpack.c.h.b16 %v1265
    %v1894 = vunpack.c.l.b16 %v1266
    %v1895 = vunpack.c.h.b16 %v1266
    %v1896 = vunpack.c.l.b16 %v1267
    %v1897 = vunpack.c.h.b16 %v1267
    %v1898 = vunpack.c.l.b16 %v1268
    %v1899 = vunpack.c.h.b16 %v1268
    %v1900 = vunpack.c.l.b16 %v1269
    %v1901 = vunpack.c.h.b16 %v1269
    %v1902 = vunpack.c.l.b16 %v1270
    %v1903 = vunpack.c.h.b16 %v1270
    %v1904 = vunpack.c.l.b16 %v1271
    %v1905 = vunpack.c.h.b16 %v1271
    %v1906 = vunpack.c.l.b16 %v1272
    %v1907 = vunpack.c.h.b16 %v1272
    %v1908 = vunpack.c.l.b16 %v1273
    %v1909 = vunpack.c.h.b16 %v1273
    %v1910 = vunpack.c.l.b16 %v1274
    %v1911 = vunpack.c.h.b16 %v1274
    %v1912 = vunpack.c.l.b16 %v1275
    %v1913 = vunpack.c.h.b16 %v1275
    %v1914 = vunpack.c.l.b16 %v1276
    %v1915 = vunpack.c.h.b16 %v1276
    %v1916 = vunpack.c.l.b16 %v1277
    %v1917 = vunpack.c.h.b16 %v1277
    %v1918 = vunpack.c.l.b16 %v1278
    %v1919 = vunpack.c.h.b16 %v1278
    %v1920 = vunpack.c.l.b16 %v1279
    %v1921 = vunpack.c.h.b16 %v1279
    %v1922 = vunpack.c.l.b16 %v1280
    %v1923 = vunpack.c.h.b16 %v1280
    %v1924 = vunpack.c.l.b16 %v1281
    %v1925 = vunpack.c.h.b16 %v1281
    %v1926 = vunpack.c.l.b16 %v1282
    %v1927 = vunpack.c.h.b16 %v1282
    %v1928 = vunpack.c.l.b16 %v1283
    %v1929 = vunpack.c.h.b16 %v1283
    %v1930 = vunpack.c.l.b16 %v1284
    %v1931 = vunpack.c.h.b16 %v1284
    %v1932 = vunpack.c.l.b16 %v1285
    %v1933 = vunpack.c.h.b16 %v1285
    %v1934 = vunpack.c.l.b16 %v1286
    %v1935 = vunpack.c.h.b16 %v1286
    %v1936 = vunpack.c.l.b16 %v1287
    %v1937 = vunpack.c.h.b16 %v1287
    %v1938 = vunpack.c.l.b16 %v1288
    %v1939 = vunpack.c.h.b16 %v1288
    %v1940 = vunpack.c.l.b16 %v1289
    %v1941 = vunpack.c.h.b16 %v1289
    %v1942 = vunpack.c.l.b16 %v1290
    %v1943 = vunpack.c.h.b16 %v1290
    %v1944 = vunpack.c.l.b16 %v1291
    %v1945 = vunpack.c.h.b16 %v1291
    %v1946 = vunpack.c.l.b16 %v1292
    %v1947 = vunpack.c.h.b16 %v1292
    %v1948 = vunpack.c.l.b16 %v1293
    %v1949 = vunpack.c.h.b16 %v1293
    %v1950 = vunpack.c.l.b16 %v1294
    %v1951 = vunpack.c.h.b16 %v1294
    %v1952 = vunpack.c.l.b16 %v1295
    %v1953 = vunpack.c.h.b16 %v1295
    %v1954 = vunpack.c.l.b16 %v1296
    %v1955 = vunpack.c.h.b16 %v1296
    %v1956 = vunpack.c.l.b16 %v1297
    %v1957 = vunpack.c.h.b16 %v1297
    %v1958 = vunpack.c.l.b16 %v1298
    %v1959 = vunpack.c.h.b16 %v1298
    %v1960 = vunpack.c.l.b16 %v1299
    %v1961 = vunpack.c.h.b16 %v1299
    %v1962 = vunpack.c.l.b16 %v1300
    %v1963 = vunpack.c.h.b16 %v1300
    %v1964 = vunpack.c.l.b16 %v1301
    %v1965 = vunpack.c.h.b16 %v1301
    %v1966 = vunpack.c.l.b16 %v1302
    %v1967 = vunpack.c.h.b16 %v1302
    %v1968 = vunpack.c.l.b16 %v1303
    %v1969 = vunpack.c.h.b16 %v1303
    %v1970 = vunpack.c.l.b16 %v1304
    %v1971 = vunpack.c.h.b16 %v1304
    %v1972 = vunpack.c.l.b16 %v1305
    %v1973 = vunpack.c.h.b16 %v1305
    %v1974 = vunpack.c.l.b16 %v1306
    %v1975 = vunpack.c.h.b16 %v1306
    %v1976 = vunpack.c.l.b16 %v1307
    %v1977 = vunpack.c.h.b16 %v1307
    %v1978 = vunpack.c.l.b16 %v1308
    %v1979 = vunpack.c.h.b16 %v1308
    %v1980 = vunpack.c.l.b16 %v1309
    %v1981 = vunpack.c.h.b16 %v1309
    %v1982 = vunpack.c.l.b16 %v1310
    %v1983 = vunpack.c.h.b16 %v1310
    %v1984 = vunpack.c.l.b16 %v1311
    %v1985 = vunpack.c.h.b16 %v1311
    %v1986 = vunpack.c.l.b16 %v1312
    %v1987 = vunpack.c.h.b16 %v1312
    %v1988 = vunpack.c.l.b16 %v1313
    %v1989 = vunpack.c.h.b16 %v1313
    %v1990 = vunpack.c.l.b16 %v1314
    %v1991 = vunpack.c.h.b16 %v1314
    %v1992 = vunpack.c.l.b16 %v1315
    %v1993 = vunpack.c.h.b16 %v1315
    %v1994 = vunpack.c.l.b16 %v1316
    %v1995 = vunpack.c.h.b16 %v1316
    %v1996 = vunpack.c.l.b16 %v1317
    %v1997 = vunpack.c.h.b16 %v1317
    %v1998 = vunpack.c.l.b16 %v1318
    %v1999 = vunpack.c.h.b16 %v1318
    %v2000 = vunpack.c.l.b16 %v1319
    %v2001 = vunpack.c.h.b16 %v1319
    %v2002 = vunpack.c.l.b16 %v1320
    %v2003 = vunpack.c.h.b16 %v1320
    %v2004 = vunpack.c.l.b16 %v1321
    %v2005 = vunpack.c.h.b16 %v1321
    %v2006 = vunpack.c.l.b16 %v1322
    %v2007 = vunpack.c.h.b16 %v1322
    %v2008 = vunpack.c.l.b16 %v1323
    %v2009 = vunpack.c.h.b16 %v1323
    %v2010 = vunpack.c.l.b16 %v1324
    %v2011 = vunpack.c.h.b16 %v1324
    %v2012 = vunpack.c.l.b16 %v1325
    %v2013 = vunpack.c.h.b16 %v1325
    %v2014 = vunpack.c.l.b16 %v1326
    %v2015 = vunpack.c.h.b16 %v1326
    %v2016 = vunpack.c.l.b16 %v1327
    %v2017 = vunpack.c.h.b16 %v1327
    %v2018 = vunpack.c.l.b16 %v1328
    %v2019 = vunpack.c.h.b16 %v1328
    %v2020 = vunpack.c.l.b16 %v1329
    %v2021 = vunpack.c.h.b16 %v1329
    %v2022 = vunpack.c.l.b16 %v1330
    %v2023 = vunpack.c.h.b16 %v1330
    %v2024 = vunpack.c.l.b16 %v1331
    %v2025 = vunpack.c.h.b16 %v1331
    %v2026 = vunpack.c.l.b16 %v1332
    %v2027 = vunpack.c.h.b16 %v1332
    %v2028 = vunpack.c.l.b16 %v1333
    %v2029 = vunpack.c.h.b16 %v1333
    %v2030 = vunpack.c.l.b16 %v1334
    %v2031 = vunpack.c.h.b16 %v1334
    %v2032 = vunpack.c.l.b16 %v1335
    %v2033 = vunpack.c.h.b16 %v1335
    %v2034 = vunpack.c.l.b16 %v1336
    %v2035 = vunpack.c.h.b16 %v1336
    %v2036 = vunpack.c.l.b16 %v1337
    %v2037 = vunpack.c.h.b16 %v1337
    %v2038 = vunpack.c.l.b16 %v1338
    %v2039 = vunpack.c.h.b16 %v1338
    %v2040 = vunpack.c.l.b16 %v1339
    %v2041 = vunpack.c.h.b16 %v1339
    %v2042 = vunpack.c.l.b16 %v1340
    %v2043 = vunpack.c.h.b16 %v1340
    %v2044 = vunpack.c.l.b16 %v1341
    %v2045 = vunpack.c.h.b16 %v1341
    %v2046 = vunpack.c.l.b16 %v1342
    %v2047 = vunpack.c.h.b16 %v1342
    %v2048 = vunpack.c.l.b16 %v1343
    %v2049 = vunpack.c.h.b16 %v1343
    %v2050 = vunpack.c.l.b16 %v1344
    %v2051 = vunpack.c.h.b16 %v1344
    %v2052 = vunpack.c.l.b16 %v1345
    %v2053 = vunpack.c.h.b16 %v1345
    %v2054 = vunpack.c.l.b16 %v1346
    %v2055 = vunpack.c.h.b16 %v1346
    %v2056 = vunpack.c.l.b16 %v1347
    %v2057 = vunpack.c.h.b16 %v1347
    %v2058 = vunpack.c.l.b16 %v1348
    %v2059 = vunpack.c.h.b16 %v1348
    %v2060 = vunpack.c.l.b16 %v1349
    %v2061 = vunpack.c.h.b16 %v1349
    %v2062 = vunpack.c.l.b16 %v1350
    %v2063 = vunpack.c.h.b16 %v1350
    %v2064 = vunpack.c.l.b16 %v1351
    %v2065 = vunpack.c.h.b16 %v1351
    %v2066 = vunpack.c.l.b16 %v1352
    %v2067 = vunpack.c.h.b16 %v1352
    %v2068 = vunpack.c.l.b16 %v1353
    %v2069 = vunpack.c.h.b16 %v1353
    %v2070 = vunpack.c.l.b16 %v1354
    %v2071 = vunpack.c.h.b16 %v1354
    %v2072 = vunpack.c.l.b16 %v1355
    %v2073 = vunpack.c.h.b16 %v1355
    %v2074 = vunpack.c.l.b16 %v1356
    %v2075 = vunpack.c.h.b16 %v1356
    %v2076 = vunpack.c.l.b16 %v1357
    %v2077 = vunpack.c.h.b16 %v1357
    %v2078 = vunpack.c.l.b16 %v1358
    %v2079 = vunpack.c.h.b16 %v1358
    %v2080 = vunpack.c.l.b16 %v1359
    %v2081 = vunpack.c.h.b16 %v1359
    %v2082 = vunpack.c.l.b16 %v1360
    %v2083 = vunpack.c.h.b16 %v1360
    %v2084 = vunpack.c.l.b16 %v1361
    %v2085 = vunpack.c.h.b16 %v1361
    %v2086 = vunpack.c.l.b16 %v1362
    %v2087 = vunpack.c.h.b16 %v1362
    %v2088 = vunpack.c.l.b16 %v1363
    %v2089 = vunpack.c.h.b16 %v1363
    %v2090 = vunpack.c.l.b16 %v1364
    %v2091 = vunpack.c.h.b16 %v1364
    %v2092 = vunpack.c.l.b16 %v1365
    %v2093 = vunpack.c.h.b16 %v1365
    %v2094 = vunpack.c.l.b16 %v1366
    %v2095 = vunpack.c.h.b16 %v1366
    %v2096 = vunpack.c.l.b16 %v1367
    %v2097 = vunpack.c.h.b16 %v1367
    %v2098 = vunpack.c.l.b16 %v1368
    %v2099 = vunpack.c.h.b16 %v1368
    %v2100 = vunpack.c.l.b16 %v1369
    %v2101 = vunpack.c.h.b16 %v1369
    %v2102 = vunpack.c.l.b16 %v1370
    %v2103 = vunpack.c.h.b16 %v1370
    %v2104 = vunpack.c.l.b16 %v1371
    %v2105 = vunpack.c.h.b16 %v1371
    %v2106 = vunpack.c.l.b16 %v1372
    %v2107 = vunpack.c.h.b16 %v1372
    %v2108 = vunpack.c.l.b16 %v1373
    %v2109 = vunpack.c.h.b16 %v1373
    %v2110 = vunpack.c.l.b16 %v1374
    %v2111 = vunpack.c.h.b16 %v1374
    %v2112 = vunpack.c.l.b16 %v1375
    %v2113 = vunpack.c.h.b16 %v1375
    %v2114 = vunpack.c.l.b16 %v1376
    %v2115 = vunpack.c.h.b16 %v1376
    %v2116 = vunpack.c.l.b16 %v1377
    %v2117 = vunpack.c.h.b16 %v1377
    %v2118 = vunpack.c.l.b16 %v1378
    %v2119 = vunpack.c.h.b16 %v1378
    %v2120 = vunpack.c.l.b16 %v1379
    %v2121 = vunpack.c.h.b16 %v1379
    %v2122 = vunpack.c.l.b16 %v1380
    %v2123 = vunpack.c.h.b16 %v1380
    %v2124 = vunpack.c.l.b16 %v1381
    %v2125 = vunpack.c.h.b16 %v1381
    %v2126 = vunpack.c.l.b16 %v1382
    %v2127 = vunpack.c.h.b16 %v1382
    %v2128 = vunpack.c.l.b16 %v1383
    %v2129 = vunpack.c.h.b16 %v1383
    %v2130 = vunpack.c.l.b16 %v1384
    %v2131 = vunpack.c.h.b16 %v1384
    %v2132 = vunpack.c.l.b16 %v1385
    %v2133 = vunpack.c.h.b16 %v1385
    %v2134 = vunpack.c.l.b16 %v1386
    %v2135 = vunpack.c.h.b16 %v1386
    %v2136 = vunpack.c.l.b16 %v1387
    %v2137 = vunpack.c.h.b16 %v1387
    %v2138 = vunpack.c.l.b16 %v1388
    %v2139 = vunpack.c.h.b16 %v1388
    %v2140 = vunpack.c.l.b16 %v1389
    %v2141 = vunpack.c.h.b16 %v1389
    %v2142 = vunpack.c.l.b16 %v1390
    %v2143 = vunpack.c.h.b16 %v1390
    %v2144 = vunpack.c.l.b16 %v1391
    %v2145 = vunpack.c.h.b16 %v1391
    %v2146 = vunpack.c.l.b16 %v1392
    %v2147 = vunpack.c.h.b16 %v1392
    %v2148 = vunpack.c.l.b16 %v1393
    %v2149 = vunpack.c.h.b16 %v1393
    %v2150 = vunpack.c.l.b16 %v1394
    %v2151 = vunpack.c.h.b16 %v1394
    %v2152 = vunpack.c.l.b16 %v1395
    %v2153 = vunpack.c.h.b16 %v1395
    %v2154 = vunpack.c.l.b16 %v1396
    %v2155 = vunpack.c.h.b16 %v1396
    %v2156 = vunpack.c.l.b16 %v1397
    %v2157 = vunpack.c.h.b16 %v1397
    %v2158 = vunpack.c.l.b16 %v1398
    %v2159 = vunpack.c.h.b16 %v1398
    %v2160 = vunpack.c.l.b16 %v1399
    %v2161 = vunpack.c.h.b16 %v1399
    %v2162 = vunpack.c.l.b16 %v1400
    %v2163 = vunpack.c.h.b16 %v1400
    %v2164 = vunpack.c.l.b16 %v1401
    %v2165 = vunpack.c.h.b16 %v1401
    %v2166 = vunpack.c.l.b16 %v1402
    %v2167 = vunpack.c.h.b16 %v1402
    %v2168 = vunpack.c.l.b16 %v1403
    %v2169 = vunpack.c.h.b16 %v1403
    %v2170 = vunpack.c.l.b16 %v1404
    %v2171 = vunpack.c.h.b16 %v1404
    %v2172 = vunpack.c.l.b16 %v1405
    %v2173 = vunpack.c.h.b16 %v1405
    %v2174 = vunpack.c.l.b16 %v1406
    %v2175 = vunpack.c.h.b16 %v1406
    %v2176 = vunpack.c.l.b16 %v1407
    %v2177 = vunpack.c.h.b16 %v1407
    %v2178 = vunpack.c.l.b16 %v1408
    %v2179 = vunpack.c.h.b16 %v1408
    %v2180 = vunpack.c.l.b16 %v1409
    %v2181 = vunpack.c.h.b16 %v1409
    %v2182 = vunpack.c.l.b16 %v1410
    %v2183 = vunpack.c.h.b16 %v1410
    %v2184 = vunpack.c.l.b16 %v1411
    %v2185 = vunpack.c.h.b16 %v1411
    %v2186 = vunpack.c.l.b16 %v1412
    %v2187 = vunpack.c.h.b16 %v1412
    %v2188 = vunpack.c.l.b16 %v1413
    %v2189 = vunpack.c.h.b16 %v1413
    %v2190 = vunpack.c.l.b16 %v1414
    %v2191 = vunpack.c.h.b16 %v1414
    %v2192 = vunpack.c.l.b16 %v1415
    %v2193 = vunpack.c.h.b16 %v1415
    %v2194 = vunpack.c.l.b16 %v1416
    %v2195 = vunpack.c.h.b16 %v1416
    %v2196 = vunpack.c.l.b16 %v1417
    %v2197 = vunpack.c.h.b16 %v1417
    %v2198 = vunpack.c.l.b16 %v1418
    %v2199 = vunpack.c.h.b16 %v1418
    %v2200 = vunpack.c.l.b16 %v1419
    %v2201 = vunpack.c.h.b16 %v1419
    %v2202 = vunpack.c.l.b16 %v1420
    %v2203 = vunpack.c.h.b16 %v1420
    %v2204 = vunpack.c.l.b16 %v1421
    %v2205 = vunpack.c.h.b16 %v1421
    %v2206 = vunpack.c.l.b16 %v1422
    %v2207 = vunpack.c.h.b16 %v1422
    %v2208 = vunpack.c.l.b16 %v1423
    %v2209 = vunpack.c.h.b16 %v1423
    %v2210 = vunpack.c.l.b16 %v1424
    %v2211 = vunpack.c.h.b16 %v1424
    %v2212 = vunpack.c.l.b16 %v1425
    %v2213 = vunpack.c.h.b16 %v1425
    %v2214 = vunpack.c.l.b16 %v1426
    %v2215 = vunpack.c.h.b16 %v1426
    %v2216 = vunpack.c.l.b16 %v1427
    %v2217 = vunpack.c.h.b16 %v1427
    %v2218 = vunpack.c.l.b16 %v1428
    %v2219 = vunpack.c.h.b16 %v1428
    %v2220 = vunpack.c.l.b16 %v1429
    %v2221 = vunpack.c.h.b16 %v1429
    %v2222 = vunpack.c.l.b16 %v1430
    %v2223 = vunpack.c.h.b16 %v1430
    %v2224 = vunpack.c.l.b16 %v1431
    %v2225 = vunpack.c.h.b16 %v1431
    %v2226 = vunpack.c.l.b16 %v1432
    %v2227 = vunpack.c.h.b16 %v1432
    %v2228 = vunpack.c.l.b16 %v1433
    %v2229 = vunpack.c.h.b16 %v1433
    %v2230 = vunpack.c.l.b16 %v1434
    %v2231 = vunpack.c.h.b16 %v1434
    %v2232 = vunpack.c.l.b16 %v1435
    %v2233 = vunpack.c.h.b16 %v1435
    %v2234 = vunpack.c.l.b16 %v1436
    %v2235 = vunpack.c.h.b16 %v1436
    %v2236 = vunpack.c.l.b16 %v1437
    %v2237 = vunpack.c.h.b16 %v1437
    %v2238 = vunpack.c.l.b16 %v1438
    %v2239 = vunpack.c.h.b16 %v1438
    %v2240 = vunpack.c.l.b16 %v1439
    %v2241 = vunpack.c.h.b16 %v1439
    %v2242 = vunpack.c.l.b16 %v1440
    %v2243 = vunpack.c.h.b16 %v1440
    %v2244 = vunpack.c.l.b16 %v1441
    %v2245 = vunpack.c.h.b16 %v1441
    %v2246 = vunpack.c.l.b16 %v1442
    %v2247 = vunpack.c.h.b16 %v1442
    %v2248 = vunpack.c.l.b16 %v1443
    %v2249 = vunpack.c.h.b16 %v1443
    %v2250 = vunpack.c.l.b16 %v1444
    %v2251 = vunpack.c.h.b16 %v1444
    %v2252 = vunpack.c.l.b16 %v1445
    %v2253 = vunpack.c.h.b16 %v1445
    %v2254 = vunpack.c.l.b16 %v1446
    %v2255 = vunpack.c.h.b16 %v1446
    %v2256 = vunpack.c.l.b16 %v1447
    %v2257 = vunpack.c.h.b16 %v1447
    %v2258 = vunpack.c.l.b16 %v1448
    %v2259 = vunpack.c.h.b16 %v1448
    %v2260 = vunpack.c.l.b16 %v1449
    %v2261 = vunpack.c.h.b16 %v1449
    %v2262 = vunpack.c.l.b16 %v1450
    %v2263 = vunpack.c.h.b16 %v1450
    %v2264 = vunpack.c.l.b16 %v1451
    %v2265 = vunpack.c.h.b16 %v1451
    %v2266 = vunpack.c.l.b16 %v1452
    %v2267 = vunpack.c.h.b16 %v1452
    %v2268 = vunpack.c.l.b16 %v1453
    %v2269 = vunpack.c.h.b16 %v1453
    %v2270 = vunpack.c.l.b16 %v1454
    %v2271 = vunpack.c.h.b16 %v1454
    %v2272 = vunpack.c.l.b16 %v1455
    %v2273 = vunpack.c.h.b16 %v1455
    %v2274 = vunpack.c.l.b16 %v1456
    %v2275 = vunpack.c.h.b16 %v1456
    %v2276 = vunpack.c.l.b16 %v1457
    %v2277 = vunpack.c.h.b16 %v1457
    %v2278 = vunpack.c.l.b16 %v1458
    %v2279 = vunpack.c.h.b16 %v1458
    %v2280 = vunpack.c.l.b16 %v1459
    %v2281 = vunpack.c.h.b16 %v1459
    %v2282 = vunpack.c.l.b16 %v1460
    %v2283 = vunpack.c.h.b16 %v1460
    %v2284 = vunpack.c.l.b16 %v1461
    %v2285 = vunpack.c.h.b16 %v1461
    %v2286 = vunpack.c.l.b16 %v1462
    %v2287 = vunpack.c.h.b16 %v1462
    %v2288 = vunpack.c.l.b16 %v1463
    %v2289 = vunpack.c.h.b16 %v1463
    %v2290 = vunpack.c.l.b16 %v1464
    %v2291 = vunpack.c.h.b16 %v1464
    %v2292 = vunpack.c.l.b16 %v1465
    %v2293 = vunpack.c.h.b16 %v1465
    %v2294 = vunpack.c.l.b16 %v1466
    %v2295 = vunpack.c.h.b16 %v1466
    %v2296 = vunpack.c.l.b16 %v1467
    %v2297 = vunpack.c.h.b16 %v1467
    %v2298 = vunpack.c.l.b16 %v1468
    %v2299 = vunpack.c.h.b16 %v1468
    %v2300 = vunpack.c.l.b16 %v1469
    %v2301 = vunpack.c.h.b16 %v1469
    %v2302 = vunpack.c.l.b16 %v1470
    %v2303 = vunpack.c.h.b16 %v1470
    %v2304 = vunpack.c.l.b16 %v1471
    %v2305 = vunpack.c.h.b16 %v1471
    %v2306 = vunpack.c.l.b16 %v1472
    %v2307 = vunpack.c.h.b16 %v1472
    %v2308 = vunpack.c.l.b16 %v1473
    %v2309 = vunpack.c.h.b16 %v1473
    %v2310 = vunpack.c.l.b16 %v1474
    %v2311 = vunpack.c.h.b16 %v1474
    %v2312 = vunpack.c.l.b16 %v1475
    %v2313 = vunpack.c.h.b16 %v1475
    %v2314 = vunpack.c.l.b16 %v1476
    %v2315 = vunpack.c.h.b16 %v1476
    %v2316 = vunpack.c.l.b16 %v1477
    %v2317 = vunpack.c.h.b16 %v1477
    %v2318 = vunpack.c.l.b16 %v1478
    %v2319 = vunpack.c.h.b16 %v1478
    %v2320 = vunpack.c.l.b16 %v1479
    %v2321 = vunpack.c.h.b16 %v1479
    %v2322 = vunpack.c.l.b16 %v1480
    %v2323 = vunpack.c.h.b16 %v1480
    %v2324 = vunpack.c.l.b16 %v1481
    %v2325 = vunpack.c.h.b16 %v1481
    %v2326 = vunpack.c.l.b16 %v1482
    %v2327 = vunpack.c.h.b16 %v1482
    %v2328 = vunpack.c.l.b16 %v1483
    %v2329 = vunpack.c.h.b16 %v1483
    %v2330 = vunpack.c.l.b16 %v1484
    %v2331 = vunpack.c.h.b16 %v1484
    %v2332 = vunpack.c.l.b16 %v1485
    %v2333 = vunpack.c.h.b16 %v1485
    %v2334 = vunpack.c.l.b16 %v1486
    %v2335 = vunpack.c.h.b16 %v1486
    %v2336 = vunpack.c.l.b16 %v1487
    %v2337 = vunpack.c.h.b16 %v1487
    %v2338 = vunpack.c.l.b16 %v1488
    %v2339 = vunpack.c.h.b16 %v1488
    %v2340 = vunpack.c.l.b16 %v1489
    %v2341 = vunpack.c.h.b16 %v1489
    %v2342 = vunpack.c.l.b16 %v1490
    %v2343 = vunpack.c.h.b16 %v1490
    %v2344 = vunpack.c.l.b16 %v1491
    %v2345 = vunpack.c.h.b16 %v1491
    %v2346 = vunpack.c.l.b16 %v1492
    %v2347 = vunpack.c.h.b16 %v1492
    %v2348 = vunpack.c.l.b16 %v1493
    %v2349 = vunpack.c.h.b16 %v1493
    %v2350 = vunpack.c.l.b16 %v1494
    %v2351 = vunpack.c.h.b16 %v1494
    %v2352 = vunpack.c.l.b16 %v1495
    %v2353 = vunpack.c.h.b16 %v1495
    %v2354 = vunpack.c.l.b16 %v1496
    %v2355 = vunpack.c.h.b16 %v1496
    %v2356 = vunpack.c.l.b16 %v1497
    %v2357 = vunpack.c.h.b16 %v1497
    %v2358 = vunpack.c.l.b16 %v1498
    %v2359 = vunpack.c.h.b16 %v1498
    %v2360 = vunpack.c.l.b16 %v1499
    %v2361 = vunpack.c.h.b16 %v1499
    %v2362 = vunpack.c.l.b16 %v1500
    %v2363 = vunpack.c.h.b16 %v1500
    %v2364 = vunpack.c.l.b16 %v1501
    %v2365 = vunpack.c.h.b16 %v1501
    %v2366 = vunpack.c.l.b16 %v1502
    %v2367 = vunpack.c.h.b16 %v1502
    %v2368 = vunpack.c.l.b16 %v1503
    %v2369 = vunpack.c.h.b16 %v1503
    %v2370 = vunpack.c.l.b16 %v1504
    %v2371 = vunpack.c.h.b16 %v1504
    %v2372 = vunpack.c.l.b16 %v1505
    %v2373 = vunpack.c.h.b16 %v1505
    %v2374 = vunpack.c.l.b16 %v1506
    %v2375 = vunpack.c.h.b16 %v1506
    %v2376 = vunpack.c.l.b16 %v1507
    %v2377 = vunpack.c.h.b16 %v1507
    %v2378 = vunpack.c.l.b16 %v1508
    %v2379 = vunpack.c.h.b16 %v1508
    %v2380 = vunpack.c.l.b16 %v1509
    %v2381 = vunpack.c.h.b16 %v1509
    %v2382 = vunpack.c.l.b16 %v1510
    %v2383 = vunpack.c.h.b16 %v1510
    %v2384 = vunpack.c.l.b16 %v1511
    %v2385 = vunpack.c.h.b16 %v1511
    %v2386 = vunpack.c.l.b16 %v1512
    %v2387 = vunpack.c.h.b16 %v1512
    %v2388 = vunpack.c.l.b16 %v1513
    %v2389 = vunpack.c.h.b16 %v1513
    %v2390 = vunpack.c.l.b16 %v1514
    %v2391 = vunpack.c.h.b16 %v1514
    %v2392 = vunpack.c.l.b16 %v1515
    %v2393 = vunpack.c.h.b16 %v1515
    %v2394 = vunpack.c.l.b16 %v1516
    %v2395 = vunpack.c.h.b16 %v1516
    %v2396 = vunpack.c.l.b16 %v1517
    %v2397 = vunpack.c.h.b16 %v1517
    %v2398 = vunpack.c.l.b16 %v1518
    %v2399 = vunpack.c.h.b16 %v1518
    %v2400 = vunpack.c.l.b16 %v1519
    %v2401 = vunpack.c.h.b16 %v1519
    %v2402 = vunpack.c.l.b16 %v1520
    %v2403 = vunpack.c.h.b16 %v1520
    %v2404 = vunpack.c.l.b16 %v1521
    %v2405 = vunpack.c.h.b16 %v1521
    %v2406 = vpack.c.b16 %v1836, %v1830
    %v2407 = vpack.c.b16 %v1837, %v1831
    %v2408 = vpack.c.b16 %v1838, %v1832
    %v2409 = vpack.c.b16 %v1839, %v1833
    %v2410 = vpack.c.b16 %v1840, %v1834
    %v2411 = vpack.c.b16 %v1841, %v1835
    %v2412 = vpack.c.b16 %v1848, %v1842
    %v2413 = vpack.c.b16 %v1849, %v1843
    %v2414 = vpack.c.b16 %v1850, %v1844
    %v2415 = vpack.c.b16 %v1851, %v1845
    %v2416 = vpack.c.b16 %v1852, %v1846
    %v2417 = vpack.c.b16 %v1853, %v1847
    %v2418 = vpack.c.b16 %v1860, %v1854
    %v2419 = vpack.c.b16 %v1861, %v1855
    %v2420 = vpack.c.b16 %v1862, %v1856
    %v2421 = vpack.c.b16 %v1863, %v1857
    %v2422 = vpack.c.b16 %v1864, %v1858
    %v2423 = vpack.c.b16 %v1865, %v1859
    %v2424 = vpack.c.b16 %v1872, %v1866
    %v2425 = vpack.c.b16 %v1873, %v1867
    %v2426 = vpack.c.b16 %v1874, %v1868
    %v2427 = vpack.c.b16 %v1875, %v1869
    %v2428 = vpack.c.b16 %v1876, %v1870
    %v2429 = vpack.c.b16 %v1877, %v1871
    %v2430 = vpack.c.b16 %v1884, %v1878
    %v2431 = vpack.c.b16 %v1885, %v1879
    %v2432 = vpack.c.b16 %v1886, %v1880
    %v2433 = vpack.c.b16 %v1887, %v1881
    %v2434 = vpack.c.b16 %v1888, %v1882
    %v2435 = vpack.c.b16 %v1889, %v1883
    %v2436 = vpack.c.b16 %v1896, %v1890
    %v2437 = vpack.c.b16 %v1897, %v1891
    %v2438 = vpack.c.b16 %v1898, %v1892
    %v2439 = vpack.c.b16 %v1899, %v1893
    %v2440 = vpack.c.b16 %v1900, %v1894
    %v2441 = vpack.c.b16 %v1901, %v1895
    %v2442 = vpack.c.b16 %v1908, %v1902
    %v2443 = vpack.c.b16 %v1909, %v1903
    %v2444 = vpack.c.b16 %v1910, %v1904
    %v2445 = vpack.c.b16 %v1911, %v1905
    %v2446 = vpack.c.b16 %v1912, %v1906
    %v2447 = vpack.c.b16 %v1913, %v1907
    %v2448 = vpack.c.b16 %v1920, %v1914
    %v2449 = vpack.c.b16 %v1921, %v1915
    %v2450 = vpack.c.b16 %v1922, %v1916
    %v2451 = vpack.c.b16 %v1923, %v1917
    %v2452 = vpack.c.b16 %v1924, %v1918
    %v2453 = vpack.c.b16 %v1925, %v1919
    %v2454 = vpack.c.b16 %v1932, %v1926
    %v2455 = vpack.c.b16 %v1933, %v1927
    %v2456 = vpack.c.b16 %v1934, %v1928
    %v2457 = vpack.c.b16 %v1935, %v1929
    %v2458 = vpack.c.b16 %v1936, %v1930
    %v2459 = vpack.c.b16 %v1937, %v1931
    %v2460 = vpack.c.b16 %v1944, %v1938
    %v2461 = vpack.c.b16 %v1945, %v1939
    %v2462 = vpack.c.b16 %v1946, %v1940
    %v2463 = vpack.c.b16 %v1947, %v1941
    %v2464 = vpack.c.b16 %v1948, %v1942
    %v2465 = vpack.c.b16 %v1949, %v1943
    %v2466 = vpack.c.b16 %v1956, %v1950
    %v2467 = vpack.c.b16 %v1957, %v1951
    %v2468 = vpack.c.b16 %v1958, %v1952
    %v2469 = vpack.c.b16 %v1959, %v1953
    %v2470 = vpack.c.b16 %v1960, %v1954
    %v2471 = vpack.c.b16 %v1961, %v1955
    %v2472 = vpack.c.b16 %v1968, %v1962
    %v2473 = vpack.c.b16 %v1969, %v1963
    %v2474 = vpack.c.b16 %v1970, %v1964
    %v2475 = vpack.c.b16 %v1971, %v1965
    %v2476 = vpack.c.b16 %v1972, %v1966
    %v2477 = vpack.c.b16 %v1973, %v1967
    %v2478 = vpack.c.b16 %v1980, %v1974
    %v2479 = vpack.c.b16 %v1981, %v1975
    %v2480 = vpack.c.b16 %v1982, %v1976
    %v2481 = vpack.c.b16 %v1983, %v1977
    %v2482 = vpack.c.b16 %v1984, %v1978
    %v2483 = vpack.c.b16 %v1985, %v1979
    %v2484 = vpack.c.b16 %v1992, %v1986
    %v2485 = vpack.c.b16 %v1993, %v1987
    %v2486 = vpack.c.b16 %v1994, %v1988
    %v2487 = vpack.c.b16 %v1995, %v1989
    %v2488 = vpack.c.b16 %v1996, %v1990
    %v2489 = vpack.c.b16 %v1997, %v1991
    %v2490 = vpack.c.b16 %v2004, %v1998
    %v2491 = vpack.c.b16 %v2005, %v1999
    %v2492 = vpack.c.b16 %v2006, %v2000
    %v2493 = vpack.c.b16 %v2007, %v2001
    %v2494 = vpack.c.b16 %v2008, %v2002
    %v2495 = vpack.c.b16 %v2009, %v2003
    %v2496 = vpack.c.b16 %v2016, %v2010
    %v2497 = vpack.c.b16 %v2017, %v2011
    %v2498 = vpack.c.b16 %v2018, %v2012
    %v2499 = vpack.c.b16 %v2019, %v2013
    %v2500 = vpack.c.b16 %v2020, %v2014
    %v2501 = vpack.c.b16 %v2021, %v2015
    %v2502 = vpack.c.b16 %v2028, %v2022
    %v2503 = vpack.c.b16 %v2029, %v2023
    %v2504 = vpack.c.b16 %v2030, %v2024
    %v2505 = vpack.c.b16 %v2031, %v2025
    %v2506 = vpack.c.b16 %v2032, %v2026
    %v2507 = vpack.c.b16 %v2033, %v2027
    %v2508 = vpack.c.b16 %v2040, %v2034
    %v2509 = vpack.c.b16 %v2041, %v2035
    %v2510 = vpack.c.b16 %v2042, %v2036
    %v2511 = vpack.c.b16 %v2043, %v2037
    %v2512 = vpack.c.b16 %v2044, %v2038
    %v2513 = vpack.c.b16 %v2045, %v2039
    %v2514 = vpack.c.b16 %v2052, %v2046
    %v2515 = vpack.c.b16 %v2053, %v2047
    %v2516 = vpack.c.b16 %v2054, %v2048
    %v2517 = vpack.c.b16 %v2055, %v2049
    %v2518 = vpack.c.b16 %v2056, %v2050
    %v2519 = vpack.c.b16 %v2057, %v2051
    %v2520 = vpack.c.b16 %v2064, %v2058
    %v2521 = vpack.c.b16 %v2065, %v2059
    %v2522 = vpack.c.b16 %v2066, %v2060
    %v2523 = vpack.c.b16 %v2067, %v2061
    %v2524 = vpack.c.b16 %v2068, %v2062
    %v2525 = vpack.c.b16 %v2069, %v2063
    %v2526 = vpack.c.b16 %v2076, %v2070
    %v2527 = vpack.c.b16 %v2077, %v2071
    %v2528 = vpack.c.b16 %v2078, %v2072
    %v2529 = vpack.c.b16 %v2079, %v2073
    %v2530 = vpack.c.b16 %v2080, %v2074
    %v2531 = vpack.c.b16 %v2081, %v2075
    %v2532 = vpack.c.b16 %v2088, %v2082
    %v2533 = vpack.c.b16 %v2089, %v2083
    %v2534 = vpack.c.b16 %v2090, %v2084
    %v2535 = vpack.c.b16 %v2091, %v2085
    %v2536 = vpack.c.b16 %v2092, %v2086
    %v2537 = vpack.c.b16 %v2093, %v2087
    %v2538 = vpack.c.b16 %v2100, %v2094
    %v2539 = vpack.c.b16 %v2101, %v2095
    %v2540 = vpack.c.b16 %v2102, %v2096
    %v2541 = vpack.c.b16 %v2103, %v2097
    %v2542 = vpack.c.b16 %v2104, %v2098
    %v2543 = vpack.c.b16 %v2105, %v2099
    %v2544 = vpack.c.b16 %v2112, %v2106
    %v2545 = vpack.c.b16 %v2113, %v2107
    %v2546 = vpack.c.b16 %v2114, %v2108
    %v2547 = vpack.c.b16 %v2115, %v2109
    %v2548 = vpack.c.b16 %v2116, %v2110
    %v2549 = vpack.c.b16 %v2117, %v2111
    %v2550 = vpack.c.b16 %v2124, %v2118
    %v2551 = vpack.c.b16 %v2125, %v2119
    %v2552 = vpack.c.b16 %v2126, %v2120
    %v2553 = vpack.c.b16 %v2127, %v2121
    %v2554 = vpack.c.b16 %v2128, %v2122
    %v2555 = vpack.c.b16 %v2129, %v2123
    %v2556 = vpack.c.b16 %v2136, %v2130
    %v2557 = vpack.c.b16 %v2137, %v2131
    %v2558 = vpack.c.b16 %v2138, %v2132
    %v2559 = vpack.c.b16 %v2139, %v2133
    %v2560 = vpack.c.b16 %v2140, %v2134
    %v2561 = vpack.c.b16 %v2141, %v2135
    %v2562 = vpack.c.b16 %v2148, %v2142
    %v2563 = vpack.c.b16 %v2149, %v2143
    %v2564 = vpack.c.b16 %v2150, %v2144
    %v2565 = vpack.c.b16 %v2151, %v2145
    %v2566 = vpack.c.b16 %v2152, %v2146
    %v2567 = vpack.c.b16 %v2153, %v2147
    %v2568 = vpack.c.b16 %v2160, %v2154
    %v2569 = vpack.c.b16 %v2161, %v2155
    %v2570 = vpack.c.b16 %v2162, %v2156
    %v2571 = vpack.c.b16 %v2163, %v2157
    %v2572 = vpack.c.b16 %v2164, %v2158
    %v2573 = vpack.c.b16 %v2165, %v2159
    %v2574 = vpack.c.b16 %v2172, %v2166
    %v2575 = vpack.c.b16 %v2173, %v2167
    %v2576 = vpack.c.b16 %v2174, %v2168
    %v2577 = vpack.c.b16 %v2175, %v2169
    %v2578 = vpack.c.b16 %v2176, %v2170
    %v2579 = vpack.c.b16 %v2177, %v2171
    %v2580 = vpack.c.b16 %v2184, %v2178
    %v2581 = vpack.c.b16 %v2185, %v2179
    %v2582 = vpack.c.b16 %v2186, %v2180
    %v2583 = vpack.c.b16 %v2187, %v2181
    %v2584 = vpack.c.b16 %v2188, %v2182
    %v2585 = vpack.c.b16 %v2189, %v2183
    %v2586 = vpack.c.b16 %v2196, %v2190
    %v2587 = vpack.c.b16 %v2197, %v2191
    %v2588 = vpack.c.b16 %v2198, %v2192
    %v2589 = vpack.c.b16 %v2199, %v2193
    %v2590 = vpack.c.b16 %v2200, %v2194
    %v2591 = vpack.c.b16 %v2201, %v2195
    %v2592 = vpack.c.b16 %v2208, %v2202
    %v2593 = vpack.c.b16 %v2209, %v2203
    %v2594 = vpack.c.b16 %v2210, %v2204
    %v2595 = vpack.c.b16 %v2211, %v2205
    %v2596 = vpack.c.b16 %v2212, %v2206
    %v2597 = vpack.c.b16 %v2213, %v2207
    %v2598 = vpack.c.b16 %v2220, %v2214
    %v2599 = vpack.c.b16 %v2221, %v2215
    %v2600 = vpack.c.b16 %v2222, %v2216
    %v2601 = vpack.c.b16 %v2223, %v2217
    %v2602 = vpack.c.b16 %v2224, %v2218
    %v2603 = vpack.c.b16 %v2225, %v2219
    %v2604 = vpack.c.b16 %v2232, %v2226
    %v2605 = vpack.c.b16 %v2233, %v2227
    %v2606 = vpack.c.b16 %v2234, %v2228
    %v2607 = vpack.c.b16 %v2235, %v2229
    %v2608 = vpack.c.b16 %v2236, %v2230
    %v2609 = vpack.c.b16 %v2237, %v2231
    %v2610 = vpack.c.b16 %v2244, %v2238
    %v2611 = vpack.c.b16 %v2245, %v2239
    %v2612 = vpack.c.b16 %v2246, %v2240
    %v2613 = vpack.c.b16 %v2247, %v2241
    %v2614 = vpack.c.b16 %v2248, %v2242
    %v2615 = vpack.c.b16 %v2249, %v2243
    %v2616 = vpack.c.b16 %v2256, %v2250
    %v2617 = vpack.c.b16 %v2257, %v2251
    %v2618 = vpack.c.b16 %v2258, %v2252
    %v2619 = vpack.c.b16 %v2259, %v2253
    %v2620 = vpack.c.b16 %v2260, %v2254
    %v2621 = vpack.c.b16 %v2261, %v2255
    %v2622 = vpack.c.b16 %v2268, %v2262
    %v2623 = vpack.c.b16 %v2269, %v2263
    %v2624 = vpack.c.b16 %v2270, %v2264
    %v2625 = vpack.c.b16 %v2271, %v2265
    %v2626 = vpack.c.b16 %v2272, %v2266
    %v2627 = vpack.c.b16 %v2273, %v2267
    %v2628 = vpack.c.b16 %v2280, %v2274
    %v2629 = vpack.c.b16 %v2281, %v2275
    %v2630 = vpack.c.b16 %v2282, %v2276
    %v2631 = vpack.c.b16 %v2283, %v2277
    %v2632 = vpack.c.b16 %v2284, %v2278
    %v2633 = vpack.c.b16 %v2285, %v2279
    %v2634 = vpack.c.b16 %v2292, %v2286
    %v2635 = vpack.c.b16 %v2293, %v2287
    %v2636 = vpack.c.b16 %v2294, %v2288
    %v2637 = vpack.c.b16 %v2295, %v2289
    %v2638 = vpack.c.b16 %v2296, %v2290
    %v2639 = vpack.c.b16 %v2297, %v2291
    %v2640 = vpack.c.b16 %v2304, %v2298
    %v2641 = vpack.c.b16 %v2305, %v2299
    %v2642 = vpack.c.b16 %v2306, %v2300
    %v2643 = vpack.c.b16 %v2307, %v2301
    %v2644 = vpack.c.b16 %v2308, %v2302
    %v2645 = vpack.c.b16 %v2309, %v2303
    %v2646 = vpack.c.b16 %v2316, %v2310
    %v2647 = vpack.c.b16 %v2317, %v2311
    %v2648 = vpack.c.b16 %v2318, %v2312
    %v2649 = vpack.c.b16 %v2319, %v2313
    %v2650 = vpack.c.b16 %v2320, %v2314
    %v2651 = vpack.c.b16 %v2321, %v2315
    %v2652 = vpack.c.b16 %v2328, %v2322
    %v2653 = vpack.c.b16 %v2329, %v2323
    %v2654 = vpack.c.b16 %v2330, %v2324
    %v2655 = vpack.c.b16 %v2331, %v2325
    %v2656 = vpack.c.b16 %v2332, %v2326
    %v2657 = vpack.c.b16 %v2333, %v2327
    %v2658 = vpack.c.b16 %v2340, %v2334
    %v2659 = vpack.c.b16 %v2341, %v2335
    %v2660 = vpack.c.b16 %v2342, %v2336
    %v2661 = vpack.c.b16 %v2343, %v2337
    %v2662 = vpack.c.b16 %v2344, %v2338
    %v2663 = vpack.c.b16 %v2345, %v2339
    %v2664 = vpack.c.b16 %v2352, %v2346
    %v2665 = vpack.c.b16 %v2353, %v2347
    %v2666 = vpack.c.b16 %v2354, %v2348
    %v2667 = vpack.c.b16 %v2355, %v2349
    %v2668 = vpack.c.b16 %v2356, %v2350
    %v2669 = vpack.c.b16 %v2357, %v2351
    %v2670 = vpack.c.b16 %v2364, %v2358
    %v2671 = vpack.c.b16 %v2365, %v2359
    %v2672 = vpack.c.b16 %v2366, %v2360
    %v2673 = vpack.c.b16 %v2367, %v2361
    %v2674 = vpack.c.b16 %v2368, %v2362
    %v2675 = vpack.c.b16 %v2369, %v2363
    %v2676 = vpack.c.b16 %v2376, %v2370
    %v2677 = vpack.c.b16 %v2377, %v2371
    %v2678 = vpack.c.b16 %v2378, %v2372
    %v2679 = vpack.c.b16 %v2379, %v2373
    %v2680 = vpack.c.b16 %v2380, %v2374
    %v2681 = vpack.c.b16 %v2381, %v2375
    %v2682 = vpack.c.b16 %v2388, %v2382
    %v2683 = vpack.c.b16 %v2389, %v2383
    %v2684 = vpack.c.b16 %v2390, %v2384
    %v2685 = vpack.c.b16 %v2391, %v2385
    %v2686 = vpack.c.b16 %v2392, %v2386
    %v2687 = vpack.c.b16 %v2393, %v2387
    %v2688 = vpack.c.b16 %v2400, %v2394
    %v2689 = vpack.c.b16 %v2401, %v2395
    %v2690 = vpack.c.b16 %v2402, %v2396
    %v2691 = vpack.c.b16 %v2403, %v2397
    %v2692 = vpack.c.b16 %v2404, %v2398
    %v2693 = vpack.c.b16 %v2405, %v2399
    %2982 = vmatpush.bf16.msra.mxu0 %v2448
    %2983 = vmatpush.bf16.msra.mxu0 %v2442
    %2984 = vmatpush.bf16.msra.mxu0 %v2436
    %2985 = vmatpush.bf16.msra.mxu0 %v2430
    %2986 = vmatpush.bf16.msra.mxu0 %v2424
    %2987 = vmatpush.bf16.msra.mxu0 %v2418
    %2988 = vmatpush.bf16.msra.mxu0 %v2412
    %2989 = vmatpush.bf16.msra.mxu0 %v2406
    %2990 = vmatmul.bf16.gmra.mxu0 %v1522
    %v2991 = vpop.f32.mrf.mxu0
    %v2992 = vadd.f32 %v1530, %v2991
    %v2993 = vpop.f32.mrf.mxu0
    %2994 = vdwg.mxu0
    %2995 = vmatpush.bf16.msra.mxu0 %v2496
    %2996 = vmatpush.bf16.msra.mxu0 %v2490
    %2997 = vmatpush.bf16.msra.mxu0 %v2484
    %2998 = vmatpush.bf16.msra.mxu0 %v2478
    %2999 = vmatpush.bf16.msra.mxu0 %v2472
    %3000 = vmatpush.bf16.msra.mxu0 %v2466
    %3001 = vmatpush.bf16.msra.mxu0 %v2460
    %3002 = vmatpush.bf16.msra.mxu0 %v2454
    %3003 = vmatmul.bf16.gmra.mxu0 %v1523
    %v3004 = vpop.f32.mrf.mxu0
    %v3005 = vadd.f32 %v2992, %v3004
    %v3006 = vpop.f32.mrf.mxu0
    %3007 = vdwg.mxu0
    %3008 = vmatpush.bf16.msra.mxu0 %v2544
    %3009 = vmatpush.bf16.msra.mxu0 %v2538
    %3010 = vmatpush.bf16.msra.mxu0 %v2532
    %3011 = vmatpush.bf16.msra.mxu0 %v2526
    %3012 = vmatpush.bf16.msra.mxu0 %v2520
    %3013 = vmatpush.bf16.msra.mxu0 %v2514
    %3014 = vmatpush.bf16.msra.mxu0 %v2508
    %3015 = vmatpush.bf16.msra.mxu0 %v2502
    %3016 = vmatmul.bf16.gmra.mxu0 %v1524
    %v3017 = vpop.f32.mrf.mxu0
    %v3018 = vadd.f32 %v3005, %v3017
    %v3019 = vpop.f32.mrf.mxu0
    %3020 = vdwg.mxu0
    %3021 = vmatpush.bf16.msra.mxu0 %v2592
    %3022 = vmatpush.bf16.msra.mxu0 %v2586
    %3023 = vmatpush.bf16.msra.mxu0 %v2580
    %3024 = vmatpush.bf16.msra.mxu0 %v2574
    %3025 = vmatpush.bf16.msra.mxu0 %v2568
    %3026 = vmatpush.bf16.msra.mxu0 %v2562
    %3027 = vmatpush.bf16.msra.mxu0 %v2556
    %3028 = vmatpush.bf16.msra.mxu0 %v2550
    %3029 = vmatmul.bf16.gmra.mxu0 %v1525
    %v3030 = vpop.f32.mrf.mxu0
    %v3031 = vadd.f32 %v3018, %v3030
    %v3032 = vpop.f32.mrf.mxu0
    %3033 = vdwg.mxu0
    %3034 = vmatpush.bf16.msra.mxu0 %v2640
    %3035 = vmatpush.bf16.msra.mxu0 %v2634
    %3036 = vmatpush.bf16.msra.mxu0 %v2628
    %3037 = vmatpush.bf16.msra.mxu0 %v2622
    %3038 = vmatpush.bf16.msra.mxu0 %v2616
    %3039 = vmatpush.bf16.msra.mxu0 %v2610
    %3040 = vmatpush.bf16.msra.mxu0 %v2604
    %3041 = vmatpush.bf16.msra.mxu0 %v2598
    %3042 = vmatmul.bf16.gmra.mxu0 %v1526
    %v3043 = vpop.f32.mrf.mxu0
    %v3044 = vadd.f32 %v3031, %v3043
    %v3045 = vpop.f32.mrf.mxu0
    %3046 = vdwg.mxu0
    %3047 = vmatpush.bf16.msra.mxu0 %v2688
    %3048 = vmatpush.bf16.msra.mxu0 %v2682
    %3049 = vmatpush.bf16.msra.mxu0 %v2676
    %3050 = vmatpush.bf16.msra.mxu0 %v2670
    %3051 = vmatpush.bf16.msra.mxu0 %v2664
    %3052 = vmatpush.bf16.msra.mxu0 %v2658
    %3053 = vmatpush.bf16.msra.mxu0 %v2652
    %3054 = vmatpush.bf16.msra.mxu0 %v2646
    %3055 = vmatmul.bf16.gmra.mxu0 %v1527
    %v3056 = vpop.f32.mrf.mxu0
    %v3057 = vadd.f32 %v3044, %v3056
    %v3058 = vpop.f32.mrf.mxu0
    %3059 = vdwg.mxu0
    %3060 = vmatpush.bf16.msra.mxu0 %v2449
    %3061 = vmatpush.bf16.msra.mxu0 %v2443
    %3062 = vmatpush.bf16.msra.mxu0 %v2437
    %3063 = vmatpush.bf16.msra.mxu0 %v2431
    %3064 = vmatpush.bf16.msra.mxu0 %v2425
    %3065 = vmatpush.bf16.msra.mxu0 %v2419
    %3066 = vmatpush.bf16.msra.mxu0 %v2413
    %3067 = vmatpush.bf16.msra.mxu0 %v2407
    %3068 = vmatmul.bf16.gmra.mxu0 %v1522
    %v3069 = vpop.f32.mrf.mxu0
    %v3070 = vadd.f32 %v1531, %v3069
    %v3071 = vpop.f32.mrf.mxu0
    %3072 = vdwg.mxu0
    %3073 = vmatpush.bf16.msra.mxu0 %v2497
    %3074 = vmatpush.bf16.msra.mxu0 %v2491
    %3075 = vmatpush.bf16.msra.mxu0 %v2485
    %3076 = vmatpush.bf16.msra.mxu0 %v2479
    %3077 = vmatpush.bf16.msra.mxu0 %v2473
    %3078 = vmatpush.bf16.msra.mxu0 %v2467
    %3079 = vmatpush.bf16.msra.mxu0 %v2461
    %3080 = vmatpush.bf16.msra.mxu0 %v2455
    %3081 = vmatmul.bf16.gmra.mxu0 %v1523
    %v3082 = vpop.f32.mrf.mxu0
    %v3083 = vadd.f32 %v3070, %v3082
    %v3084 = vpop.f32.mrf.mxu0
    %3085 = vdwg.mxu0
    %3086 = vmatpush.bf16.msra.mxu0 %v2545
    %3087 = vmatpush.bf16.msra.mxu0 %v2539
    %3088 = vmatpush.bf16.msra.mxu0 %v2533
    %3089 = vmatpush.bf16.msra.mxu0 %v2527
    %3090 = vmatpush.bf16.msra.mxu0 %v2521
    %3091 = vmatpush.bf16.msra.mxu0 %v2515
    %3092 = vmatpush.bf16.msra.mxu0 %v2509
    %3093 = vmatpush.bf16.msra.mxu0 %v2503
    %3094 = vmatmul.bf16.gmra.mxu0 %v1524
    %v3095 = vpop.f32.mrf.mxu0
    %v3096 = vadd.f32 %v3083, %v3095
    %v3097 = vpop.f32.mrf.mxu0
    %3098 = vdwg.mxu0
    %3099 = vmatpush.bf16.msra.mxu0 %v2593
    %3100 = vmatpush.bf16.msra.mxu0 %v2587
    %3101 = vmatpush.bf16.msra.mxu0 %v2581
    %3102 = vmatpush.bf16.msra.mxu0 %v2575
    %3103 = vmatpush.bf16.msra.mxu0 %v2569
    %3104 = vmatpush.bf16.msra.mxu0 %v2563
    %3105 = vmatpush.bf16.msra.mxu0 %v2557
    %3106 = vmatpush.bf16.msra.mxu0 %v2551
    %3107 = vmatmul.bf16.gmra.mxu0 %v1525
    %v3108 = vpop.f32.mrf.mxu0
    %v3109 = vadd.f32 %v3096, %v3108
    %v3110 = vpop.f32.mrf.mxu0
    %3111 = vdwg.mxu0
    %3112 = vmatpush.bf16.msra.mxu0 %v2641
    %3113 = vmatpush.bf16.msra.mxu0 %v2635
    %3114 = vmatpush.bf16.msra.mxu0 %v2629
    %3115 = vmatpush.bf16.msra.mxu0 %v2623
    %3116 = vmatpush.bf16.msra.mxu0 %v2617
    %3117 = vmatpush.bf16.msra.mxu0 %v2611
    %3118 = vmatpush.bf16.msra.mxu0 %v2605
    %3119 = vmatpush.bf16.msra.mxu0 %v2599
    %3120 = vmatmul.bf16.gmra.mxu0 %v1526
    %v3121 = vpop.f32.mrf.mxu0
    %v3122 = vadd.f32 %v3109, %v3121
    %v3123 = vpop.f32.mrf.mxu0
    %3124 = vdwg.mxu0
    %3125 = vmatpush.bf16.msra.mxu0 %v2689
    %3126 = vmatpush.bf16.msra.mxu0 %v2683
    %3127 = vmatpush.bf16.msra.mxu0 %v2677
    %3128 = vmatpush.bf16.msra.mxu0 %v2671
    %3129 = vmatpush.bf16.msra.mxu0 %v2665
    %3130 = vmatpush.bf16.msra.mxu0 %v2659
    %3131 = vmatpush.bf16.msra.mxu0 %v2653
    %3132 = vmatpush.bf16.msra.mxu0 %v2647
    %3133 = vmatmul.bf16.gmra.mxu0 %v1527
    %v3134 = vpop.f32.mrf.mxu0
    %v3135 = vadd.f32 %v3122, %v3134
    %v3136 = vpop.f32.mrf.mxu0
    %3137 = vdwg.mxu0
    %3138 = vmatpush.bf16.msra.mxu0 %v2450
    %3139 = vmatpush.bf16.msra.mxu0 %v2444
    %3140 = vmatpush.bf16.msra.mxu0 %v2438
    %3141 = vmatpush.bf16.msra.mxu0 %v2432
    %3142 = vmatpush.bf16.msra.mxu0 %v2426
    %3143 = vmatpush.bf16.msra.mxu0 %v2420
    %3144 = vmatpush.bf16.msra.mxu0 %v2414
    %3145 = vmatpush.bf16.msra.mxu0 %v2408
    %3146 = vmatmul.bf16.gmra.mxu0 %v1522
    %v3147 = vpop.f32.mrf.mxu0
    %v3148 = vadd.f32 %v1532, %v3147
    %v3149 = vpop.f32.mrf.mxu0
    %3150 = vdwg.mxu0
    %3151 = vmatpush.bf16.msra.mxu0 %v2498
    %3152 = vmatpush.bf16.msra.mxu0 %v2492
    %3153 = vmatpush.bf16.msra.mxu0 %v2486
    %3154 = vmatpush.bf16.msra.mxu0 %v2480
    %3155 = vmatpush.bf16.msra.mxu0 %v2474
    %3156 = vmatpush.bf16.msra.mxu0 %v2468
    %3157 = vmatpush.bf16.msra.mxu0 %v2462
    %3158 = vmatpush.bf16.msra.mxu0 %v2456
    %3159 = vmatmul.bf16.gmra.mxu0 %v1523
    %v3160 = vpop.f32.mrf.mxu0
    %v3161 = vadd.f32 %v3148, %v3160
    %v3162 = vpop.f32.mrf.mxu0
    %3163 = vdwg.mxu0
    %3164 = vmatpush.bf16.msra.mxu0 %v2546
    %3165 = vmatpush.bf16.msra.mxu0 %v2540
    %3166 = vmatpush.bf16.msra.mxu0 %v2534
    %3167 = vmatpush.bf16.msra.mxu0 %v2528
    %3168 = vmatpush.bf16.msra.mxu0 %v2522
    %3169 = vmatpush.bf16.msra.mxu0 %v2516
    %3170 = vmatpush.bf16.msra.mxu0 %v2510
    %3171 = vmatpush.bf16.msra.mxu0 %v2504
    %3172 = vmatmul.bf16.gmra.mxu0 %v1524
    %v3173 = vpop.f32.mrf.mxu0
    %v3174 = vadd.f32 %v3161, %v3173
    %v3175 = vpop.f32.mrf.mxu0
    %3176 = vdwg.mxu0
    %3177 = vmatpush.bf16.msra.mxu0 %v2594
    %3178 = vmatpush.bf16.msra.mxu0 %v2588
    %3179 = vmatpush.bf16.msra.mxu0 %v2582
    %3180 = vmatpush.bf16.msra.mxu0 %v2576
    %3181 = vmatpush.bf16.msra.mxu0 %v2570
    %3182 = vmatpush.bf16.msra.mxu0 %v2564
    %3183 = vmatpush.bf16.msra.mxu0 %v2558
    %3184 = vmatpush.bf16.msra.mxu0 %v2552
    %3185 = vmatmul.bf16.gmra.mxu0 %v1525
    %v3186 = vpop.f32.mrf.mxu0
    %v3187 = vadd.f32 %v3174, %v3186
    %v3188 = vpop.f32.mrf.mxu0
    %3189 = vdwg.mxu0
    %3190 = vmatpush.bf16.msra.mxu0 %v2642
    %3191 = vmatpush.bf16.msra.mxu0 %v2636
    %3192 = vmatpush.bf16.msra.mxu0 %v2630
    %3193 = vmatpush.bf16.msra.mxu0 %v2624
    %3194 = vmatpush.bf16.msra.mxu0 %v2618
    %3195 = vmatpush.bf16.msra.mxu0 %v2612
    %3196 = vmatpush.bf16.msra.mxu0 %v2606
    %3197 = vmatpush.bf16.msra.mxu0 %v2600
    %3198 = vmatmul.bf16.gmra.mxu0 %v1526
    %v3199 = vpop.f32.mrf.mxu0
    %v3200 = vadd.f32 %v3187, %v3199
    %v3201 = vpop.f32.mrf.mxu0
    %3202 = vdwg.mxu0
    %3203 = vmatpush.bf16.msra.mxu0 %v2690
    %3204 = vmatpush.bf16.msra.mxu0 %v2684
    %3205 = vmatpush.bf16.msra.mxu0 %v2678
    %3206 = vmatpush.bf16.msra.mxu0 %v2672
    %3207 = vmatpush.bf16.msra.mxu0 %v2666
    %3208 = vmatpush.bf16.msra.mxu0 %v2660
    %3209 = vmatpush.bf16.msra.mxu0 %v2654
    %3210 = vmatpush.bf16.msra.mxu0 %v2648
    %3211 = vmatmul.bf16.gmra.mxu0 %v1527
    %v3212 = vpop.f32.mrf.mxu0
    %v3213 = vadd.f32 %v3200, %v3212
    %v3214 = vpop.f32.mrf.mxu0
    %3215 = vdwg.mxu0
    %3216 = vmatpush.bf16.msra.mxu0 %v2451
    %3217 = vmatpush.bf16.msra.mxu0 %v2445
    %3218 = vmatpush.bf16.msra.mxu0 %v2439
    %3219 = vmatpush.bf16.msra.mxu0 %v2433
    %3220 = vmatpush.bf16.msra.mxu0 %v2427
    %3221 = vmatpush.bf16.msra.mxu0 %v2421
    %3222 = vmatpush.bf16.msra.mxu0 %v2415
    %3223 = vmatpush.bf16.msra.mxu0 %v2409
    %3224 = vmatmul.bf16.gmra.mxu0 %v1522
    %v3225 = vpop.f32.mrf.mxu0
    %v3226 = vadd.f32 %v1533, %v3225
    %v3227 = vpop.f32.mrf.mxu0
    %3228 = vdwg.mxu0
    %3229 = vmatpush.bf16.msra.mxu0 %v2499
    %3230 = vmatpush.bf16.msra.mxu0 %v2493
    %3231 = vmatpush.bf16.msra.mxu0 %v2487
    %3232 = vmatpush.bf16.msra.mxu0 %v2481
    %3233 = vmatpush.bf16.msra.mxu0 %v2475
    %3234 = vmatpush.bf16.msra.mxu0 %v2469
    %3235 = vmatpush.bf16.msra.mxu0 %v2463
    %3236 = vmatpush.bf16.msra.mxu0 %v2457
    %3237 = vmatmul.bf16.gmra.mxu0 %v1523
    %v3238 = vpop.f32.mrf.mxu0
    %v3239 = vadd.f32 %v3226, %v3238
    %v3240 = vpop.f32.mrf.mxu0
    %3241 = vdwg.mxu0
    %3242 = vmatpush.bf16.msra.mxu0 %v2547
    %3243 = vmatpush.bf16.msra.mxu0 %v2541
    %3244 = vmatpush.bf16.msra.mxu0 %v2535
    %3245 = vmatpush.bf16.msra.mxu0 %v2529
    %3246 = vmatpush.bf16.msra.mxu0 %v2523
    %3247 = vmatpush.bf16.msra.mxu0 %v2517
    %3248 = vmatpush.bf16.msra.mxu0 %v2511
    %3249 = vmatpush.bf16.msra.mxu0 %v2505
    %3250 = vmatmul.bf16.gmra.mxu0 %v1524
    %v3251 = vpop.f32.mrf.mxu0
    %v3252 = vadd.f32 %v3239, %v3251
    %v3253 = vpop.f32.mrf.mxu0
    %3254 = vdwg.mxu0
    %3255 = vmatpush.bf16.msra.mxu0 %v2595
    %3256 = vmatpush.bf16.msra.mxu0 %v2589
    %3257 = vmatpush.bf16.msra.mxu0 %v2583
    %3258 = vmatpush.bf16.msra.mxu0 %v2577
    %3259 = vmatpush.bf16.msra.mxu0 %v2571
    %3260 = vmatpush.bf16.msra.mxu0 %v2565
    %3261 = vmatpush.bf16.msra.mxu0 %v2559
    %3262 = vmatpush.bf16.msra.mxu0 %v2553
    %3263 = vmatmul.bf16.gmra.mxu0 %v1525
    %v3264 = vpop.f32.mrf.mxu0
    %v3265 = vadd.f32 %v3252, %v3264
    %v3266 = vpop.f32.mrf.mxu0
    %3267 = vdwg.mxu0
    %3268 = vmatpush.bf16.msra.mxu0 %v2643
    %3269 = vmatpush.bf16.msra.mxu0 %v2637
    %3270 = vmatpush.bf16.msra.mxu0 %v2631
    %3271 = vmatpush.bf16.msra.mxu0 %v2625
    %3272 = vmatpush.bf16.msra.mxu0 %v2619
    %3273 = vmatpush.bf16.msra.mxu0 %v2613
    %3274 = vmatpush.bf16.msra.mxu0 %v2607
    %3275 = vmatpush.bf16.msra.mxu0 %v2601
    %3276 = vmatmul.bf16.gmra.mxu0 %v1526
    %v3277 = vpop.f32.mrf.mxu0
    %v3278 = vadd.f32 %v3265, %v3277
    %v3279 = vpop.f32.mrf.mxu0
    %3280 = vdwg.mxu0
    %3281 = vmatpush.bf16.msra.mxu0 %v2691
    %3282 = vmatpush.bf16.msra.mxu0 %v2685
    %3283 = vmatpush.bf16.msra.mxu0 %v2679
    %3284 = vmatpush.bf16.msra.mxu0 %v2673
    %3285 = vmatpush.bf16.msra.mxu0 %v2667
    %3286 = vmatpush.bf16.msra.mxu0 %v2661
    %3287 = vmatpush.bf16.msra.mxu0 %v2655
    %3288 = vmatpush.bf16.msra.mxu0 %v2649
    %3289 = vmatmul.bf16.gmra.mxu0 %v1527
    %v3290 = vpop.f32.mrf.mxu0
    %v3291 = vadd.f32 %v3278, %v3290
    %v3292 = vpop.f32.mrf.mxu0
    %3293 = vdwg.mxu0
    %3294 = vmatpush.bf16.msra.mxu0 %v2452
    %3295 = vmatpush.bf16.msra.mxu0 %v2446
    %3296 = vmatpush.bf16.msra.mxu0 %v2440
    %3297 = vmatpush.bf16.msra.mxu0 %v2434
    %3298 = vmatpush.bf16.msra.mxu0 %v2428
    %3299 = vmatpush.bf16.msra.mxu0 %v2422
    %3300 = vmatpush.bf16.msra.mxu0 %v2416
    %3301 = vmatpush.bf16.msra.mxu0 %v2410
    %3302 = vmatmul.bf16.gmra.mxu0 %v1522
    %v3303 = vpop.f32.mrf.mxu0
    %v3304 = vadd.f32 %v1534, %v3303
    %v3305 = vpop.f32.mrf.mxu0
    %3306 = vdwg.mxu0
    %3307 = vmatpush.bf16.msra.mxu0 %v2500
    %3308 = vmatpush.bf16.msra.mxu0 %v2494
    %3309 = vmatpush.bf16.msra.mxu0 %v2488
    %3310 = vmatpush.bf16.msra.mxu0 %v2482
    %3311 = vmatpush.bf16.msra.mxu0 %v2476
    %3312 = vmatpush.bf16.msra.mxu0 %v2470
    %3313 = vmatpush.bf16.msra.mxu0 %v2464
    %3314 = vmatpush.bf16.msra.mxu0 %v2458
    %3315 = vmatmul.bf16.gmra.mxu0 %v1523
    %v3316 = vpop.f32.mrf.mxu0
    %v3317 = vadd.f32 %v3304, %v3316
    %v3318 = vpop.f32.mrf.mxu0
    %3319 = vdwg.mxu0
    %3320 = vmatpush.bf16.msra.mxu0 %v2548
    %3321 = vmatpush.bf16.msra.mxu0 %v2542
    %3322 = vmatpush.bf16.msra.mxu0 %v2536
    %3323 = vmatpush.bf16.msra.mxu0 %v2530
    %3324 = vmatpush.bf16.msra.mxu0 %v2524
    %3325 = vmatpush.bf16.msra.mxu0 %v2518
    %3326 = vmatpush.bf16.msra.mxu0 %v2512
    %3327 = vmatpush.bf16.msra.mxu0 %v2506
    %3328 = vmatmul.bf16.gmra.mxu0 %v1524
    %v3329 = vpop.f32.mrf.mxu0
    %v3330 = vadd.f32 %v3317, %v3329
    %v3331 = vpop.f32.mrf.mxu0
    %3332 = vdwg.mxu0
    %3333 = vmatpush.bf16.msra.mxu0 %v2596
    %3334 = vmatpush.bf16.msra.mxu0 %v2590
    %3335 = vmatpush.bf16.msra.mxu0 %v2584
    %3336 = vmatpush.bf16.msra.mxu0 %v2578
    %3337 = vmatpush.bf16.msra.mxu0 %v2572
    %3338 = vmatpush.bf16.msra.mxu0 %v2566
    %3339 = vmatpush.bf16.msra.mxu0 %v2560
    %3340 = vmatpush.bf16.msra.mxu0 %v2554
    %3341 = vmatmul.bf16.gmra.mxu0 %v1525
    %v3342 = vpop.f32.mrf.mxu0
    %v3343 = vadd.f32 %v3330, %v3342
    %v3344 = vpop.f32.mrf.mxu0
    %3345 = vdwg.mxu0
    %3346 = vmatpush.bf16.msra.mxu0 %v2644
    %3347 = vmatpush.bf16.msra.mxu0 %v2638
    %3348 = vmatpush.bf16.msra.mxu0 %v2632
    %3349 = vmatpush.bf16.msra.mxu0 %v2626
    %3350 = vmatpush.bf16.msra.mxu0 %v2620
    %3351 = vmatpush.bf16.msra.mxu0 %v2614
    %3352 = vmatpush.bf16.msra.mxu0 %v2608
    %3353 = vmatpush.bf16.msra.mxu0 %v2602
    %3354 = vmatmul.bf16.gmra.mxu0 %v1526
    %v3355 = vpop.f32.mrf.mxu0
    %v3356 = vadd.f32 %v3343, %v3355
    %v3357 = vpop.f32.mrf.mxu0
    %3358 = vdwg.mxu0
    %3359 = vmatpush.bf16.msra.mxu0 %v2692
    %3360 = vmatpush.bf16.msra.mxu0 %v2686
    %3361 = vmatpush.bf16.msra.mxu0 %v2680
    %3362 = vmatpush.bf16.msra.mxu0 %v2674
    %3363 = vmatpush.bf16.msra.mxu0 %v2668
    %3364 = vmatpush.bf16.msra.mxu0 %v2662
    %3365 = vmatpush.bf16.msra.mxu0 %v2656
    %3366 = vmatpush.bf16.msra.mxu0 %v2650
    %3367 = vmatmul.bf16.gmra.mxu0 %v1527
    %v3368 = vpop.f32.mrf.mxu0
    %v3369 = vadd.f32 %v3356, %v3368
    %v3370 = vpop.f32.mrf.mxu0
    %3371 = vdwg.mxu0
    %3372 = vmatpush.bf16.msra.mxu0 %v2453
    %3373 = vmatpush.bf16.msra.mxu0 %v2447
    %3374 = vmatpush.bf16.msra.mxu0 %v2441
    %3375 = vmatpush.bf16.msra.mxu0 %v2435
    %3376 = vmatpush.bf16.msra.mxu0 %v2429
    %3377 = vmatpush.bf16.msra.mxu0 %v2423
    %3378 = vmatpush.bf16.msra.mxu0 %v2417
    %3379 = vmatpush.bf16.msra.mxu0 %v2411
    %3380 = vmatmul.bf16.gmra.mxu0 %v1522
    %v3381 = vpop.f32.mrf.mxu0
    %v3382 = vadd.f32 %v1535, %v3381
    %v3383 = vpop.f32.mrf.mxu0
    %3384 = vdwg.mxu0
    %3385 = vmatpush.bf16.msra.mxu0 %v2501
    %3386 = vmatpush.bf16.msra.mxu0 %v2495
    %3387 = vmatpush.bf16.msra.mxu0 %v2489
    %3388 = vmatpush.bf16.msra.mxu0 %v2483
    %3389 = vmatpush.bf16.msra.mxu0 %v2477
    %3390 = vmatpush.bf16.msra.mxu0 %v2471
    %3391 = vmatpush.bf16.msra.mxu0 %v2465
    %3392 = vmatpush.bf16.msra.mxu0 %v2459
    %3393 = vmatmul.bf16.gmra.mxu0 %v1523
    %v3394 = vpop.f32.mrf.mxu0
    %v3395 = vadd.f32 %v3382, %v3394
    %v3396 = vpop.f32.mrf.mxu0
    %3397 = vdwg.mxu0
    %3398 = vmatpush.bf16.msra.mxu0 %v2549
    %3399 = vmatpush.bf16.msra.mxu0 %v2543
    %3400 = vmatpush.bf16.msra.mxu0 %v2537
    %3401 = vmatpush.bf16.msra.mxu0 %v2531
    %3402 = vmatpush.bf16.msra.mxu0 %v2525
    %3403 = vmatpush.bf16.msra.mxu0 %v2519
    %3404 = vmatpush.bf16.msra.mxu0 %v2513
    %3405 = vmatpush.bf16.msra.mxu0 %v2507
    %3406 = vmatmul.bf16.gmra.mxu0 %v1524
    %v3407 = vpop.f32.mrf.mxu0
    %v3408 = vadd.f32 %v3395, %v3407
    %v3409 = vpop.f32.mrf.mxu0
    %3410 = vdwg.mxu0
    %3411 = vmatpush.bf16.msra.mxu0 %v2597
    %3412 = vmatpush.bf16.msra.mxu0 %v2591
    %3413 = vmatpush.bf16.msra.mxu0 %v2585
    %3414 = vmatpush.bf16.msra.mxu0 %v2579
    %3415 = vmatpush.bf16.msra.mxu0 %v2573
    %3416 = vmatpush.bf16.msra.mxu0 %v2567
    %3417 = vmatpush.bf16.msra.mxu0 %v2561
    %3418 = vmatpush.bf16.msra.mxu0 %v2555
    %3419 = vmatmul.bf16.gmra.mxu0 %v1525
    %v3420 = vpop.f32.mrf.mxu0
    %v3421 = vadd.f32 %v3408, %v3420
    %v3422 = vpop.f32.mrf.mxu0
    %3423 = vdwg.mxu0
    %3424 = vmatpush.bf16.msra.mxu0 %v2645
    %3425 = vmatpush.bf16.msra.mxu0 %v2639
    %3426 = vmatpush.bf16.msra.mxu0 %v2633
    %3427 = vmatpush.bf16.msra.mxu0 %v2627
    %3428 = vmatpush.bf16.msra.mxu0 %v2621
    %3429 = vmatpush.bf16.msra.mxu0 %v2615
    %3430 = vmatpush.bf16.msra.mxu0 %v2609
    %3431 = vmatpush.bf16.msra.mxu0 %v2603
    %3432 = vmatmul.bf16.gmra.mxu0 %v1526
    %v3433 = vpop.f32.mrf.mxu0
    %v3434 = vadd.f32 %v3421, %v3433
    %v3435 = vpop.f32.mrf.mxu0
    %3436 = vdwg.mxu0
    %3437 = vmatpush.bf16.msra.mxu0 %v2693
    %3438 = vmatpush.bf16.msra.mxu0 %v2687
    %3439 = vmatpush.bf16.msra.mxu0 %v2681
    %3440 = vmatpush.bf16.msra.mxu0 %v2675
    %3441 = vmatpush.bf16.msra.mxu0 %v2669
    %3442 = vmatpush.bf16.msra.mxu0 %v2663
    %3443 = vmatpush.bf16.msra.mxu0 %v2657
    %3444 = vmatpush.bf16.msra.mxu0 %v2651
    %3445 = vmatmul.bf16.gmra.mxu0 %v1527
    %v3446 = vpop.f32.mrf.mxu0
    %v3447 = vadd.f32 %v3434, %v3446
    %v3448 = vpop.f32.mrf.mxu0
    %3449 = vdwg.mxu0
    %v3450 = vmax.f32 %v3057, 0.0
    %v3451 = vmax.f32 %v3135, 0.0
    %v3452 = vmax.f32 %v3213, 0.0
    %v3453 = vmax.f32 %v3291, 0.0
    %v3454 = vmax.f32 %v3369, 0.0
    %v3455 = vmax.f32 %v3447, 0.0
    %v3456 = vld [vmem:[%s5] sm:$0xf]
    %v3457 = vld [vmem:[%s5 + $0x4] sm:$0xf]
    %v3458 = vld [vmem:[%s5 + $0x8] sm:$0xf]
    %v3459 = vld [vmem:[%s5 + $0xc] sm:$0xf]
    %v3460 = vld [vmem:[%s5 + $0x10] sm:$0xf]
    %v3461 = vld [vmem:[%s5 + $0x14] sm:$0xf]
    %v3462 = vld [vmem:[%s5 + $0x18] sm:$0xf]
    %v3463 = vld [vmem:[%s5 + $0x1c] sm:$0xf]
    %v3464 = vld [vmem:[%s5 + $0x20] sm:$0xf]
    %v3465 = vld [vmem:[%s5 + $0x24] sm:$0xf]
    %v3466 = vld [vmem:[%s5 + $0x28] sm:$0xf]
    %v3467 = vld [vmem:[%s5 + $0x2c] sm:$0xf]
    %v3468 = vld [vmem:[%s5 + $0x30] sm:$0xf]
    %v3469 = vld [vmem:[%s5 + $0x34] sm:$0xf]
    %v3470 = vld [vmem:[%s5 + $0x38] sm:$0xf]
    %v3471 = vld [vmem:[%s5 + $0x3c] sm:$0xf]
    %v3472 = vld [vmem:[%s5 + $0x40] sm:$0xf]
    %v3473 = vld [vmem:[%s5 + $0x44] sm:$0xf]
    %v3474 = vld [vmem:[%s5 + $0x48] sm:$0xf]
    %v3475 = vld [vmem:[%s5 + $0x4c] sm:$0xf]
    %v3476 = vld [vmem:[%s5 + $0x50] sm:$0xf]
    %v3477 = vld [vmem:[%s5 + $0x54] sm:$0xf]
    %v3478 = vld [vmem:[%s5 + $0x58] sm:$0xf]
    %v3479 = vld [vmem:[%s5 + $0x5c] sm:$0xf]
    %v3480 = vld [vmem:[%s5 + $0x60] sm:$0xf]
    %v3481 = vld [vmem:[%s5 + $0x64] sm:$0xf]
    %v3482 = vld [vmem:[%s5 + $0x68] sm:$0xf]
    %v3483 = vld [vmem:[%s5 + $0x6c] sm:$0xf]
    %v3484 = vld [vmem:[%s5 + $0x70] sm:$0xf]
    %v3485 = vld [vmem:[%s5 + $0x74] sm:$0xf]
    %v3486 = vld [vmem:[%s5 + $0x78] sm:$0xf]
    %v3487 = vld [vmem:[%s5 + $0x7c] sm:$0xf]
    %v3488 = vld [vmem:[%s5 + $0x80] sm:$0xf]
    %v3489 = vld [vmem:[%s5 + $0x84] sm:$0xf]
    %v3490 = vld [vmem:[%s5 + $0x88] sm:$0xf]
    %v3491 = vld [vmem:[%s5 + $0x8c] sm:$0xf]
    %v3492 = vld [vmem:[%s5 + $0x90] sm:$0xf]
    %v3493 = vld [vmem:[%s5 + $0x94] sm:$0xf]
    %v3494 = vld [vmem:[%s5 + $0x98] sm:$0xf]
    %v3495 = vld [vmem:[%s5 + $0x9c] sm:$0xf]
    %v3496 = vld [vmem:[%s5 + $0xa0] sm:$0xf]
    %v3497 = vld [vmem:[%s5 + $0xa4] sm:$0xf]
    %v3498 = vld [vmem:[%s5 + $0xa8] sm:$0xf]
    %v3499 = vld [vmem:[%s5 + $0xac] sm:$0xf]
    %v3500 = vld [vmem:[%s5 + $0xb0] sm:$0xf]
    %v3501 = vld [vmem:[%s5 + $0xb4] sm:$0xf]
    %v3502 = vld [vmem:[%s5 + $0xb8] sm:$0xf]
    %v3503 = vld [vmem:[%s5 + $0xbc] sm:$0xf]
    %v3504 = vld [vmem:[%s5 + $0xc0] sm:$0xf]
    %v3505 = vld [vmem:[%s5 + $0xc4] sm:$0xf]
    %v3506 = vld [vmem:[%s5 + $0xc8] sm:$0xf]
    %v3507 = vld [vmem:[%s5 + $0xcc] sm:$0xf]
    %v3508 = vld [vmem:[%s5 + $0xd0] sm:$0xf]
    %v3509 = vld [vmem:[%s5 + $0xd4] sm:$0xf]
    %v3510 = vld [vmem:[%s5 + $0xd8] sm:$0xf]
    %v3511 = vld [vmem:[%s5 + $0xdc] sm:$0xf]
    %v3512 = vld [vmem:[%s5 + $0xe0] sm:$0xf]
    %v3513 = vld [vmem:[%s5 + $0xe4] sm:$0xf]
    %v3514 = vld [vmem:[%s5 + $0xe8] sm:$0xf]
    %v3515 = vld [vmem:[%s5 + $0xec] sm:$0xf]
    %v3516 = vld [vmem:[%s5 + $0xf0] sm:$0xf]
    %v3517 = vld [vmem:[%s5 + $0xf4] sm:$0xf]
    %v3518 = vld [vmem:[%s5 + $0xf8] sm:$0xf]
    %v3519 = vld [vmem:[%s5 + $0xfc] sm:$0xf]
    %v3520 = vld [vmem:[%s5 + $0x100] sm:$0xf]
    %v3521 = vld [vmem:[%s5 + $0x104] sm:$0xf]
    %v3522 = vld [vmem:[%s5 + $0x108] sm:$0xf]
    %v3523 = vld [vmem:[%s5 + $0x10c] sm:$0xf]
    %v3524 = vld [vmem:[%s5 + $0x110] sm:$0xf]
    %v3525 = vld [vmem:[%s5 + $0x114] sm:$0xf]
    %v3526 = vld [vmem:[%s5 + $0x118] sm:$0xf]
    %v3527 = vld [vmem:[%s5 + $0x11c] sm:$0xf]
    %v3528 = vld [vmem:[%s5 + $0x120] sm:$0xf]
    %v3529 = vld [vmem:[%s5 + $0x124] sm:$0xf]
    %v3530 = vld [vmem:[%s5 + $0x128] sm:$0xf]
    %v3531 = vld [vmem:[%s5 + $0x12c] sm:$0xf]
    %v3532 = vld [vmem:[%s5 + $0x130] sm:$0xf]
    %v3533 = vld [vmem:[%s5 + $0x134] sm:$0xf]
    %v3534 = vld [vmem:[%s5 + $0x138] sm:$0xf]
    %v3535 = vld [vmem:[%s5 + $0x13c] sm:$0xf]
    %v3536 = vld [vmem:[%s5 + $0x140] sm:$0xf]
    %v3537 = vld [vmem:[%s5 + $0x144] sm:$0xf]
    %v3538 = vld [vmem:[%s5 + $0x148] sm:$0xf]
    %v3539 = vld [vmem:[%s5 + $0x14c] sm:$0xf]
    %v3540 = vld [vmem:[%s5 + $0x150] sm:$0xf]
    %v3541 = vld [vmem:[%s5 + $0x154] sm:$0xf]
    %v3542 = vld [vmem:[%s5 + $0x158] sm:$0xf]
    %v3543 = vld [vmem:[%s5 + $0x15c] sm:$0xf]
    %v3544 = vld [vmem:[%s5 + $0x160] sm:$0xf]
    %v3545 = vld [vmem:[%s5 + $0x164] sm:$0xf]
    %v3546 = vld [vmem:[%s5 + $0x168] sm:$0xf]
    %v3547 = vld [vmem:[%s5 + $0x16c] sm:$0xf]
    %v3548 = vld [vmem:[%s5 + $0x170] sm:$0xf]
    %v3549 = vld [vmem:[%s5 + $0x174] sm:$0xf]
    %v3550 = vld [vmem:[%s5 + $0x178] sm:$0xf]
    %v3551 = vld [vmem:[%s5 + $0x17c] sm:$0xf]
    %v3552 = vpack.c.bf16 %v3450, %v3450
    %v3553 = vpack.c.bf16 %v3451, %v3451
    %v3554 = vpack.c.bf16 %v3452, %v3452
    %v3555 = vpack.c.bf16 %v3453, %v3453
    %v3556 = vpack.c.bf16 %v3454, %v3454
    %v3557 = vpack.c.bf16 %v3455, %v3455
    %v3558 = vld [vmem:[#allocation10] sm:$0x1]
    %v3560 = vperm.slane %v3558, 0
    %v3658 = vunpack.c.l.b16 %v3456
    %v3659 = vunpack.c.l.b16 %v3457
    %v3660 = vunpack.c.l.b16 %v3458
    %v3661 = vunpack.c.l.b16 %v3459
    %v3662 = vunpack.c.l.b16 %v3460
    %v3663 = vunpack.c.l.b16 %v3461
    %v3664 = vunpack.c.l.b16 %v3462
    %v3665 = vunpack.c.l.b16 %v3463
    %v3666 = vunpack.c.l.b16 %v3464
    %v3667 = vunpack.c.l.b16 %v3465
    %v3668 = vunpack.c.l.b16 %v3466
    %v3669 = vunpack.c.l.b16 %v3467
    %v3670 = vunpack.c.l.b16 %v3468
    %v3671 = vunpack.c.l.b16 %v3469
    %v3672 = vunpack.c.l.b16 %v3470
    %v3673 = vunpack.c.l.b16 %v3471
    %v3674 = vunpack.c.l.b16 %v3472
    %v3675 = vunpack.c.l.b16 %v3473
    %v3676 = vunpack.c.l.b16 %v3474
    %v3677 = vunpack.c.l.b16 %v3475
    %v3678 = vunpack.c.l.b16 %v3476
    %v3679 = vunpack.c.l.b16 %v3477
    %v3680 = vunpack.c.l.b16 %v3478
    %v3681 = vunpack.c.l.b16 %v3479
    %v3682 = vunpack.c.l.b16 %v3480
    %v3683 = vunpack.c.l.b16 %v3481
    %v3684 = vunpack.c.l.b16 %v3482
    %v3685 = vunpack.c.l.b16 %v3483
    %v3686 = vunpack.c.l.b16 %v3484
    %v3687 = vunpack.c.l.b16 %v3485
    %v3688 = vunpack.c.l.b16 %v3486
    %v3689 = vunpack.c.l.b16 %v3487
    %v3690 = vunpack.c.l.b16 %v3488
    %v3691 = vunpack.c.l.b16 %v3489
    %v3692 = vunpack.c.l.b16 %v3490
    %v3693 = vunpack.c.l.b16 %v3491
    %v3694 = vunpack.c.l.b16 %v3492
    %v3695 = vunpack.c.l.b16 %v3493
    %v3696 = vunpack.c.l.b16 %v3494
    %v3697 = vunpack.c.l.b16 %v3495
    %v3698 = vunpack.c.l.b16 %v3496
    %v3699 = vunpack.c.l.b16 %v3497
    %v3700 = vunpack.c.l.b16 %v3498
    %v3701 = vunpack.c.l.b16 %v3499
    %v3702 = vunpack.c.l.b16 %v3500
    %v3703 = vunpack.c.l.b16 %v3501
    %v3704 = vunpack.c.l.b16 %v3502
    %v3705 = vunpack.c.l.b16 %v3503
    %v3706 = vunpack.c.l.b16 %v3504
    %v3707 = vunpack.c.l.b16 %v3505
    %v3708 = vunpack.c.l.b16 %v3506
    %v3709 = vunpack.c.l.b16 %v3507
    %v3710 = vunpack.c.l.b16 %v3508
    %v3711 = vunpack.c.l.b16 %v3509
    %v3712 = vunpack.c.l.b16 %v3510
    %v3713 = vunpack.c.l.b16 %v3511
    %v3714 = vunpack.c.l.b16 %v3512
    %v3715 = vunpack.c.l.b16 %v3513
    %v3716 = vunpack.c.l.b16 %v3514
    %v3717 = vunpack.c.l.b16 %v3515
    %v3718 = vunpack.c.l.b16 %v3516
    %v3719 = vunpack.c.l.b16 %v3517
    %v3720 = vunpack.c.l.b16 %v3518
    %v3721 = vunpack.c.l.b16 %v3519
    %v3722 = vunpack.c.l.b16 %v3520
    %v3723 = vunpack.c.l.b16 %v3521
    %v3724 = vunpack.c.l.b16 %v3522
    %v3725 = vunpack.c.l.b16 %v3523
    %v3726 = vunpack.c.l.b16 %v3524
    %v3727 = vunpack.c.l.b16 %v3525
    %v3728 = vunpack.c.l.b16 %v3526
    %v3729 = vunpack.c.l.b16 %v3527
    %v3730 = vunpack.c.l.b16 %v3528
    %v3731 = vunpack.c.l.b16 %v3529
    %v3732 = vunpack.c.l.b16 %v3530
    %v3733 = vunpack.c.l.b16 %v3531
    %v3734 = vunpack.c.l.b16 %v3532
    %v3735 = vunpack.c.l.b16 %v3533
    %v3736 = vunpack.c.l.b16 %v3534
    %v3737 = vunpack.c.l.b16 %v3535
    %v3738 = vunpack.c.l.b16 %v3536
    %v3739 = vunpack.c.l.b16 %v3537
    %v3740 = vunpack.c.l.b16 %v3538
    %v3741 = vunpack.c.l.b16 %v3539
    %v3742 = vunpack.c.l.b16 %v3540
    %v3743 = vunpack.c.l.b16 %v3541
    %v3744 = vunpack.c.l.b16 %v3542
    %v3745 = vunpack.c.l.b16 %v3543
    %v3746 = vunpack.c.l.b16 %v3544
    %v3747 = vunpack.c.l.b16 %v3545
    %v3748 = vunpack.c.l.b16 %v3546
    %v3749 = vunpack.c.l.b16 %v3547
    %v3750 = vunpack.c.l.b16 %v3548
    %v3751 = vunpack.c.l.b16 %v3549
    %v3752 = vunpack.c.l.b16 %v3550
    %v3753 = vunpack.c.l.b16 %v3551
    %v3754 = vpack.c.b16 %v3659, %v3658
    %v3755 = vpack.c.b16 %v3661, %v3660
    %v3756 = vpack.c.b16 %v3663, %v3662
    %v3757 = vpack.c.b16 %v3665, %v3664
    %v3758 = vpack.c.b16 %v3667, %v3666
    %v3759 = vpack.c.b16 %v3669, %v3668
    %v3760 = vpack.c.b16 %v3671, %v3670
    %v3761 = vpack.c.b16 %v3673, %v3672
    %v3762 = vpack.c.b16 %v3675, %v3674
    %v3763 = vpack.c.b16 %v3677, %v3676
    %v3764 = vpack.c.b16 %v3679, %v3678
    %v3765 = vpack.c.b16 %v3681, %v3680
    %v3766 = vpack.c.b16 %v3683, %v3682
    %v3767 = vpack.c.b16 %v3685, %v3684
    %v3768 = vpack.c.b16 %v3687, %v3686
    %v3769 = vpack.c.b16 %v3689, %v3688
    %v3770 = vpack.c.b16 %v3691, %v3690
    %v3771 = vpack.c.b16 %v3693, %v3692
    %v3772 = vpack.c.b16 %v3695, %v3694
    %v3773 = vpack.c.b16 %v3697, %v3696
    %v3774 = vpack.c.b16 %v3699, %v3698
    %v3775 = vpack.c.b16 %v3701, %v3700
    %v3776 = vpack.c.b16 %v3703, %v3702
    %v3777 = vpack.c.b16 %v3705, %v3704
    %v3778 = vpack.c.b16 %v3707, %v3706
    %v3779 = vpack.c.b16 %v3709, %v3708
    %v3780 = vpack.c.b16 %v3711, %v3710
    %v3781 = vpack.c.b16 %v3713, %v3712
    %v3782 = vpack.c.b16 %v3715, %v3714
    %v3783 = vpack.c.b16 %v3717, %v3716
    %v3784 = vpack.c.b16 %v3719, %v3718
    %v3785 = vpack.c.b16 %v3721, %v3720
    %v3786 = vpack.c.b16 %v3723, %v3722
    %v3787 = vpack.c.b16 %v3725, %v3724
    %v3788 = vpack.c.b16 %v3727, %v3726
    %v3789 = vpack.c.b16 %v3729, %v3728
    %v3790 = vpack.c.b16 %v3731, %v3730
    %v3791 = vpack.c.b16 %v3733, %v3732
    %v3792 = vpack.c.b16 %v3735, %v3734
    %v3793 = vpack.c.b16 %v3737, %v3736
    %v3794 = vpack.c.b16 %v3739, %v3738
    %v3795 = vpack.c.b16 %v3741, %v3740
    %v3796 = vpack.c.b16 %v3743, %v3742
    %v3797 = vpack.c.b16 %v3745, %v3744
    %v3798 = vpack.c.b16 %v3747, %v3746
    %v3799 = vpack.c.b16 %v3749, %v3748
    %v3800 = vpack.c.b16 %v3751, %v3750
    %v3801 = vpack.c.b16 %v3753, %v3752
    %3850 = vmatpush.bf16.msra.mxu0 %v3761
    %3851 = vmatpush.bf16.msra.mxu0 %v3760
    %3852 = vmatpush.bf16.msra.mxu0 %v3759
    %3853 = vmatpush.bf16.msra.mxu0 %v3758
    %3854 = vmatpush.bf16.msra.mxu0 %v3757
    %3855 = vmatpush.bf16.msra.mxu0 %v3756
    %3856 = vmatpush.bf16.msra.mxu0 %v3755
    %3857 = vmatpush.bf16.msra.mxu0 %v3754
    %3858 = vmatmul.bf16.gmra.mxu0 %v3552
    %v3859 = vpop.f32.mrf.mxu0
    %v3860 = vadd.f32 %v3560, %v3859
    %v3861 = vpop.f32.mrf.mxu0
    %3862 = vdwg.mxu0
    %3863 = vmatpush.bf16.msra.mxu0 %v3769
    %3864 = vmatpush.bf16.msra.mxu0 %v3768
    %3865 = vmatpush.bf16.msra.mxu0 %v3767
    %3866 = vmatpush.bf16.msra.mxu0 %v3766
    %3867 = vmatpush.bf16.msra.mxu0 %v3765
    %3868 = vmatpush.bf16.msra.mxu0 %v3764
    %3869 = vmatpush.bf16.msra.mxu0 %v3763
    %3870 = vmatpush.bf16.msra.mxu0 %v3762
    %3871 = vmatmul.bf16.gmra.mxu0 %v3553
    %v3872 = vpop.f32.mrf.mxu0
    %v3873 = vadd.f32 %v3860, %v3872
    %v3874 = vpop.f32.mrf.mxu0
    %3875 = vdwg.mxu0
    %3876 = vmatpush.bf16.msra.mxu0 %v3777
    %3877 = vmatpush.bf16.msra.mxu0 %v3776
    %3878 = vmatpush.bf16.msra.mxu0 %v3775
    %3879 = vmatpush.bf16.msra.mxu0 %v3774
    %3880 = vmatpush.bf16.msra.mxu0 %v3773
    %3881 = vmatpush.bf16.msra.mxu0 %v3772
    %3882 = vmatpush.bf16.msra.mxu0 %v3771
    %3883 = vmatpush.bf16.msra.mxu0 %v3770
    %3884 = vmatmul.bf16.gmra.mxu0 %v3554
    %v3885 = vpop.f32.mrf.mxu0
    %v3886 = vadd.f32 %v3873, %v3885
    %v3887 = vpop.f32.mrf.mxu0
    %3888 = vdwg.mxu0
    %3889 = vmatpush.bf16.msra.mxu0 %v3785
    %3890 = vmatpush.bf16.msra.mxu0 %v3784
    %3891 = vmatpush.bf16.msra.mxu0 %v3783
    %3892 = vmatpush.bf16.msra.mxu0 %v3782
    %3893 = vmatpush.bf16.msra.mxu0 %v3781
    %3894 = vmatpush.bf16.msra.mxu0 %v3780
    %3895 = vmatpush.bf16.msra.mxu0 %v3779
    %3896 = vmatpush.bf16.msra.mxu0 %v3778
    %3897 = vmatmul.bf16.gmra.mxu0 %v3555
    %v3898 = vpop.f32.mrf.mxu0
    %v3899 = vadd.f32 %v3886, %v3898
    %v3900 = vpop.f32.mrf.mxu0
    %3901 = vdwg.mxu0
    %3902 = vmatpush.bf16.msra.mxu0 %v3793
    %3903 = vmatpush.bf16.msra.mxu0 %v3792
    %3904 = vmatpush.bf16.msra.mxu0 %v3791
    %3905 = vmatpush.bf16.msra.mxu0 %v3790
    %3906 = vmatpush.bf16.msra.mxu0 %v3789
    %3907 = vmatpush.bf16.msra.mxu0 %v3788
    %3908 = vmatpush.bf16.msra.mxu0 %v3787
    %3909 = vmatpush.bf16.msra.mxu0 %v3786
    %3910 = vmatmul.bf16.gmra.mxu0 %v3556
    %v3911 = vpop.f32.mrf.mxu0
    %v3912 = vadd.f32 %v3899, %v3911
    %v3913 = vpop.f32.mrf.mxu0
    %3914 = vdwg.mxu0
    %3915 = vmatpush.bf16.msra.mxu0 %v3801
    %3916 = vmatpush.bf16.msra.mxu0 %v3800
    %3917 = vmatpush.bf16.msra.mxu0 %v3799
    %3918 = vmatpush.bf16.msra.mxu0 %v3798
    %3919 = vmatpush.bf16.msra.mxu0 %v3797
    %3920 = vmatpush.bf16.msra.mxu0 %v3796
    %3921 = vmatpush.bf16.msra.mxu0 %v3795
    %3922 = vmatpush.bf16.msra.mxu0 %v3794
    %3923 = vmatmul.bf16.gmra.mxu0 %v3557
    %v3924 = vpop.f32.mrf.mxu0
    %v3925 = vadd.f32 %v3912, %v3924
    %v3926 = vpop.f32.mrf.mxu0
    %3927 = vdwg.mxu0
    %v3928 = vmax.f32 %v3925, 0.0
    %v3929 = vld [vmem:[#allocation11] sm:$0xf]
    %v3930 = vld [vmem:[#allocation11 + $0x4] sm:$0xf]
    %v3931 = vld [vmem:[#allocation11 + $0x8] sm:$0xf]
    %v3932 = vld [vmem:[#allocation11 + $0xc] sm:$0xf]
    %v3933 = vld [vmem:[#allocation11 + $0x10] sm:$0xf]
    %v3934 = vld [vmem:[#allocation11 + $0x14] sm:$0xf]
    %v3935 = vld [vmem:[#allocation11 + $0x18] sm:$0xf]
    %v3936 = vld [vmem:[#allocation11 + $0x1c] sm:$0xf]
    %v3937 = vpack.c.bf16 %v3928, %v3928
    %v3938 = vld [vmem:[#allocation13] sm:$0x1]
    %v3940 = vperm.slane %v3938, 0
    %v3950 = vunpack.c.l.b16 %v3929
    %v3951 = vunpack.c.l.b16 %v3930
    %v3952 = vunpack.c.l.b16 %v3931
    %v3953 = vunpack.c.l.b16 %v3932
    %v3954 = vunpack.c.l.b16 %v3933
    %v3955 = vunpack.c.l.b16 %v3934
    %v3956 = vunpack.c.l.b16 %v3935
    %v3957 = vunpack.c.l.b16 %v3936
    %v3958 = vpack.c.b16 %v3951, %v3950
    %v3959 = vpack.c.b16 %v3953, %v3952
    %v3960 = vpack.c.b16 %v3955, %v3954
    %v3961 = vpack.c.b16 %v3957, %v3956
    %vm3966 = vcmask 523264
    %v3968 = vsel %vm3966, %v3937, 0
    %3970 = vmatpush.bf16.msra.mxu0 0
    %3971 = vmatpush.bf16.msra.mxu0 0
    %3972 = vmatpush.bf16.msra.mxu0 0
    %3973 = vmatpush.bf16.msra.mxu0 0
    %3974 = vmatpush.bf16.msra.mxu0 %v3961
    %3975 = vmatpush.bf16.msra.mxu0 %v3960
    %3976 = vmatpush.bf16.msra.mxu0 %v3959
    %3977 = vmatpush.bf16.msra.mxu0 %v3958
    %3978 = vmatmul.bf16.gmra.mxu0 %v3968
    %v3979 = vpop.f32.mrf.mxu0
    %v3980 = vadd.f32 %v3940, %v3979
    %v3981 = vpop.f32.mrf.mxu0
    %3982 = vdwg.mxu0
    %3983 = vst [vmem:[#allocation14] sm:$0x3] %v3980
    // Predicated region
    $region66: #{qnetwork_forward.1} parent=1 // pred_check
      _
    $region67: #{qnetwork_forward.1} parent=1 // pred_check_branch
      %3985 = sbr.rel (0) target = $region69
    $region68: #{qnetwork_forward.1} parent=1 // pred_region
      %3987 = vsyncadd [#allocation4], 0
      %s3989 = sshll.u32 [#allocation14], 4
      %s3990 = int_to_ptr.vmem [resolvable:$true] %s3989
      %s3991 = sshll.u32 %s9, 4
      %s3992 = int_to_ptr.hbm [resolvable:$true] %s3991
      %3994 = dma.vmem_to_hbm [thread:$0]  %s3990, 32, %s3992, [#allocation4]
    $region69: #{qnetwork_forward.1} parent=1 // pred_fallthru
      _
    // Predicated region
    $region70: #{qnetwork_forward.1} parent=1 // pred_check
      _
    $region71: #{qnetwork_forward.1} parent=1 // pred_check_branch
      %3996 = sbr.rel (0) target = $region73
    $region72: #{qnetwork_forward.1} parent=1 // pred_region
      %3998 = dma.done [#allocation4], 32
    $region73: #{qnetwork_forward.1} parent=1 // pred_fallthru
      _
    %3999 = vsyncpa [#allocation3], 1
    %4000 = vsyncpa [#allocation6], 1
    %4001 = vsyncpa [#allocation9], 1
    %4002 = vsyncpa [#allocation12], 1
    %4003 = vsyncpa [#allocation4], 1

</llo_original>
